<compile_context>
chip_gen: v6e
topology: v6e:2x2x1
jax: 0.10.0
libtpu: 0.0.40
codegen_flags: <defaults>
</compile_context>

<pallas_src>
import functools

import jax
import jax.numpy as jnp
from jax.experimental import pallas as pl
from jax.experimental.pallas import tpu as pltpu


def _round_up(a, b):
    return (a + b - 1) // b * b


# ---------------------------------------------------------------------------
# Pass 1: recompute the per-phase conv tiles in-kernel and accumulate per-core
#         per-channel sum / sum-of-squares for BatchNorm (masked to valid pixels).
# ---------------------------------------------------------------------------
def _stats_kernel(xa_ref, xb_ref, mask_ref, w_ref, sum_ref, ssq_ref, win_ref,
                  *, offs, tt):
    m = pl.program_id(1)

    @pl.when(m == 0)
    def _init():
        sum_ref[...] = jnp.zeros_like(sum_ref)
        ssq_ref[...] = jnp.zeros_like(ssq_ref)

    cout = sum_ref.shape[0]
    tm = xa_ref.shape[1]
    halo = win_ref.shape[1] - tm

    # Assemble the (tm + halo)-wide window from tile m and the head of tile m+1
    # (all aligned stores), then take static tap slices of the loaded value.
    win_ref[:, :tm] = xa_ref[...]
    win_ref[:, tm:] = xb_ref[:, :halo]
    win = win_ref[...]                                   # [Cin, tm+halo] bf16
    wall = w_ref[...]                                    # [s2*TT, Cout, Cin] bf16
    maskf = mask_ref[...]                                # [1, tm] f32 (1 = valid)

    s_loc = jnp.zeros((cout, 1), jnp.float32)
    q_loc = jnp.zeros((cout, 1), jnp.float32)
    for ph in range(len(offs)):
        acc = jnp.zeros((cout, tm), jnp.float32)
        for t in range(tt):
            off = offs[ph][t]
            xt = win[:, off:off + tm]                    # static slice, bf16 [Cin, tm]
            acc = acc + jnp.dot(wall[ph * tt + t], xt,
                                preferred_element_type=jnp.float32)
        accm = acc * maskf                               # zero out halo/pad columns
        s_loc = s_loc + jnp.sum(accm, axis=1, keepdims=True)
        q_loc = q_loc + jnp.sum(accm * acc, axis=1, keepdims=True)
    sum_ref[...] += s_loc
    ssq_ref[...] += q_loc


# ---------------------------------------------------------------------------
# Pass 2: recompute the tiny-K conv, apply folded BatchNorm (one FMA) + LeakyReLU,
#         write lane-dense [s2, Cout, tm] output tiles.
# ---------------------------------------------------------------------------
def _apply_kernel(xa_ref, xb_ref, w_ref, scale_ref, shift_ref, o_ref, win_ref,
                  *, offs, tt, slope):
    cout = o_ref.shape[1]
    tm = xa_ref.shape[1]
    halo = win_ref.shape[1] - tm

    win_ref[:, :tm] = xa_ref[...]
    win_ref[:, tm:] = xb_ref[:, :halo]
    win = win_ref[...]
    wall = w_ref[...]
    scale = scale_ref[...]                               # [Cout, 1] f32
    shift = shift_ref[...]

    for ph in range(len(offs)):
        acc = jnp.zeros((cout, tm), jnp.float32)
        for t in range(tt):
            off = offs[ph][t]
            acc = acc + jnp.dot(wall[ph * tt + t], win[:, off:off + tm],
                                preferred_element_type=jnp.float32)
        z = acc * scale + shift
        o_ref[ph] = jnp.where(z >= 0.0, z, slope * z)


def trans_conv_block(x, weight, bias, gamma, beta, *, stride, padding,
                     slope=0.2, eps=1e-5, tile_m=4096):
    """Pallas implementation of TransConvBlock.forward.

    x:      [N, C_in, H, W]        (NCHW, float32)
    weight: [C_in, C_out, k, k]    (PyTorch ConvTranspose2d layout)
    bias, gamma, beta: [C_out]
    """
    del bias  # exactly cancelled by the BatchNorm mean subtraction (see header)
    N, Cin, H, W = x.shape
    Cin_w, Cout, k, k2 = weight.shape
    assert Cin == Cin_w and k == k2
    s, p = int(stride), int(padding)
    Ho = (H - 1) * s - 2 * p + k
    Wo = (W - 1) * s - 2 * p + k

    # Sub-pixel (phase) decomposition assumptions (hold for the standard
    # k=4, s=2, p=1 upsampling block and for s=1).
    assert k % s == 0 and (2 * p) % s == 0, (
        "sub-pixel decomposition assumes k % s == 0 and (2*p) % s == 0")
    T = k // s                    # taps per phase per spatial dim
    TT = T * T
    s2 = s * s
    Hph, Wph = Ho // s, Wo // s   # per-phase output extent

    # Padding of x so that every (phase, tap) shift is a non-negative in-range offset.
    pad_lo_h = pad_hi_h = pad_lo_w = pad_hi_w = 0
    for r in range(s):
        q = (r + p) // s
        pad_lo_h = max(pad_lo_h, (T - 1) - q)
        pad_hi_h = max(pad_hi_h, (Hph - 1) + q - (H - 1))
        pad_lo_w = max(pad_lo_w, (T - 1) - q)
        pad_hi_w = max(pad_hi_w, (Wph - 1) + q - (W - 1))
    Hp = H + pad_lo_h + pad_hi_h
    Wp = W + pad_lo_w + pad_hi_w
    Mgrid = N * Hp * Wp           # per-phase output over the *padded* grid

    # Static per-(phase, tap) flat offsets into the flattened padded x, plus the
    # matching [Cout, Cin] sub-kernels.  Offsets are Python constants, so every
    # tap is a static slice inside the kernel.
    offs, w_list = [], []
    for rh in range(s):
        kh0, qh = (rh + p) % s, (rh + p) // s
        for rw in range(s):
            kw0, qw = (rw + p) % s, (rw + p) // s
            po = []
            for th in range(T):
                for tw in range(T):
                    a = qh - th + pad_lo_h
                    b = qw - tw + pad_lo_w
                    po.append(a * Wp + b)
                    w_list.append(
                        jnp.transpose(weight[:, :, kh0 + th * s, kw0 + tw * s]))
            offs.append(tuple(po))
    offs = tuple(offs)
    off_max = max(max(po) for po in offs)
    w_taps = jnp.stack(w_list, axis=0).astype(jnp.bfloat16)   # [s2*TT, Cout, Cin]

    # Lane-dense m-tiling (validated multiple of 128).
    halo_pad = _round_up(max(off_max, 1), 128)
    tm = max(128, (int(tile_m) // 128) * 128)
    tm = min(tm, _round_up(Mgrid, 128))
    tm = max(tm, halo_pad)
    assert tm % 128 == 0 and tm >= halo_pad
    M_pad = _round_up(Mgrid, tm)
    n_m = M_pad // tm
    Mflat = (n_m + 1) * tm        # one extra zero tile so the halo read is in range

    # Single flattened, padded bf16 copy of x (one XLA pass; no T^2 inflation).
    xpad = jnp.pad(x, ((0, 0), (0, 0),
                       (pad_lo_h, pad_hi_h), (pad_lo_w, pad_hi_w)))
    xflat = jnp.transpose(xpad, (1, 0, 2, 3)).reshape(Cin, Mgrid)
    xflat = jnp.pad(xflat, ((0, 0), (0, Mflat - Mgrid))).astype(jnp.bfloat16)

    # Validity mask (1 on real output pixels, 0 on halo/padded columns) for BN stats.
    idx = jnp.arange(Mflat, dtype=jnp.int32)
    rem = idx % (Hp * Wp)
    valid = (rem // Wp < Hph) & (rem % Wp < Wph) & (idx < Mgrid)
    maskf = valid.astype(jnp.float32).reshape(1, Mflat)

    # Megacore split of the stats pass (per-core partial sums, "parallel" axis).
    split = 2 if (n_m >= 2 and n_m % 2 == 0) else 1
    n_ms = n_m // split
    vmem_limit = 48 * 1024 * 1024   # explicit, safe within v7x's 64 MiB VMEM

    # ---- pass 1: BN batch statistics (per-core partials, no y intermediate) ----
    sums, ssqs = pl.pallas_call(
        functools.partial(_stats_kernel, offs=offs, tt=TT),
        out_shape=(jax.ShapeDtypeStruct((split, Cout, 1), jnp.float32),
                   jax.ShapeDtypeStruct((split, Cout, 1), jnp.float32)),
        grid=(split, n_ms),
        in_specs=[
            pl.BlockSpec((Cin, tm), lambda c, m: (0, c * n_ms + m)),
            pl.BlockSpec((Cin, tm), lambda c, m: (0, c * n_ms + m + 1)),
            pl.BlockSpec((1, tm), lambda c, m: (0, c * n_ms + m)),
            pl.BlockSpec((s2 * TT, Cout, Cin), lambda c, m: (0, 0, 0)),
        ],
        out_specs=(
            pl.BlockSpec((None, Cout, 1), lambda c, m: (c, 0, 0)),
            pl.BlockSpec((None, Cout, 1), lambda c, m: (c, 0, 0)),
        ),
        scratch_shapes=[pltpu.VMEM((Cin, tm + halo_pad), jnp.bfloat16)],
        compiler_params=pltpu.CompilerParams(
            dimension_semantics=("parallel", "arbitrary"),
            vmem_limit_bytes=vmem_limit),
    )(xflat, xflat, maskf, w_taps)

    # ---- tiny per-channel BN fold (plain JAX, f32): one scale + shift ----
    ch_sum = jnp.sum(sums, axis=0)
    ch_ssq = jnp.sum(ssqs, axis=0)
    m_total = float(N * Ho * Wo)
    mean = ch_sum / m_total
    var = jnp.maximum(ch_ssq / m_total - mean * mean, 0.0)   # biased variance
    inv_std = jax.lax.rsqrt(var + eps)
    scale = gamma.reshape(Cout, 1).astype(jnp.float32) * inv_std
    shift = beta.reshape(Cout, 1).astype(jnp.float32) - mean * scale

    # ---- pass 2: recompute conv + folded BN + LeakyReLU (lane-dense output) ----
    out_t = pl.pallas_call(
        functools.partial(_apply_kernel, offs=offs, tt=TT, slope=float(slope)),
        out_shape=jax.ShapeDtypeStruct((s2, Cout, M_pad), jnp.float32),
        grid=(n_m,),
        in_specs=[
            pl.BlockSpec((Cin, tm), lambda m: (0, m)),
            pl.BlockSpec((Cin, tm), lambda m: (0, m + 1)),
            pl.BlockSpec((s2 * TT, Cout, Cin), lambda m: (0, 0, 0)),
            pl.BlockSpec((Cout, 1), lambda m: (0, 0)),
            pl.BlockSpec((Cout, 1), lambda m: (0, 0)),
        ],
        out_specs=pl.BlockSpec((s2, Cout, tm), lambda m: (0, 0, m)),
        scratch_shapes=[pltpu.VMEM((Cin, tm + halo_pad), jnp.bfloat16)],
        compiler_params=pltpu.CompilerParams(
            dimension_semantics=("parallel",),
            vmem_limit_bytes=vmem_limit),
    )(xflat, xflat, w_taps, scale, shift)

    # ---- interleave the s^2 phases back into NCHW with ONE transpose/reshape ----
    out_g = out_t[:, :, :Mgrid].reshape(s, s, Cout, N, Hp, Wp)[:, :, :, :, :Hph, :Wph]
    out = jnp.transpose(out_g, (3, 2, 4, 0, 5, 1)).reshape(N, Cout, Ho, Wo)
    return out


def _reference(x, weight, bias, gamma, beta, *, stride, padding, slope=0.2,
               eps=1e-5, cast_matmul_to_bf16=False):
    """Pure-JAX reference (dilate + flipped-kernel conv + BN + LeakyReLU)."""
    N, Cin, H, W = x.shape
    _, Cout, k, _ = weight.shape
    s, p = stride, padding
    xc, wc = x, weight
    if cast_matmul_to_bf16:   # match the kernel's bf16 operand rounding only
        xc = x.astype(jnp.bfloat16).astype(jnp.float32)
        wc = weight.astype(jnp.bfloat16).astype(jnp.float32)
    Hd, Wd = (H - 1) * s + 1, (W - 1) * s + 1
    xd = jnp.zeros((N, Cin, Hd, Wd), jnp.float32).at[:, :, ::s, ::s].set(xc)
    pad = k - 1 - p
    assert pad >= 0
    xp = jnp.pad(xd, ((0, 0), (0, 0), (pad, pad), (pad, pad)))
    w_flip = jnp.transpose(jnp.flip(wc, axis=(2, 3)), (1, 0, 2, 3))
    y = jax.lax.conv_general_dilated(
        xp, w_flip, window_strides=(1, 1), padding="VALID",
        dimension_numbers=("NCHW", "OIHW", "NCHW"))
    y = y + bias.reshape(1, Cout, 1, 1)
    mean = jnp.mean(y, axis=(0, 2, 3), keepdims=True)
    var = jnp.mean((y - mean) ** 2, axis=(0, 2, 3), keepdims=True)
    y = (y - mean) * jax.lax.rsqrt(var + eps)
    y = y * gamma.reshape(1, Cout, 1, 1) + beta.reshape(1, Cout, 1, 1)
    return jnp.where(y >= 0, y, slope * y)


if __name__ == "__main__":
    # N=2, in_c=4, out_c=8, H=W=16, k=4, s=2, p=1  ->  output 32x32
    N, Cin, Cout, H, W = 2, 4, 8, 16, 16
    k, s, p, slope = 4, 2, 1, 0.2

    key = jax.random.PRNGKey(0)
    kx, kw, kb, kg, kbe = jax.random.split(key, 5)
    x = jax.random.normal(kx, (N, Cin, H, W), dtype=jnp.float32)
    weight = 0.1 * jax.random.normal(kw, (Cin, Cout, k, k), dtype=jnp.float32)
    bias = 0.1 * jax.random.normal(kb, (Cout,), dtype=jnp.float32)
    gamma = 1.0 + 0.1 * jax.random.normal(kg, (Cout,), dtype=jnp.float32)
    beta = 0.1 * jax.random.normal(kbe, (Cout,), dtype=jnp.float32)

    fwd = jax.jit(functools.partial(trans_conv_block,
                                    stride=s, padding=p, slope=slope))
    out = jax.block_until_ready(fwd(x, weight, bias, gamma, beta))

    Ho = (H - 1) * s - 2 * p + k
    Wo = (W - 1) * s - 2 * p + k
    assert out.shape == (N, Cout, Ho, Wo)

    # Tight check vs a reference using the same bf16 rounding of matmul operands.
    ref_bf16 = _reference(x, weight, bias, gamma, beta, stride=s, padding=p,
                          slope=slope, cast_matmul_to_bf16=True)
    assert jnp.allclose(out, ref_bf16, rtol=5e-4, atol=5e-4), \
        "mismatch vs bf16-operand reference"

    # Loose sanity check vs the full-f32 reference (only bf16 operand rounding differs).
    ref_f32 = _reference(x, weight, bias, gamma, beta, stride=s, padding=p,
                         slope=slope, cast_matmul_to_bf16=False)
    assert jnp.allclose(out, ref_f32, rtol=2e-2, atol=2e-2), \
        "mismatch vs f32 reference"

    print("KERNEL_OK")
</pallas_src>

<mosaic_0001>
module attributes {stable_mosaic.version = 11 : i64} {
  func.func @_apply_kernel(%arg0: i32, %arg1: memref<4x768xbf16, #tpu.memory_space<vmem>>, %arg2: memref<4x768xbf16, #tpu.memory_space<vmem>>, %arg3: memref<16x8x4xbf16, #tpu.memory_space<vmem>>, %arg4: memref<8x1xf32, #tpu.memory_space<vmem>>, %arg5: memref<8x1xf32, #tpu.memory_space<vmem>>, %arg6: memref<4x8x768xf32, #tpu.memory_space<vmem>>, %arg7: memref<4x896xbf16, #tpu.memory_space<vmem>>) attributes {dimension_semantics = [#tpu.dimension_semantics<parallel>], iteration_bounds = array<i64: 1>, scalar_prefetch = 0 : i64, scratch_operands = 1 : i64, tpu.core_type = #tpu.core_type<tc>, window_params = [{transform_indices = @transform_0, window_bounds = array<i64: 4, 768>}, {transform_indices = @transform_1, window_bounds = array<i64: 4, 768>}, {pipeline_mode = #tpu.pipeline_mode<synchronous>, transform_indices = @transform_2, window_bounds = array<i64: 16, 8, 4>}, {pipeline_mode = #tpu.pipeline_mode<synchronous>, transform_indices = @transform_3, window_bounds = array<i64: 8, 1>}, {pipeline_mode = #tpu.pipeline_mode<synchronous>, transform_indices = @transform_4, window_bounds = array<i64: 8, 1>}, {transform_indices = @transform_5, window_bounds = array<i64: 4, 8, 768>}]} {
    %c0 = arith.constant 0 : index
    %c0_0 = arith.constant 0 : index
    %0 = vector.load %arg1[%c0, %c0_0] : memref<4x768xbf16, #tpu.memory_space<vmem>>, vector<4x768xbf16>
    %c0_1 = arith.constant 0 : index
    %c0_2 = arith.constant 0 : index
    %1 = vector.load %arg7[%c0_1, %c0_2] : memref<4x896xbf16, #tpu.memory_space<vmem>>, vector<4x768xbf16>
    tpu.vector_store %arg7[%c0_1, %c0_2], %0 {strides = array<i32>} : memref<4x896xbf16, #tpu.memory_space<vmem>>, vector<4x768xbf16>,
    %c0_3 = arith.constant 0 : index
    %c0_4 = arith.constant 0 : index
    %2 = vector.load %arg2[%c0_3, %c0_4] : memref<4x768xbf16, #tpu.memory_space<vmem>>, vector<4x128xbf16>
    %c0_5 = arith.constant 0 : index
    %c768 = arith.constant 768 : index
    %3 = vector.load %arg7[%c0_5, %c768] : memref<4x896xbf16, #tpu.memory_space<vmem>>, vector<4x128xbf16>
    tpu.vector_store %arg7[%c0_5, %c768], %2 {strides = array<i32>} : memref<4x896xbf16, #tpu.memory_space<vmem>>, vector<4x128xbf16>,
    %c0_6 = arith.constant 0 : index
    %c0_7 = arith.constant 0 : index
    %4 = vector.load %arg7[%c0_6, %c0_7] : memref<4x896xbf16, #tpu.memory_space<vmem>>, vector<4x896xbf16>
    %c0_8 = arith.constant 0 : index
    %c0_9 = arith.constant 0 : index
    %c0_10 = arith.constant 0 : index
    %5 = vector.load %arg3[%c0_8, %c0_9, %c0_10] : memref<16x8x4xbf16, #tpu.memory_space<vmem>>, vector<16x8x4xbf16>
    %c0_11 = arith.constant 0 : index
    %c0_12 = arith.constant 0 : index
    %6 = vector.load %arg4[%c0_11, %c0_12] : memref<8x1xf32, #tpu.memory_space<vmem>>, vector<8x1xf32>
    %c0_13 = arith.constant 0 : index
    %c0_14 = arith.constant 0 : index
    %7 = vector.load %arg5[%c0_13, %c0_14] : memref<8x1xf32, #tpu.memory_space<vmem>>, vector<8x1xf32>
    %cst = arith.constant 0.000000e+00 : f32
    %8 = vector.broadcast %cst : f32 to vector<8x768xf32>
    %9 = vector.extract_strided_slice %5 {offsets = [0, 0, 0], sizes = [1, 8, 4], strides = [1, 1, 1]} : vector<16x8x4xbf16> to vector<1x8x4xbf16>
    %10 = vector.shape_cast %9 : vector<1x8x4xbf16> to vector<8x4xbf16>
    %11 = vector.extract_strided_slice %4 {offsets = [0, 19], sizes = [4, 768], strides = [1, 1]} : vector<4x896xbf16> to vector<4x768xbf16>
    %cst_15 = arith.constant dense<0.000000e+00> : vector<8x768xf32>
    %12 = tpu.matmul %10, %11, %cst_15 {dimension_numbers = #tpu.dot_dimension_numbers<[1], [0], [0], [1], [0, 0, 1, 1], [], []>} : vector<8x4xbf16>, vector<4x768xbf16>, vector<8x768xf32> -> vector<8x768xf32>
    %13 = arith.addf %8, %12 : vector<8x768xf32>
    %14 = vector.extract_strided_slice %5 {offsets = [1, 0, 0], sizes = [1, 8, 4], strides = [1, 1, 1]} : vector<16x8x4xbf16> to vector<1x8x4xbf16>
    %15 = vector.shape_cast %14 : vector<1x8x4xbf16> to vector<8x4xbf16>
    %16 = vector.extract_strided_slice %4 {offsets = [0, 18], sizes = [4, 768], strides = [1, 1]} : vector<4x896xbf16> to vector<4x768xbf16>
    %cst_16 = arith.constant dense<0.000000e+00> : vector<8x768xf32>
    %17 = tpu.matmul %15, %16, %cst_16 {dimension_numbers = #tpu.dot_dimension_numbers<[1], [0], [0], [1], [0, 0, 1, 1], [], []>} : vector<8x4xbf16>, vector<4x768xbf16>, vector<8x768xf32> -> vector<8x768xf32>
    %18 = arith.addf %13, %17 : vector<8x768xf32>
    %19 = vector.extract_strided_slice %5 {offsets = [2, 0, 0], sizes = [1, 8, 4], strides = [1, 1, 1]} : vector<16x8x4xbf16> to vector<1x8x4xbf16>
    %20 = vector.shape_cast %19 : vector<1x8x4xbf16> to vector<8x4xbf16>
    %21 = vector.extract_strided_slice %4 {offsets = [0, 1], sizes = [4, 768], strides = [1, 1]} : vector<4x896xbf16> to vector<4x768xbf16>
    %cst_17 = arith.constant dense<0.000000e+00> : vector<8x768xf32>
    %22 = tpu.matmul %20, %21, %cst_17 {dimension_numbers = #tpu.dot_dimension_numbers<[1], [0], [0], [1], [0, 0, 1, 1], [], []>} : vector<8x4xbf16>, vector<4x768xbf16>, vector<8x768xf32> -> vector<8x768xf32>
    %23 = arith.addf %18, %22 : vector<8x768xf32>
    %24 = vector.extract_strided_slice %5 {offsets = [3, 0, 0], sizes = [1, 8, 4], strides = [1, 1, 1]} : vector<16x8x4xbf16> to vector<1x8x4xbf16>
    %25 = vector.shape_cast %24 : vector<1x8x4xbf16> to vector<8x4xbf16>
    %26 = vector.extract_strided_slice %4 {offsets = [0, 0], sizes = [4, 768], strides = [1, 1]} : vector<4x896xbf16> to vector<4x768xbf16>
    %cst_18 = arith.constant dense<0.000000e+00> : vector<8x768xf32>
    %27 = tpu.matmul %25, %26, %cst_18 {dimension_numbers = #tpu.dot_dimension_numbers<[1], [0], [0], [1], [0, 0, 1, 1], [], []>} : vector<8x4xbf16>, vector<4x768xbf16>, vector<8x768xf32> -> vector<8x768xf32>
    %28 = arith.addf %23, %27 : vector<8x768xf32>
    %29 = vector.broadcast %6 : vector<8x1xf32> to vector<8x768xf32>
    %30 = arith.mulf %28, %29 : vector<8x768xf32>
    %31 = vector.broadcast %7 : vector<8x1xf32> to vector<8x768xf32>
    %32 = arith.addf %30, %31 : vector<8x768xf32>
    %cst_19 = arith.constant 0.000000e+00 : f32
    %33 = vector.broadcast %cst_19 : f32 to vector<8x768xf32>
    %34 = arith.cmpf oge, %32, %33 : vector<8x768xf32>
    %cst_20 = arith.constant 2.000000e-01 : f32
    %35 = vector.broadcast %cst_20 : f32 to vector<8x768xf32>
    %36 = arith.mulf %35, %32 : vector<8x768xf32>
    %37 = arith.select %34, %32, %36 : vector<8x768xi1>, vector<8x768xf32>
    %c0_21 = arith.constant 0 : index
    %c0_22 = arith.constant 0 : index
    %c0_23 = arith.constant 0 : index
    %38 = vector.load %arg6[%c0_21, %c0_22, %c0_23] : memref<4x8x768xf32, #tpu.memory_space<vmem>>, vector<1x8x768xf32>
    %39 = vector.shape_cast %38 : vector<1x8x768xf32> to vector<8x768xf32>
    %40 = vector.shape_cast %37 : vector<8x768xf32> to vector<1x8x768xf32>
    tpu.vector_store %arg6[%c0_21, %c0_22, %c0_23], %40 {strides = array<i32>} : memref<4x8x768xf32, #tpu.memory_space<vmem>>, vector<1x8x768xf32>,
    %cst_24 = arith.constant 0.000000e+00 : f32
    %41 = vector.broadcast %cst_24 : f32 to vector<8x768xf32>
    %42 = vector.extract_strided_slice %5 {offsets = [4, 0, 0], sizes = [1, 8, 4], strides = [1, 1, 1]} : vector<16x8x4xbf16> to vector<1x8x4xbf16>
    %43 = vector.shape_cast %42 : vector<1x8x4xbf16> to vector<8x4xbf16>
    %44 = vector.extract_strided_slice %4 {offsets = [0, 20], sizes = [4, 768], strides = [1, 1]} : vector<4x896xbf16> to vector<4x768xbf16>
    %cst_25 = arith.constant dense<0.000000e+00> : vector<8x768xf32>
    %45 = tpu.matmul %43, %44, %cst_25 {dimension_numbers = #tpu.dot_dimension_numbers<[1], [0], [0], [1], [0, 0, 1, 1], [], []>} : vector<8x4xbf16>, vector<4x768xbf16>, vector<8x768xf32> -> vector<8x768xf32>
    %46 = arith.addf %41, %45 : vector<8x768xf32>
    %47 = vector.extract_strided_slice %5 {offsets = [5, 0, 0], sizes = [1, 8, 4], strides = [1, 1, 1]} : vector<16x8x4xbf16> to vector<1x8x4xbf16>
    %48 = vector.shape_cast %47 : vector<1x8x4xbf16> to vector<8x4xbf16>
    %49 = vector.extract_strided_slice %4 {offsets = [0, 19], sizes = [4, 768], strides = [1, 1]} : vector<4x896xbf16> to vector<4x768xbf16>
    %cst_26 = arith.constant dense<0.000000e+00> : vector<8x768xf32>
    %50 = tpu.matmul %48, %49, %cst_26 {dimension_numbers = #tpu.dot_dimension_numbers<[1], [0], [0], [1], [0, 0, 1, 1], [], []>} : vector<8x4xbf16>, vector<4x768xbf16>, vector<8x768xf32> -> vector<8x768xf32>
    %51 = arith.addf %46, %50 : vector<8x768xf32>
    %52 = vector.extract_strided_slice %5 {offsets = [6, 0, 0], sizes = [1, 8, 4], strides = [1, 1, 1]} : vector<16x8x4xbf16> to vector<1x8x4xbf16>
    %53 = vector.shape_cast %52 : vector<1x8x4xbf16> to vector<8x4xbf16>
    %54 = vector.extract_strided_slice %4 {offsets = [0, 2], sizes = [4, 768], strides = [1, 1]} : vector<4x896xbf16> to vector<4x768xbf16>
    %cst_27 = arith.constant dense<0.000000e+00> : vector<8x768xf32>
    %55 = tpu.matmul %53, %54, %cst_27 {dimension_numbers = #tpu.dot_dimension_numbers<[1], [0], [0], [1], [0, 0, 1, 1], [], []>} : vector<8x4xbf16>, vector<4x768xbf16>, vector<8x768xf32> -> vector<8x768xf32>
    %56 = arith.addf %51, %55 : vector<8x768xf32>
    %57 = vector.extract_strided_slice %5 {offsets = [7, 0, 0], sizes = [1, 8, 4], strides = [1, 1, 1]} : vector<16x8x4xbf16> to vector<1x8x4xbf16>
    %58 = vector.shape_cast %57 : vector<1x8x4xbf16> to vector<8x4xbf16>
    %59 = vector.extract_strided_slice %4 {offsets = [0, 1], sizes = [4, 768], strides = [1, 1]} : vector<4x896xbf16> to vector<4x768xbf16>
    %cst_28 = arith.constant dense<0.000000e+00> : vector<8x768xf32>
    %60 = tpu.matmul %58, %59, %cst_28 {dimension_numbers = #tpu.dot_dimension_numbers<[1], [0], [0], [1], [0, 0, 1, 1], [], []>} : vector<8x4xbf16>, vector<4x768xbf16>, vector<8x768xf32> -> vector<8x768xf32>
    %61 = arith.addf %56, %60 : vector<8x768xf32>
    %62 = vector.broadcast %6 : vector<8x1xf32> to vector<8x768xf32>
    %63 = arith.mulf %61, %62 : vector<8x768xf32>
    %64 = vector.broadcast %7 : vector<8x1xf32> to vector<8x768xf32>
    %65 = arith.addf %63, %64 : vector<8x768xf32>
    %cst_29 = arith.constant 0.000000e+00 : f32
    %66 = vector.broadcast %cst_29 : f32 to vector<8x768xf32>
    %67 = arith.cmpf oge, %65, %66 : vector<8x768xf32>
    %cst_30 = arith.constant 2.000000e-01 : f32
    %68 = vector.broadcast %cst_30 : f32 to vector<8x768xf32>
    %69 = arith.mulf %68, %65 : vector<8x768xf32>
    %70 = arith.select %67, %65, %69 : vector<8x768xi1>, vector<8x768xf32>
    %c1 = arith.constant 1 : index
    %c0_31 = arith.constant 0 : index
    %c0_32 = arith.constant 0 : index
    %71 = vector.load %arg6[%c1, %c0_31, %c0_32] : memref<4x8x768xf32, #tpu.memory_space<vmem>>, vector<1x8x768xf32>
    %72 = vector.shape_cast %71 : vector<1x8x768xf32> to vector<8x768xf32>
    %73 = vector.shape_cast %70 : vector<8x768xf32> to vector<1x8x768xf32>
    tpu.vector_store %arg6[%c1, %c0_31, %c0_32], %73 {strides = array<i32>} : memref<4x8x768xf32, #tpu.memory_space<vmem>>, vector<1x8x768xf32>,
    %cst_33 = arith.constant 0.000000e+00 : f32
    %74 = vector.broadcast %cst_33 : f32 to vector<8x768xf32>
    %75 = vector.extract_strided_slice %5 {offsets = [8, 0, 0], sizes = [1, 8, 4], strides = [1, 1, 1]} : vector<16x8x4xbf16> to vector<1x8x4xbf16>
    %76 = vector.shape_cast %75 : vector<1x8x4xbf16> to vector<8x4xbf16>
    %77 = vector.extract_strided_slice %4 {offsets = [0, 37], sizes = [4, 768], strides = [1, 1]} : vector<4x896xbf16> to vector<4x768xbf16>
    %cst_34 = arith.constant dense<0.000000e+00> : vector<8x768xf32>
    %78 = tpu.matmul %76, %77, %cst_34 {dimension_numbers = #tpu.dot_dimension_numbers<[1], [0], [0], [1], [0, 0, 1, 1], [], []>} : vector<8x4xbf16>, vector<4x768xbf16>, vector<8x768xf32> -> vector<8x768xf32>
    %79 = arith.addf %74, %78 : vector<8x768xf32>
    %80 = vector.extract_strided_slice %5 {offsets = [9, 0, 0], sizes = [1, 8, 4], strides = [1, 1, 1]} : vector<16x8x4xbf16> to vector<1x8x4xbf16>
    %81 = vector.shape_cast %80 : vector<1x8x4xbf16> to vector<8x4xbf16>
    %82 = vector.extract_strided_slice %4 {offsets = [0, 36], sizes = [4, 768], strides = [1, 1]} : vector<4x896xbf16> to vector<4x768xbf16>
    %cst_35 = arith.constant dense<0.000000e+00> : vector<8x768xf32>
    %83 = tpu.matmul %81, %82, %cst_35 {dimension_numbers = #tpu.dot_dimension_numbers<[1], [0], [0], [1], [0, 0, 1, 1], [], []>} : vector<8x4xbf16>, vector<4x768xbf16>, vector<8x768xf32> -> vector<8x768xf32>
    %84 = arith.addf %79, %83 : vector<8x768xf32>
    %85 = vector.extract_strided_slice %5 {offsets = [10, 0, 0], sizes = [1, 8, 4], strides = [1, 1, 1]} : vector<16x8x4xbf16> to vector<1x8x4xbf16>
    %86 = vector.shape_cast %85 : vector<1x8x4xbf16> to vector<8x4xbf16>
    %87 = vector.extract_strided_slice %4 {offsets = [0, 19], sizes = [4, 768], strides = [1, 1]} : vector<4x896xbf16> to vector<4x768xbf16>
    %cst_36 = arith.constant dense<0.000000e+00> : vector<8x768xf32>
    %88 = tpu.matmul %86, %87, %cst_36 {dimension_numbers = #tpu.dot_dimension_numbers<[1], [0], [0], [1], [0, 0, 1, 1], [], []>} : vector<8x4xbf16>, vector<4x768xbf16>, vector<8x768xf32> -> vector<8x768xf32>
    %89 = arith.addf %84, %88 : vector<8x768xf32>
    %90 = vector.extract_strided_slice %5 {offsets = [11, 0, 0], sizes = [1, 8, 4], strides = [1, 1, 1]} : vector<16x8x4xbf16> to vector<1x8x4xbf16>
    %91 = vector.shape_cast %90 : vector<1x8x4xbf16> to vector<8x4xbf16>
    %92 = vector.extract_strided_slice %4 {offsets = [0, 18], sizes = [4, 768], strides = [1, 1]} : vector<4x896xbf16> to vector<4x768xbf16>
    %cst_37 = arith.constant dense<0.000000e+00> : vector<8x768xf32>
    %93 = tpu.matmul %91, %92, %cst_37 {dimension_numbers = #tpu.dot_dimension_numbers<[1], [0], [0], [1], [0, 0, 1, 1], [], []>} : vector<8x4xbf16>, vector<4x768xbf16>, vector<8x768xf32> -> vector<8x768xf32>
    %94 = arith.addf %89, %93 : vector<8x768xf32>
    %95 = vector.broadcast %6 : vector<8x1xf32> to vector<8x768xf32>
    %96 = arith.mulf %94, %95 : vector<8x768xf32>
    %97 = vector.broadcast %7 : vector<8x1xf32> to vector<8x768xf32>
    %98 = arith.addf %96, %97 : vector<8x768xf32>
    %cst_38 = arith.constant 0.000000e+00 : f32
    %99 = vector.broadcast %cst_38 : f32 to vector<8x768xf32>
    %100 = arith.cmpf oge, %98, %99 : vector<8x768xf32>
    %cst_39 = arith.constant 2.000000e-01 : f32
    %101 = vector.broadcast %cst_39 : f32 to vector<8x768xf32>
    %102 = arith.mulf %101, %98 : vector<8x768xf32>
    %103 = arith.select %100, %98, %102 : vector<8x768xi1>, vector<8x768xf32>
    %c2 = arith.constant 2 : index
    %c0_40 = arith.constant 0 : index
    %c0_41 = arith.constant 0 : index
    %104 = vector.load %arg6[%c2, %c0_40, %c0_41] : memref<4x8x768xf32, #tpu.memory_space<vmem>>, vector<1x8x768xf32>
    %105 = vector.shape_cast %104 : vector<1x8x768xf32> to vector<8x768xf32>
    %106 = vector.shape_cast %103 : vector<8x768xf32> to vector<1x8x768xf32>
    tpu.vector_store %arg6[%c2, %c0_40, %c0_41], %106 {strides = array<i32>} : memref<4x8x768xf32, #tpu.memory_space<vmem>>, vector<1x8x768xf32>,
    %cst_42 = arith.constant 0.000000e+00 : f32
    %107 = vector.broadcast %cst_42 : f32 to vector<8x768xf32>
    %108 = vector.extract_strided_slice %5 {offsets = [12, 0, 0], sizes = [1, 8, 4], strides = [1, 1, 1]} : vector<16x8x4xbf16> to vector<1x8x4xbf16>
    %109 = vector.shape_cast %108 : vector<1x8x4xbf16> to vector<8x4xbf16>
    %110 = vector.extract_strided_slice %4 {offsets = [0, 38], sizes = [4, 768], strides = [1, 1]} : vector<4x896xbf16> to vector<4x768xbf16>
    %cst_43 = arith.constant dense<0.000000e+00> : vector<8x768xf32>
    %111 = tpu.matmul %109, %110, %cst_43 {dimension_numbers = #tpu.dot_dimension_numbers<[1], [0], [0], [1], [0, 0, 1, 1], [], []>} : vector<8x4xbf16>, vector<4x768xbf16>, vector<8x768xf32> -> vector<8x768xf32>
    %112 = arith.addf %107, %111 : vector<8x768xf32>
    %113 = vector.extract_strided_slice %5 {offsets = [13, 0, 0], sizes = [1, 8, 4], strides = [1, 1, 1]} : vector<16x8x4xbf16> to vector<1x8x4xbf16>
    %114 = vector.shape_cast %113 : vector<1x8x4xbf16> to vector<8x4xbf16>
    %115 = vector.extract_strided_slice %4 {offsets = [0, 37], sizes = [4, 768], strides = [1, 1]} : vector<4x896xbf16> to vector<4x768xbf16>
    %cst_44 = arith.constant dense<0.000000e+00> : vector<8x768xf32>
    %116 = tpu.matmul %114, %115, %cst_44 {dimension_numbers = #tpu.dot_dimension_numbers<[1], [0], [0], [1], [0, 0, 1, 1], [], []>} : vector<8x4xbf16>, vector<4x768xbf16>, vector<8x768xf32> -> vector<8x768xf32>
    %117 = arith.addf %112, %116 : vector<8x768xf32>
    %118 = vector.extract_strided_slice %5 {offsets = [14, 0, 0], sizes = [1, 8, 4], strides = [1, 1, 1]} : vector<16x8x4xbf16> to vector<1x8x4xbf16>
    %119 = vector.shape_cast %118 : vector<1x8x4xbf16> to vector<8x4xbf16>
    %120 = vector.extract_strided_slice %4 {offsets = [0, 20], sizes = [4, 768], strides = [1, 1]} : vector<4x896xbf16> to vector<4x768xbf16>
    %cst_45 = arith.constant dense<0.000000e+00> : vector<8x768xf32>
    %121 = tpu.matmul %119, %120, %cst_45 {dimension_numbers = #tpu.dot_dimension_numbers<[1], [0], [0], [1], [0, 0, 1, 1], [], []>} : vector<8x4xbf16>, vector<4x768xbf16>, vector<8x768xf32> -> vector<8x768xf32>
    %122 = arith.addf %117, %121 : vector<8x768xf32>
    %123 = vector.extract_strided_slice %5 {offsets = [15, 0, 0], sizes = [1, 8, 4], strides = [1, 1, 1]} : vector<16x8x4xbf16> to vector<1x8x4xbf16>
    %124 = vector.shape_cast %123 : vector<1x8x4xbf16> to vector<8x4xbf16>
    %125 = vector.extract_strided_slice %4 {offsets = [0, 19], sizes = [4, 768], strides = [1, 1]} : vector<4x896xbf16> to vector<4x768xbf16>
    %cst_46 = arith.constant dense<0.000000e+00> : vector<8x768xf32>
    %126 = tpu.matmul %124, %125, %cst_46 {dimension_numbers = #tpu.dot_dimension_numbers<[1], [0], [0], [1], [0, 0, 1, 1], [], []>} : vector<8x4xbf16>, vector<4x768xbf16>, vector<8x768xf32> -> vector<8x768xf32>
    %127 = arith.addf %122, %126 : vector<8x768xf32>
    %128 = vector.broadcast %6 : vector<8x1xf32> to vector<8x768xf32>
    %129 = arith.mulf %127, %128 : vector<8x768xf32>
    %130 = vector.broadcast %7 : vector<8x1xf32> to vector<8x768xf32>
    %131 = arith.addf %129, %130 : vector<8x768xf32>
    %cst_47 = arith.constant 0.000000e+00 : f32
    %132 = vector.broadcast %cst_47 : f32 to vector<8x768xf32>
    %133 = arith.cmpf oge, %131, %132 : vector<8x768xf32>
    %cst_48 = arith.constant 2.000000e-01 : f32
    %134 = vector.broadcast %cst_48 : f32 to vector<8x768xf32>
    %135 = arith.mulf %134, %131 : vector<8x768xf32>
    %136 = arith.select %133, %131, %135 : vector<8x768xi1>, vector<8x768xf32>
    %c3 = arith.constant 3 : index
    %c0_49 = arith.constant 0 : index
    %c0_50 = arith.constant 0 : index
    %137 = vector.load %arg6[%c3, %c0_49, %c0_50] : memref<4x8x768xf32, #tpu.memory_space<vmem>>, vector<1x8x768xf32>
    %138 = vector.shape_cast %137 : vector<1x8x768xf32> to vector<8x768xf32>
    %139 = vector.shape_cast %136 : vector<8x768xf32> to vector<1x8x768xf32>
    tpu.vector_store %arg6[%c3, %c0_49, %c0_50], %139 {strides = array<i32>} : memref<4x8x768xf32, #tpu.memory_space<vmem>>, vector<1x8x768xf32>,
    return
  }
  func.func @transform_0(%arg0: i32) -> (i32, i32) {
    %c0_i32 = arith.constant 0 : i32
    %c0_i32_0 = arith.constant 0 : i32
    return %c0_i32, %arg0 : i32, i32
  }
  func.func @transform_1(%arg0: i32) -> (i32, i32) {
    %c1_i32 = arith.constant 1 : i32
    %0 = arith.addi %arg0, %c1_i32 : i32
    %c0_i32 = arith.constant 0 : i32
    %c0_i32_0 = arith.constant 0 : i32
    return %c0_i32, %0 : i32, i32
  }
  func.func @transform_2(%arg0: i32) -> (i32, i32, i32) {
    %c0_i32 = arith.constant 0 : i32
    %c0_i32_0 = arith.constant 0 : i32
    %c0_i32_1 = arith.constant 0 : i32
    %c0_i32_2 = arith.constant 0 : i32
    return %c0_i32, %c0_i32_0, %c0_i32_1 : i32, i32, i32
  }
  func.func @transform_3(%arg0: i32) -> (i32, i32) {
    %c0_i32 = arith.constant 0 : i32
    %c0_i32_0 = arith.constant 0 : i32
    %c0_i32_1 = arith.constant 0 : i32
    return %c0_i32, %c0_i32_0 : i32, i32
  }
  func.func @transform_4(%arg0: i32) -> (i32, i32) {
    %c0_i32 = arith.constant 0 : i32
    %c0_i32_0 = arith.constant 0 : i32
    %c0_i32_1 = arith.constant 0 : i32
    return %c0_i32, %c0_i32_0 : i32, i32
  }
  func.func @transform_5(%arg0: i32) -> (i32, i32, i32) {
    %c0_i32 = arith.constant 0 : i32
    %c0_i32_0 = arith.constant 0 : i32
    %c0_i32_1 = arith.constant 0 : i32
    return %c0_i32, %c0_i32_0, %arg0 : i32, i32, i32
  }
}

module attributes {stable_mosaic.version = 11 : i64} {
  func.func @_stats_kernel(%arg0: i32, %arg1: i32, %arg2: memref<4x768xbf16, #tpu.memory_space<vmem>>, %arg3: memref<4x768xbf16, #tpu.memory_space<vmem>>, %arg4: memref<1x768xf32, #tpu.memory_space<vmem>>, %arg5: memref<16x8x4xbf16, #tpu.memory_space<vmem>>, %arg6: memref<1x8x1xf32, #tpu.memory_space<vmem>>, %arg7: memref<1x8x1xf32, #tpu.memory_space<vmem>>, %arg8: memref<4x896xbf16, #tpu.memory_space<vmem>>) attributes {dimension_semantics = [#tpu.dimension_semantics<parallel>, #tpu.dimension_semantics<arbitrary>], iteration_bounds = array<i64: 1, 1>, scalar_prefetch = 0 : i64, scratch_operands = 1 : i64, tpu.core_type = #tpu.core_type<tc>, window_params = [{transform_indices = @transform_0, window_bounds = array<i64: 4, 768>}, {transform_indices = @transform_1, window_bounds = array<i64: 4, 768>}, {transform_indices = @transform_2, window_bounds = array<i64: 1, 768>}, {pipeline_mode = #tpu.pipeline_mode<synchronous>, transform_indices = @transform_3, window_bounds = array<i64: 16, 8, 4>}, {transform_indices = @transform_4, window_bounds = array<i64: 1, 8, 1>}, {transform_indices = @transform_5, window_bounds = array<i64: 1, 8, 1>}]} {
    %c0_i32 = arith.constant 0 : i32
    %0 = arith.cmpi eq, %arg1, %c0_i32 : i32
    %1 = arith.extui %0 : i1 to i32
    %c0_i32_0 = arith.constant 0 : i32
    %2 = arith.cmpi ne, %1, %c0_i32_0 : i32
    scf.if %2 {
      %cst_55 = arith.constant 0.000000e+00 : f32
      %144 = vector.broadcast %cst_55 : f32 to vector<8x1xf32>
      %c0_56 = arith.constant 0 : index
      %c0_57 = arith.constant 0 : index
      %c0_58 = arith.constant 0 : index
      %145 = vector.load %arg6[%c0_56, %c0_57, %c0_58] : memref<1x8x1xf32, #tpu.memory_space<vmem>>, vector<1x8x1xf32>
      %146 = vector.shape_cast %145 : vector<1x8x1xf32> to vector<8x1xf32>
      %147 = vector.shape_cast %144 : vector<8x1xf32> to vector<1x8x1xf32>
      tpu.vector_store %arg6[%c0_56, %c0_57, %c0_58], %147 {strides = array<i32>} : memref<1x8x1xf32, #tpu.memory_space<vmem>>, vector<1x8x1xf32>,
      %cst_59 = arith.constant 0.000000e+00 : f32
      %148 = vector.broadcast %cst_59 : f32 to vector<8x1xf32>
      %c0_60 = arith.constant 0 : index
      %c0_61 = arith.constant 0 : index
      %c0_62 = arith.constant 0 : index
      %149 = vector.load %arg7[%c0_60, %c0_61, %c0_62] : memref<1x8x1xf32, #tpu.memory_space<vmem>>, vector<1x8x1xf32>
      %150 = vector.shape_cast %149 : vector<1x8x1xf32> to vector<8x1xf32>
      %151 = vector.shape_cast %148 : vector<8x1xf32> to vector<1x8x1xf32>
      tpu.vector_store %arg7[%c0_60, %c0_61, %c0_62], %151 {strides = array<i32>} : memref<1x8x1xf32, #tpu.memory_space<vmem>>, vector<1x8x1xf32>,
    } else {
    }
    %c0 = arith.constant 0 : index
    %c0_1 = arith.constant 0 : index
    %3 = vector.load %arg2[%c0, %c0_1] : memref<4x768xbf16, #tpu.memory_space<vmem>>, vector<4x768xbf16>
    %c0_2 = arith.constant 0 : index
    %c0_3 = arith.constant 0 : index
    %4 = vector.load %arg8[%c0_2, %c0_3] : memref<4x896xbf16, #tpu.memory_space<vmem>>, vector<4x768xbf16>
    tpu.vector_store %arg8[%c0_2, %c0_3], %3 {strides = array<i32>} : memref<4x896xbf16, #tpu.memory_space<vmem>>, vector<4x768xbf16>,
    %c0_4 = arith.constant 0 : index
    %c0_5 = arith.constant 0 : index
    %5 = vector.load %arg3[%c0_4, %c0_5] : memref<4x768xbf16, #tpu.memory_space<vmem>>, vector<4x128xbf16>
    %c0_6 = arith.constant 0 : index
    %c768 = arith.constant 768 : index
    %6 = vector.load %arg8[%c0_6, %c768] : memref<4x896xbf16, #tpu.memory_space<vmem>>, vector<4x128xbf16>
    tpu.vector_store %arg8[%c0_6, %c768], %5 {strides = array<i32>} : memref<4x896xbf16, #tpu.memory_space<vmem>>, vector<4x128xbf16>,
    %c0_7 = arith.constant 0 : index
    %c0_8 = arith.constant 0 : index
    %7 = vector.load %arg8[%c0_7, %c0_8] : memref<4x896xbf16, #tpu.memory_space<vmem>>, vector<4x896xbf16>
    %c0_9 = arith.constant 0 : index
    %c0_10 = arith.constant 0 : index
    %c0_11 = arith.constant 0 : index
    %8 = vector.load %arg5[%c0_9, %c0_10, %c0_11] : memref<16x8x4xbf16, #tpu.memory_space<vmem>>, vector<16x8x4xbf16>
    %c0_12 = arith.constant 0 : index
    %c0_13 = arith.constant 0 : index
    %9 = vector.load %arg4[%c0_12, %c0_13] : memref<1x768xf32, #tpu.memory_space<vmem>>, vector<1x768xf32>
    %cst = arith.constant 0.000000e+00 : f32
    %10 = vector.broadcast %cst : f32 to vector<8x1xf32>
    %cst_14 = arith.constant 0.000000e+00 : f32
    %11 = vector.broadcast %cst_14 : f32 to vector<8x1xf32>
    %cst_15 = arith.constant 0.000000e+00 : f32
    %12 = vector.broadcast %cst_15 : f32 to vector<8x768xf32>
    %13 = vector.extract_strided_slice %7 {offsets = [0, 19], sizes = [4, 768], strides = [1, 1]} : vector<4x896xbf16> to vector<4x768xbf16>
    %14 = vector.extract_strided_slice %8 {offsets = [0, 0, 0], sizes = [1, 8, 4], strides = [1, 1, 1]} : vector<16x8x4xbf16> to vector<1x8x4xbf16>
    %15 = vector.shape_cast %14 : vector<1x8x4xbf16> to vector<8x4xbf16>
    %cst_16 = arith.constant dense<0.000000e+00> : vector<8x768xf32>
    %16 = tpu.matmul %15, %13, %cst_16 {dimension_numbers = #tpu.dot_dimension_numbers<[1], [0], [0], [1], [0, 0, 1, 1], [], []>} : vector<8x4xbf16>, vector<4x768xbf16>, vector<8x768xf32> -> vector<8x768xf32>
    %17 = arith.addf %12, %16 : vector<8x768xf32>
    %18 = vector.extract_strided_slice %7 {offsets = [0, 18], sizes = [4, 768], strides = [1, 1]} : vector<4x896xbf16> to vector<4x768xbf16>
    %19 = vector.extract_strided_slice %8 {offsets = [1, 0, 0], sizes = [1, 8, 4], strides = [1, 1, 1]} : vector<16x8x4xbf16> to vector<1x8x4xbf16>
    %20 = vector.shape_cast %19 : vector<1x8x4xbf16> to vector<8x4xbf16>
    %cst_17 = arith.constant dense<0.000000e+00> : vector<8x768xf32>
    %21 = tpu.matmul %20, %18, %cst_17 {dimension_numbers = #tpu.dot_dimension_numbers<[1], [0], [0], [1], [0, 0, 1, 1], [], []>} : vector<8x4xbf16>, vector<4x768xbf16>, vector<8x768xf32> -> vector<8x768xf32>
    %22 = arith.addf %17, %21 : vector<8x768xf32>
    %23 = vector.extract_strided_slice %7 {offsets = [0, 1], sizes = [4, 768], strides = [1, 1]} : vector<4x896xbf16> to vector<4x768xbf16>
    %24 = vector.extract_strided_slice %8 {offsets = [2, 0, 0], sizes = [1, 8, 4], strides = [1, 1, 1]} : vector<16x8x4xbf16> to vector<1x8x4xbf16>
    %25 = vector.shape_cast %24 : vector<1x8x4xbf16> to vector<8x4xbf16>
    %cst_18 = arith.constant dense<0.000000e+00> : vector<8x768xf32>
    %26 = tpu.matmul %25, %23, %cst_18 {dimension_numbers = #tpu.dot_dimension_numbers<[1], [0], [0], [1], [0, 0, 1, 1], [], []>} : vector<8x4xbf16>, vector<4x768xbf16>, vector<8x768xf32> -> vector<8x768xf32>
    %27 = arith.addf %22, %26 : vector<8x768xf32>
    %28 = vector.extract_strided_slice %7 {offsets = [0, 0], sizes = [4, 768], strides = [1, 1]} : vector<4x896xbf16> to vector<4x768xbf16>
    %29 = vector.extract_strided_slice %8 {offsets = [3, 0, 0], sizes = [1, 8, 4], strides = [1, 1, 1]} : vector<16x8x4xbf16> to vector<1x8x4xbf16>
    %30 = vector.shape_cast %29 : vector<1x8x4xbf16> to vector<8x4xbf16>
    %cst_19 = arith.constant dense<0.000000e+00> : vector<8x768xf32>
    %31 = tpu.matmul %30, %28, %cst_19 {dimension_numbers = #tpu.dot_dimension_numbers<[1], [0], [0], [1], [0, 0, 1, 1], [], []>} : vector<8x4xbf16>, vector<4x768xbf16>, vector<8x768xf32> -> vector<8x768xf32>
    %32 = arith.addf %27, %31 : vector<8x768xf32>
    %33 = vector.broadcast %9 : vector<1x768xf32> to vector<8x768xf32>
    %34 = arith.mulf %32, %33 : vector<8x768xf32>
    %cst_20 = arith.constant dense<0.000000e+00> : vector<8xf32>
    %35 = vector.multi_reduction <add>, %34, %cst_20 [1] : vector<8x768xf32> to vector<8xf32>
    %36 = vector.shape_cast %35 : vector<8xf32> to vector<8x1xf32>
    %37 = arith.addf %10, %36 : vector<8x1xf32>
    %38 = arith.mulf %34, %32 : vector<8x768xf32>
    %cst_21 = arith.constant dense<0.000000e+00> : vector<8xf32>
    %39 = vector.multi_reduction <add>, %38, %cst_21 [1] : vector<8x768xf32> to vector<8xf32>
    %40 = vector.shape_cast %39 : vector<8xf32> to vector<8x1xf32>
    %41 = arith.addf %11, %40 : vector<8x1xf32>
    %cst_22 = arith.constant 0.000000e+00 : f32
    %42 = vector.broadcast %cst_22 : f32 to vector<8x768xf32>
    %43 = vector.extract_strided_slice %7 {offsets = [0, 20], sizes = [4, 768], strides = [1, 1]} : vector<4x896xbf16> to vector<4x768xbf16>
    %44 = vector.extract_strided_slice %8 {offsets = [4, 0, 0], sizes = [1, 8, 4], strides = [1, 1, 1]} : vector<16x8x4xbf16> to vector<1x8x4xbf16>
    %45 = vector.shape_cast %44 : vector<1x8x4xbf16> to vector<8x4xbf16>
    %cst_23 = arith.constant dense<0.000000e+00> : vector<8x768xf32>
    %46 = tpu.matmul %45, %43, %cst_23 {dimension_numbers = #tpu.dot_dimension_numbers<[1], [0], [0], [1], [0, 0, 1, 1], [], []>} : vector<8x4xbf16>, vector<4x768xbf16>, vector<8x768xf32> -> vector<8x768xf32>
    %47 = arith.addf %42, %46 : vector<8x768xf32>
    %48 = vector.extract_strided_slice %7 {offsets = [0, 19], sizes = [4, 768], strides = [1, 1]} : vector<4x896xbf16> to vector<4x768xbf16>
    %49 = vector.extract_strided_slice %8 {offsets = [5, 0, 0], sizes = [1, 8, 4], strides = [1, 1, 1]} : vector<16x8x4xbf16> to vector<1x8x4xbf16>
    %50 = vector.shape_cast %49 : vector<1x8x4xbf16> to vector<8x4xbf16>
    %cst_24 = arith.constant dense<0.000000e+00> : vector<8x768xf32>
    %51 = tpu.matmul %50, %48, %cst_24 {dimension_numbers = #tpu.dot_dimension_numbers<[1], [0], [0], [1], [0, 0, 1, 1], [], []>} : vector<8x4xbf16>, vector<4x768xbf16>, vector<8x768xf32> -> vector<8x768xf32>
    %52 = arith.addf %47, %51 : vector<8x768xf32>
    %53 = vector.extract_strided_slice %7 {offsets = [0, 2], sizes = [4, 768], strides = [1, 1]} : vector<4x896xbf16> to vector<4x768xbf16>
    %54 = vector.extract_strided_slice %8 {offsets = [6, 0, 0], sizes = [1, 8, 4], strides = [1, 1, 1]} : vector<16x8x4xbf16> to vector<1x8x4xbf16>
    %55 = vector.shape_cast %54 : vector<1x8x4xbf16> to vector<8x4xbf16>
    %cst_25 = arith.constant dense<0.000000e+00> : vector<8x768xf32>
    %56 = tpu.matmul %55, %53, %cst_25 {dimension_numbers = #tpu.dot_dimension_numbers<[1], [0], [0], [1], [0, 0, 1, 1], [], []>} : vector<8x4xbf16>, vector<4x768xbf16>, vector<8x768xf32> -> vector<8x768xf32>
    %57 = arith.addf %52, %56 : vector<8x768xf32>
    %58 = vector.extract_strided_slice %7 {offsets = [0, 1], sizes = [4, 768], strides = [1, 1]} : vector<4x896xbf16> to vector<4x768xbf16>
    %59 = vector.extract_strided_slice %8 {offsets = [7, 0, 0], sizes = [1, 8, 4], strides = [1, 1, 1]} : vector<16x8x4xbf16> to vector<1x8x4xbf16>
    %60 = vector.shape_cast %59 : vector<1x8x4xbf16> to vector<8x4xbf16>
    %cst_26 = arith.constant dense<0.000000e+00> : vector<8x768xf32>
    %61 = tpu.matmul %60, %58, %cst_26 {dimension_numbers = #tpu.dot_dimension_numbers<[1], [0], [0], [1], [0, 0, 1, 1], [], []>} : vector<8x4xbf16>, vector<4x768xbf16>, vector<8x768xf32> -> vector<8x768xf32>
    %62 = arith.addf %57, %61 : vector<8x768xf32>
    %63 = vector.broadcast %9 : vector<1x768xf32> to vector<8x768xf32>
    %64 = arith.mulf %62, %63 : vector<8x768xf32>
    %cst_27 = arith.constant dense<0.000000e+00> : vector<8xf32>
    %65 = vector.multi_reduction <add>, %64, %cst_27 [1] : vector<8x768xf32> to vector<8xf32>
    %66 = vector.shape_cast %65 : vector<8xf32> to vector<8x1xf32>
    %67 = arith.addf %37, %66 : vector<8x1xf32>
    %68 = arith.mulf %64, %62 : vector<8x768xf32>
    %cst_28 = arith.constant dense<0.000000e+00> : vector<8xf32>
    %69 = vector.multi_reduction <add>, %68, %cst_28 [1] : vector<8x768xf32> to vector<8xf32>
    %70 = vector.shape_cast %69 : vector<8xf32> to vector<8x1xf32>
    %71 = arith.addf %41, %70 : vector<8x1xf32>
    %cst_29 = arith.constant 0.000000e+00 : f32
    %72 = vector.broadcast %cst_29 : f32 to vector<8x768xf32>
    %73 = vector.extract_strided_slice %7 {offsets = [0, 37], sizes = [4, 768], strides = [1, 1]} : vector<4x896xbf16> to vector<4x768xbf16>
    %74 = vector.extract_strided_slice %8 {offsets = [8, 0, 0], sizes = [1, 8, 4], strides = [1, 1, 1]} : vector<16x8x4xbf16> to vector<1x8x4xbf16>
    %75 = vector.shape_cast %74 : vector<1x8x4xbf16> to vector<8x4xbf16>
    %cst_30 = arith.constant dense<0.000000e+00> : vector<8x768xf32>
    %76 = tpu.matmul %75, %73, %cst_30 {dimension_numbers = #tpu.dot_dimension_numbers<[1], [0], [0], [1], [0, 0, 1, 1], [], []>} : vector<8x4xbf16>, vector<4x768xbf16>, vector<8x768xf32> -> vector<8x768xf32>
    %77 = arith.addf %72, %76 : vector<8x768xf32>
    %78 = vector.extract_strided_slice %7 {offsets = [0, 36], sizes = [4, 768], strides = [1, 1]} : vector<4x896xbf16> to vector<4x768xbf16>
    %79 = vector.extract_strided_slice %8 {offsets = [9, 0, 0], sizes = [1, 8, 4], strides = [1, 1, 1]} : vector<16x8x4xbf16> to vector<1x8x4xbf16>
    %80 = vector.shape_cast %79 : vector<1x8x4xbf16> to vector<8x4xbf16>
    %cst_31 = arith.constant dense<0.000000e+00> : vector<8x768xf32>
    %81 = tpu.matmul %80, %78, %cst_31 {dimension_numbers = #tpu.dot_dimension_numbers<[1], [0], [0], [1], [0, 0, 1, 1], [], []>} : vector<8x4xbf16>, vector<4x768xbf16>, vector<8x768xf32> -> vector<8x768xf32>
    %82 = arith.addf %77, %81 : vector<8x768xf32>
    %83 = vector.extract_strided_slice %7 {offsets = [0, 19], sizes = [4, 768], strides = [1, 1]} : vector<4x896xbf16> to vector<4x768xbf16>
    %84 = vector.extract_strided_slice %8 {offsets = [10, 0, 0], sizes = [1, 8, 4], strides = [1, 1, 1]} : vector<16x8x4xbf16> to vector<1x8x4xbf16>
    %85 = vector.shape_cast %84 : vector<1x8x4xbf16> to vector<8x4xbf16>
    %cst_32 = arith.constant dense<0.000000e+00> : vector<8x768xf32>
    %86 = tpu.matmul %85, %83, %cst_32 {dimension_numbers = #tpu.dot_dimension_numbers<[1], [0], [0], [1], [0, 0, 1, 1], [], []>} : vector<8x4xbf16>, vector<4x768xbf16>, vector<8x768xf32> -> vector<8x768xf32>
    %87 = arith.addf %82, %86 : vector<8x768xf32>
    %88 = vector.extract_strided_slice %7 {offsets = [0, 18], sizes = [4, 768], strides = [1, 1]} : vector<4x896xbf16> to vector<4x768xbf16>
    %89 = vector.extract_strided_slice %8 {offsets = [11, 0, 0], sizes = [1, 8, 4], strides = [1, 1, 1]} : vector<16x8x4xbf16> to vector<1x8x4xbf16>
    %90 = vector.shape_cast %89 : vector<1x8x4xbf16> to vector<8x4xbf16>
    %cst_33 = arith.constant dense<0.000000e+00> : vector<8x768xf32>
    %91 = tpu.matmul %90, %88, %cst_33 {dimension_numbers = #tpu.dot_dimension_numbers<[1], [0], [0], [1], [0, 0, 1, 1], [], []>} : vector<8x4xbf16>, vector<4x768xbf16>, vector<8x768xf32> -> vector<8x768xf32>
    %92 = arith.addf %87, %91 : vector<8x768xf32>
    %93 = vector.broadcast %9 : vector<1x768xf32> to vector<8x768xf32>
    %94 = arith.mulf %92, %93 : vector<8x768xf32>
    %cst_34 = arith.constant dense<0.000000e+00> : vector<8xf32>
    %95 = vector.multi_reduction <add>, %94, %cst_34 [1] : vector<8x768xf32> to vector<8xf32>
    %96 = vector.shape_cast %95 : vector<8xf32> to vector<8x1xf32>
    %97 = arith.addf %67, %96 : vector<8x1xf32>
    %98 = arith.mulf %94, %92 : vector<8x768xf32>
    %cst_35 = arith.constant dense<0.000000e+00> : vector<8xf32>
    %99 = vector.multi_reduction <add>, %98, %cst_35 [1] : vector<8x768xf32> to vector<8xf32>
    %100 = vector.shape_cast %99 : vector<8xf32> to vector<8x1xf32>
    %101 = arith.addf %71, %100 : vector<8x1xf32>
    %cst_36 = arith.constant 0.000000e+00 : f32
    %102 = vector.broadcast %cst_36 : f32 to vector<8x768xf32>
    %103 = vector.extract_strided_slice %7 {offsets = [0, 38], sizes = [4, 768], strides = [1, 1]} : vector<4x896xbf16> to vector<4x768xbf16>
    %104 = vector.extract_strided_slice %8 {offsets = [12, 0, 0], sizes = [1, 8, 4], strides = [1, 1, 1]} : vector<16x8x4xbf16> to vector<1x8x4xbf16>
    %105 = vector.shape_cast %104 : vector<1x8x4xbf16> to vector<8x4xbf16>
    %cst_37 = arith.constant dense<0.000000e+00> : vector<8x768xf32>
    %106 = tpu.matmul %105, %103, %cst_37 {dimension_numbers = #tpu.dot_dimension_numbers<[1], [0], [0], [1], [0, 0, 1, 1], [], []>} : vector<8x4xbf16>, vector<4x768xbf16>, vector<8x768xf32> -> vector<8x768xf32>
    %107 = arith.addf %102, %106 : vector<8x768xf32>
    %108 = vector.extract_strided_slice %7 {offsets = [0, 37], sizes = [4, 768], strides = [1, 1]} : vector<4x896xbf16> to vector<4x768xbf16>
    %109 = vector.extract_strided_slice %8 {offsets = [13, 0, 0], sizes = [1, 8, 4], strides = [1, 1, 1]} : vector<16x8x4xbf16> to vector<1x8x4xbf16>
    %110 = vector.shape_cast %109 : vector<1x8x4xbf16> to vector<8x4xbf16>
    %cst_38 = arith.constant dense<0.000000e+00> : vector<8x768xf32>
    %111 = tpu.matmul %110, %108, %cst_38 {dimension_numbers = #tpu.dot_dimension_numbers<[1], [0], [0], [1], [0, 0, 1, 1], [], []>} : vector<8x4xbf16>, vector<4x768xbf16>, vector<8x768xf32> -> vector<8x768xf32>
    %112 = arith.addf %107, %111 : vector<8x768xf32>
    %113 = vector.extract_strided_slice %7 {offsets = [0, 20], sizes = [4, 768], strides = [1, 1]} : vector<4x896xbf16> to vector<4x768xbf16>
    %114 = vector.extract_strided_slice %8 {offsets = [14, 0, 0], sizes = [1, 8, 4], strides = [1, 1, 1]} : vector<16x8x4xbf16> to vector<1x8x4xbf16>
    %115 = vector.shape_cast %114 : vector<1x8x4xbf16> to vector<8x4xbf16>
    %cst_39 = arith.constant dense<0.000000e+00> : vector<8x768xf32>
    %116 = tpu.matmul %115, %113, %cst_39 {dimension_numbers = #tpu.dot_dimension_numbers<[1], [0], [0], [1], [0, 0, 1, 1], [], []>} : vector<8x4xbf16>, vector<4x768xbf16>, vector<8x768xf32> -> vector<8x768xf32>
    %117 = arith.addf %112, %116 : vector<8x768xf32>
    %118 = vector.extract_strided_slice %7 {offsets = [0, 19], sizes = [4, 768], strides = [1, 1]} : vector<4x896xbf16> to vector<4x768xbf16>
    %119 = vector.extract_strided_slice %8 {offsets = [15, 0, 0], sizes = [1, 8, 4], strides = [1, 1, 1]} : vector<16x8x4xbf16> to vector<1x8x4xbf16>
    %120 = vector.shape_cast %119 : vector<1x8x4xbf16> to vector<8x4xbf16>
    %cst_40 = arith.constant dense<0.000000e+00> : vector<8x768xf32>
    %121 = tpu.matmul %120, %118, %cst_40 {dimension_numbers = #tpu.dot_dimension_numbers<[1], [0], [0], [1], [0, 0, 1, 1], [], []>} : vector<8x4xbf16>, vector<4x768xbf16>, vector<8x768xf32> -> vector<8x768xf32>
    %122 = arith.addf %117, %121 : vector<8x768xf32>
    %123 = vector.broadcast %9 : vector<1x768xf32> to vector<8x768xf32>
    %124 = arith.mulf %122, %123 : vector<8x768xf32>
    %cst_41 = arith.constant dense<0.000000e+00> : vector<8xf32>
    %125 = vector.multi_reduction <add>, %124, %cst_41 [1] : vector<8x768xf32> to vector<8xf32>
    %126 = vector.shape_cast %125 : vector<8xf32> to vector<8x1xf32>
    %127 = arith.addf %97, %126 : vector<8x1xf32>
    %128 = arith.mulf %124, %122 : vector<8x768xf32>
    %cst_42 = arith.constant dense<0.000000e+00> : vector<8xf32>
    %129 = vector.multi_reduction <add>, %128, %cst_42 [1] : vector<8x768xf32> to vector<8xf32>
    %130 = vector.shape_cast %129 : vector<8xf32> to vector<8x1xf32>
    %131 = arith.addf %101, %130 : vector<8x1xf32>
    %c0_43 = arith.constant 0 : index
    %c0_44 = arith.constant 0 : index
    %c0_45 = arith.constant 0 : index
    %132 = vector.load %arg6[%c0_43, %c0_44, %c0_45] : memref<1x8x1xf32, #tpu.memory_space<vmem>>, vector<1x8x1xf32>
    %133 = vector.shape_cast %132 : vector<1x8x1xf32> to vector<8x1xf32>
    %134 = arith.addf %133, %127 : vector<8x1xf32>
    %c0_46 = arith.constant 0 : index
    %c0_47 = arith.constant 0 : index
    %c0_48 = arith.constant 0 : index
    %135 = vector.load %arg6[%c0_46, %c0_47, %c0_48] : memref<1x8x1xf32, #tpu.memory_space<vmem>>, vector<1x8x1xf32>
    %136 = vector.shape_cast %135 : vector<1x8x1xf32> to vector<8x1xf32>
    %137 = vector.shape_cast %134 : vector<8x1xf32> to vector<1x8x1xf32>
    tpu.vector_store %arg6[%c0_46, %c0_47, %c0_48], %137 {strides = array<i32>} : memref<1x8x1xf32, #tpu.memory_space<vmem>>, vector<1x8x1xf32>,
    %c0_49 = arith.constant 0 : index
    %c0_50 = arith.constant 0 : index
    %c0_51 = arith.constant 0 : index
    %138 = vector.load %arg7[%c0_49, %c0_50, %c0_51] : memref<1x8x1xf32, #tpu.memory_space<vmem>>, vector<1x8x1xf32>
    %139 = vector.shape_cast %138 : vector<1x8x1xf32> to vector<8x1xf32>
    %140 = arith.addf %139, %131 : vector<8x1xf32>
    %c0_52 = arith.constant 0 : index
    %c0_53 = arith.constant 0 : index
    %c0_54 = arith.constant 0 : index
    %141 = vector.load %arg7[%c0_52, %c0_53, %c0_54] : memref<1x8x1xf32, #tpu.memory_space<vmem>>, vector<1x8x1xf32>
    %142 = vector.shape_cast %141 : vector<1x8x1xf32> to vector<8x1xf32>
    %143 = vector.shape_cast %140 : vector<8x1xf32> to vector<1x8x1xf32>
    tpu.vector_store %arg7[%c0_52, %c0_53, %c0_54], %143 {strides = array<i32>} : memref<1x8x1xf32, #tpu.memory_space<vmem>>, vector<1x8x1xf32>,
    return
  }
  func.func @transform_0(%arg0: i32, %arg1: i32) -> (i32, i32) {
    %c1_i32 = arith.constant 1 : i32
    %0 = arith.muli %arg0, %c1_i32 : i32
    %1 = arith.addi %0, %arg1 : i32
    %c0_i32 = arith.constant 0 : i32
    %c0_i32_0 = arith.constant 0 : i32
    return %c0_i32, %1 : i32, i32
  }
  func.func @transform_1(%arg0: i32, %arg1: i32) -> (i32, i32) {
    %c1_i32 = arith.constant 1 : i32
    %0 = arith.muli %arg0, %c1_i32 : i32
    %1 = arith.addi %0, %arg1 : i32
    %c1_i32_0 = arith.constant 1 : i32
    %2 = arith.addi %1, %c1_i32_0 : i32
    %c0_i32 = arith.constant 0 : i32
    %c0_i32_1 = arith.constant 0 : i32
    return %c0_i32, %2 : i32, i32
  }
  func.func @transform_2(%arg0: i32, %arg1: i32) -> (i32, i32) {
    %c1_i32 = arith.constant 1 : i32
    %0 = arith.muli %arg0, %c1_i32 : i32
    %1 = arith.addi %0, %arg1 : i32
    %c0_i32 = arith.constant 0 : i32
    %c0_i32_0 = arith.constant 0 : i32
    return %c0_i32, %1 : i32, i32
  }
  func.func @transform_3(%arg0: i32, %arg1: i32) -> (i32, i32, i32) {
    %c0_i32 = arith.constant 0 : i32
    %c0_i32_0 = arith.constant 0 : i32
    %c0_i32_1 = arith.constant 0 : i32
    %c0_i32_2 = arith.constant 0 : i32
    return %c0_i32, %c0_i32_0, %c0_i32_1 : i32, i32, i32
  }
  func.func @transform_4(%arg0: i32, %arg1: i32) -> (i32, i32, i32) {
    %c0_i32 = arith.constant 0 : i32
    %c0_i32_0 = arith.constant 0 : i32
    %c0_i32_1 = arith.constant 0 : i32
    return %arg0, %c0_i32, %c0_i32_0 : i32, i32, i32
  }
  func.func @transform_5(%arg0: i32, %arg1: i32) -> (i32, i32, i32) {
    %c0_i32 = arith.constant 0 : i32
    %c0_i32_0 = arith.constant 0 : i32
    %c0_i32_1 = arith.constant 0 : i32
    return %arg0, %c0_i32, %c0_i32_0 : i32, i32, i32
  }
}

</mosaic_0001>

<llo_original>
// kernel: trans_conv_block.3
$region0: #{trans_conv_block.3}
  #allocation0 [shape = 'u32[]', space=smem, size = 0x4, offset = 0x4, fixed_abs, tag = 'smem constant byte address 0x4 - core index']
  #allocation1 [shape = 'u32[144,128]{1,0:T(1,128)}', space=vmem, size = 0x12000, scoped, tag = 'internal scratch']
  #allocation2 [shape = 'bf16[4,896]{1,0:T(4,128)(2,1)}', space=vmem, size = 0x1c00, scoped, tag = 'scratch operand']
  %s0 = inlined_call_operand.vmem [shape: bf16[4,1536], index: 0, kind: input, shape index: {}, may-alias: {0,1}]
  %s1 = inlined_call_operand.vmem [shape: bf16[4,1536], index: 1, kind: input, shape index: {}, may-alias: {0,1}]
  %s2 = inlined_call_operand.vmem [shape: bf16[16,8,4], index: 2, kind: input, shape index: {}]
  %s3 = inlined_call_operand.vmem [shape: f32[8,1], index: 3, kind: input, shape index: {}]
  %s4 = inlined_call_operand.vmem [shape: f32[8,1], index: 4, kind: input, shape index: {}]
  %s5 = inlined_call_operand.vmem [shape: f32[4,8,768], index: 5, kind: output, shape index: {}]
  %s6 = sld [smem:[#allocation0]]
  $region30: #{trans_conv_block.3} parent=0
    _
  %s8 = ssub.s32 1, %s6
  %s9 = scalar_select 0, %s8, %s6
  // Predicated region
  $region2: #{trans_conv_block.3} parent=0 // pred_check
    _
  $region3: #{trans_conv_block.3} parent=0 // pred_check_branch
    %11 = sbr.rel (0) target = $region5
  $region4: #{trans_conv_block.3} parent=0 // pred_region
    _
  $region5: #{trans_conv_block.3} parent=0 // pred_fallthru
    _
  // Predicated region
  $region6: #{trans_conv_block.3} parent=0 // pred_check
    _
  $region7: #{trans_conv_block.3} parent=0 // pred_check_branch
    %13 = sbr.rel (0) target = $region9
  $region8: #{trans_conv_block.3} parent=0 // pred_region
    %s14 = sadd.s32 0, 1
    %s15 = smul.u32 6, %s14
    %p16 = scmp.lt.s32.totalorder %s15, 11
    %s17 = scalar_select %p16, %s15, 11
    %s18 = smul.addr %s17, 2
    %s19 = scalar_lea.vmem %s1, %s18
    %s20 = sadd.s32 0, 1
    %s21 = smul.u32 6, %s20
  $region9: #{trans_conv_block.3} parent=0 // pred_fallthru
    _
  // Predicated region
  $region10: #{trans_conv_block.3} parent=0 // pred_check
    _
  $region11: #{trans_conv_block.3} parent=0 // pred_check_branch
    %23 = sbr.rel (0) target = $region13
  $region12: #{trans_conv_block.3} parent=0 // pred_region
    _
  $region13: #{trans_conv_block.3} parent=0 // pred_fallthru
    _
  // Predicated region
  $region14: #{trans_conv_block.3} parent=0 // pred_check
    _
  $region15: #{trans_conv_block.3} parent=0 // pred_check_branch
    %25 = sbr.rel (0) target = $region17
  $region16: #{trans_conv_block.3} parent=0 // pred_region
    _
  $region17: #{trans_conv_block.3} parent=0 // pred_fallthru
    _
  // Predicated region
  $region18: #{trans_conv_block.3} parent=0 // pred_check
    _
  $region19: #{trans_conv_block.3} parent=0 // pred_check_branch
    %27 = sbr.rel (0) target = $region21
  $region20: #{trans_conv_block.3} parent=0 // pred_region
    _
  $region21: #{trans_conv_block.3} parent=0 // pred_fallthru
    _
  %s28 = sadd.s32 0, 1
  %s29 = smul.u32 6, %s28
  %p30 = scmp.lt.s32.totalorder %s29, 11
  %s31 = scalar_select %p30, %s29, 11
  %s32 = smul.addr %s31, 2
  %s33 = scalar_lea.vmem %s1, %s32
  %s34 = sadd.s32 0, 1
  %s35 = smul.u32 6, %s34
  %p36 = scmp.lt.s32.totalorder %s35, 11
  %s37 = scalar_select %p36, %s35, 11
  %s38 = smul.addr %s37, 2
  %s39 = scalar_lea.vmem %s1, %s38
  %s40 = sadd.s32 0, 1
  %s41 = smul.u32 6, %s40
  %v43 = vld [vmem:[%s0] sm:$0xff]
  %v44 = vld [vmem:[%s0 + $0x8] sm:$0xf]
  %45 = vst [vmem:[#allocation2] sm:$0xff] %v43
  %46 = vst [vmem:[#allocation2 + $0x8] sm:$0xf] %v44
  %v47 = vld [vmem:[%s39] sm:$0x3]
  %48 = vst [vmem:[#allocation2 + $0xc] sm:$0x3] %v47
  %v49 = vld [vmem:[#allocation2] sm:$0xff]
  %v50 = vld [vmem:[#allocation2 + $0x8] sm:$0x3f]
  %v51 = vld [vmem:[%s2] sm:$0xf]
  %v52 = vld [vmem:[%s2 + $0x4] sm:$0xf]
  %v53 = vld [vmem:[%s2 + $0x8] sm:$0xf]
  %v54 = vld [vmem:[%s2 + $0xc] sm:$0xf]
  %v55 = vld [vmem:[%s2 + $0x10] sm:$0xf]
  %v56 = vld [vmem:[%s2 + $0x14] sm:$0xf]
  %v57 = vld [vmem:[%s2 + $0x18] sm:$0xf]
  %v58 = vld [vmem:[%s2 + $0x1c] sm:$0xf]
  %v59 = vld [vmem:[%s2 + $0x20] sm:$0xf]
  %v60 = vld [vmem:[%s2 + $0x24] sm:$0xf]
  %v61 = vld [vmem:[%s2 + $0x28] sm:$0xf]
  %v62 = vld [vmem:[%s2 + $0x2c] sm:$0xf]
  %v63 = vld [vmem:[%s2 + $0x30] sm:$0xf]
  %v64 = vld [vmem:[%s2 + $0x34] sm:$0xf]
  %v65 = vld [vmem:[%s2 + $0x38] sm:$0xf]
  %v66 = vld [vmem:[%s2 + $0x3c] sm:$0xf]
  %v67 = vld [vmem:[%s3] sm:$0xff]
  %v68 = vld [vmem:[%s4] sm:$0xff]
  %v71 = vcombine.high %v49, %v49
  %v73 = vunpack.c.l.s4 1983009808
  %v74 = vunpack.c.0.s8 %v73
  %v75 = vlaneseq
  %v76 = vshrl.u32 %v75, 7
  %v77 = vsub.s32 %v74, %v76
  %v78 = vrot.slane %v49, %v77
  %v80 = vunpack.c.l.s4 1983009808
  %v81 = vunpack.c.0.s8 %v80
  %v82 = vlaneseq
  %v83 = vshrl.u32 %v82, 7
  %v84 = vsub.s32 %v81, %v83
  %v85 = vrot.slane %v71, %v84
  %v86 = vcombine.high %v78, %v78
  %v87 = vcombine.high %v85, %v85
  %v88 = vcombine.high %v50, %v50
  %v90 = vunpack.c.l.s4 1983009808
  %v91 = vunpack.c.0.s8 %v90
  %v92 = vlaneseq
  %v93 = vshrl.u32 %v92, 7
  %v94 = vsub.s32 %v91, %v93
  %v95 = vrot.slane %v50, %v94
  %v97 = vunpack.c.l.s4 1983009808
  %v98 = vunpack.c.0.s8 %v97
  %v99 = vlaneseq
  %v100 = vshrl.u32 %v99, 7
  %v101 = vsub.s32 %v98, %v100
  %v102 = vrot.slane %v88, %v101
  %v103 = vcombine.high %v95, %v95
  %104 = vrot.lane.b32.xlu0 %v78, 110
  %v105 = vpop.permute.xlu0 %104
  %106 = vrot.lane.b32.xlu0 %v86, 110
  %v107 = vpop.permute.xlu0 %106
  %108 = vrot.lane.b32.xlu0 %v85, 110
  %v109 = vpop.permute.xlu0 %108
  %110 = vrot.lane.b32.xlu0 %v87, 110
  %v111 = vpop.permute.xlu0 %110
  %112 = vrot.lane.b32.xlu0 %v95, 110
  %v113 = vpop.permute.xlu0 %112
  %114 = vrot.lane.b32.xlu0 %v103, 110
  %v115 = vpop.permute.xlu0 %114
  %116 = vrot.lane.b32.xlu0 %v102, 110
  %v117 = vpop.permute.xlu0 %116
  %vm118 = vcmask 900096
  %v119 = vsel %vm118, %v105, %v107
  %v120 = vsel %vm118, %v107, %v109
  %v121 = vsel %vm118, %v109, %v111
  %v122 = vsel %vm118, %v111, %v113
  %v123 = vsel %vm118, %v113, %v115
  %v124 = vsel %vm118, %v115, %v117
  %vm125 = vcmask 31744
  %v127 = vsel %vm125, %v52, 0
  %vm129 = vcmask 1041408
  %v131 = vsel %vm129, %v119, 0
  %v134 = vsel %vm129, %v120, 0
  %v137 = vsel %vm129, %v121, 0
  %v140 = vsel %vm129, %v122, 0
  %v143 = vsel %vm129, %v123, 0
  %v146 = vsel %vm129, %v124, 0
  %148 = vmatprep.subr.bf16.mxu0 0
  %149 = vmatpush1.bf16.msra.mxu0 0
  %150 = vmatprep.subr.bf16.mxu0 0
  %151 = vmatpush1.bf16.msra.mxu0 0
  %152 = vmatprep.subr.bf16.mxu0 0
  %153 = vmatpush1.bf16.msra.mxu0 0
  %154 = vmatprep.subr.bf16.mxu0 0
  %155 = vmatpush1.bf16.msra.mxu0 0
  %156 = vmatprep.subr.bf16.mxu0 0
  %157 = vmatpush1.bf16.msra.mxu0 0
  %158 = vmatprep.subr.bf16.mxu0 0
  %159 = vmatpush1.bf16.msra.mxu0 0
  %160 = vmatprep.subr.bf16.mxu0 0
  %161 = vmatpush1.bf16.msra.mxu0 0
  %162 = vmatprep.subr.bf16.mxu0 %v134
  %163 = vmatpush1.bf16.msra.mxu0 %v131
  %164 = vmatprep.subr.bf16.mxu0 0
  %165 = vmatpush2.bf16.msra.mxu0 0
  %166 = vmatprep.subr.bf16.mxu0 0
  %167 = vmatpush2.bf16.msra.mxu0 0
  %168 = vmatprep.subr.bf16.mxu0 0
  %169 = vmatpush2.bf16.msra.mxu0 0
  %170 = vmatprep.subr.bf16.mxu0 0
  %171 = vmatpush2.bf16.msra.mxu0 0
  %172 = vmatprep.subr.bf16.mxu0 0
  %173 = vmatpush2.bf16.msra.mxu0 0
  %174 = vmatprep.subr.bf16.mxu0 0
  %175 = vmatpush2.bf16.msra.mxu0 0
  %176 = vmatprep.subr.bf16.mxu0 0
  %177 = vmatpush2.bf16.msra.mxu0 0
  %178 = vmatprep.subr.bf16.mxu0 0
  %179 = vmatpush2.bf16.msra.mxu0 0
  %180 = vmatprep.mubr.bf16.mxu0 0
  %181 = vmatmul.mubr.bf16.gmra.mxu0 %v127
  %v182 = vpop.f32.mrf.mxu0
  %v183 = vadd.f32 0.0, %v182
  %v184 = vpop.f32.mrf.mxu0
  %v185 = vadd.f32 0.0, %v184
  %v186 = vpop.f32.mrf.mxu0
  %v187 = vpop.f32.mrf.mxu0
  %188 = vdwg.mxu0
  %189 = vmatprep.subr.bf16.mxu0 0
  %190 = vmatpush1.bf16.msra.mxu0 0
  %191 = vmatprep.subr.bf16.mxu0 0
  %192 = vmatpush1.bf16.msra.mxu0 0
  %193 = vmatprep.subr.bf16.mxu0 0
  %194 = vmatpush1.bf16.msra.mxu0 0
  %195 = vmatprep.subr.bf16.mxu0 0
  %196 = vmatpush1.bf16.msra.mxu0 0
  %197 = vmatprep.subr.bf16.mxu0 0
  %198 = vmatpush1.bf16.msra.mxu0 0
  %199 = vmatprep.subr.bf16.mxu0 0
  %200 = vmatpush1.bf16.msra.mxu0 0
  %201 = vmatprep.subr.bf16.mxu0 0
  %202 = vmatpush1.bf16.msra.mxu0 0
  %203 = vmatprep.subr.bf16.mxu0 %v140
  %204 = vmatpush1.bf16.msra.mxu0 %v137
  %205 = vmatprep.subr.bf16.mxu0 0
  %206 = vmatpush2.bf16.msra.mxu0 0
  %207 = vmatprep.subr.bf16.mxu0 0
  %208 = vmatpush2.bf16.msra.mxu0 0
  %209 = vmatprep.subr.bf16.mxu0 0
  %210 = vmatpush2.bf16.msra.mxu0 0
  %211 = vmatprep.subr.bf16.mxu0 0
  %212 = vmatpush2.bf16.msra.mxu0 0
  %213 = vmatprep.subr.bf16.mxu0 0
  %214 = vmatpush2.bf16.msra.mxu0 0
  %215 = vmatprep.subr.bf16.mxu0 0
  %216 = vmatpush2.bf16.msra.mxu0 0
  %217 = vmatprep.subr.bf16.mxu0 0
  %218 = vmatpush2.bf16.msra.mxu0 0
  %219 = vmatprep.subr.bf16.mxu0 0
  %220 = vmatpush2.bf16.msra.mxu0 0
  %221 = vmatprep.mubr.bf16.mxu0 0
  %222 = vmatmul.mubr.bf16.gmra.mxu0 %v127
  %v223 = vpop.f32.mrf.mxu0
  %v224 = vadd.f32 0.0, %v223
  %v225 = vpop.f32.mrf.mxu0
  %v226 = vadd.f32 0.0, %v225
  %v227 = vpop.f32.mrf.mxu0
  %v228 = vpop.f32.mrf.mxu0
  %229 = vdwg.mxu0
  %230 = vmatprep.subr.bf16.mxu0 0
  %231 = vmatpush1.bf16.msra.mxu0 0
  %232 = vmatprep.subr.bf16.mxu0 0
  %233 = vmatpush1.bf16.msra.mxu0 0
  %234 = vmatprep.subr.bf16.mxu0 0
  %235 = vmatpush1.bf16.msra.mxu0 0
  %236 = vmatprep.subr.bf16.mxu0 0
  %237 = vmatpush1.bf16.msra.mxu0 0
  %238 = vmatprep.subr.bf16.mxu0 0
  %239 = vmatpush1.bf16.msra.mxu0 0
  %240 = vmatprep.subr.bf16.mxu0 0
  %241 = vmatpush1.bf16.msra.mxu0 0
  %242 = vmatprep.subr.bf16.mxu0 0
  %243 = vmatpush1.bf16.msra.mxu0 0
  %244 = vmatprep.subr.bf16.mxu0 %v146
  %245 = vmatpush1.bf16.msra.mxu0 %v143
  %246 = vmatprep.subr.bf16.mxu0 0
  %247 = vmatpush2.bf16.msra.mxu0 0
  %248 = vmatprep.subr.bf16.mxu0 0
  %249 = vmatpush2.bf16.msra.mxu0 0
  %250 = vmatprep.subr.bf16.mxu0 0
  %251 = vmatpush2.bf16.msra.mxu0 0
  %252 = vmatprep.subr.bf16.mxu0 0
  %253 = vmatpush2.bf16.msra.mxu0 0
  %254 = vmatprep.subr.bf16.mxu0 0
  %255 = vmatpush2.bf16.msra.mxu0 0
  %256 = vmatprep.subr.bf16.mxu0 0
  %257 = vmatpush2.bf16.msra.mxu0 0
  %258 = vmatprep.subr.bf16.mxu0 0
  %259 = vmatpush2.bf16.msra.mxu0 0
  %260 = vmatprep.subr.bf16.mxu0 0
  %261 = vmatpush2.bf16.msra.mxu0 0
  %262 = vmatprep.mubr.bf16.mxu0 0
  %263 = vmatmul.mubr.bf16.gmra.mxu0 %v127
  %v264 = vpop.f32.mrf.mxu0
  %v265 = vadd.f32 0.0, %v264
  %v266 = vpop.f32.mrf.mxu0
  %v267 = vadd.f32 0.0, %v266
  %v268 = vpop.f32.mrf.mxu0
  %v269 = vpop.f32.mrf.mxu0
  %270 = vdwg.mxu0
  %271 = vrot.lane.b32.xlu0 %v78, 109
  %v272 = vpop.permute.xlu0 %271
  %273 = vrot.lane.b32.xlu0 %v86, 109
  %v274 = vpop.permute.xlu0 %273
  %275 = vrot.lane.b32.xlu0 %v85, 109
  %v276 = vpop.permute.xlu0 %275
  %277 = vrot.lane.b32.xlu0 %v87, 109
  %v278 = vpop.permute.xlu0 %277
  %279 = vrot.lane.b32.xlu0 %v95, 109
  %v280 = vpop.permute.xlu0 %279
  %281 = vrot.lane.b32.xlu0 %v103, 109
  %v282 = vpop.permute.xlu0 %281
  %283 = vrot.lane.b32.xlu0 %v102, 109
  %v284 = vpop.permute.xlu0 %283
  %vm285 = vcmask 891904
  %v286 = vsel %vm285, %v272, %v274
  %v287 = vsel %vm285, %v274, %v276
  %v288 = vsel %vm285, %v276, %v278
  %v289 = vsel %vm285, %v278, %v280
  %v290 = vsel %vm285, %v280, %v282
  %v291 = vsel %vm285, %v282, %v284
  %v293 = vsel %vm125, %v51, 0
  %v296 = vsel %vm129, %v286, 0
  %v299 = vsel %vm129, %v287, 0
  %v302 = vsel %vm129, %v288, 0
  %v305 = vsel %vm129, %v289, 0
  %v308 = vsel %vm129, %v290, 0
  %v311 = vsel %vm129, %v291, 0
  %313 = vmatprep.subr.bf16.mxu0 0
  %314 = vmatpush1.bf16.msra.mxu0 0
  %315 = vmatprep.subr.bf16.mxu0 0
  %316 = vmatpush1.bf16.msra.mxu0 0
  %317 = vmatprep.subr.bf16.mxu0 0
  %318 = vmatpush1.bf16.msra.mxu0 0
  %319 = vmatprep.subr.bf16.mxu0 0
  %320 = vmatpush1.bf16.msra.mxu0 0
  %321 = vmatprep.subr.bf16.mxu0 0
  %322 = vmatpush1.bf16.msra.mxu0 0
  %323 = vmatprep.subr.bf16.mxu0 0
  %324 = vmatpush1.bf16.msra.mxu0 0
  %325 = vmatprep.subr.bf16.mxu0 0
  %326 = vmatpush1.bf16.msra.mxu0 0
  %327 = vmatprep.subr.bf16.mxu0 %v299
  %328 = vmatpush1.bf16.msra.mxu0 %v296
  %329 = vmatprep.subr.bf16.mxu0 0
  %330 = vmatpush2.bf16.msra.mxu0 0
  %331 = vmatprep.subr.bf16.mxu0 0
  %332 = vmatpush2.bf16.msra.mxu0 0
  %333 = vmatprep.subr.bf16.mxu0 0
  %334 = vmatpush2.bf16.msra.mxu0 0
  %335 = vmatprep.subr.bf16.mxu0 0
  %336 = vmatpush2.bf16.msra.mxu0 0
  %337 = vmatprep.subr.bf16.mxu0 0
  %338 = vmatpush2.bf16.msra.mxu0 0
  %339 = vmatprep.subr.bf16.mxu0 0
  %340 = vmatpush2.bf16.msra.mxu0 0
  %341 = vmatprep.subr.bf16.mxu0 0
  %342 = vmatpush2.bf16.msra.mxu0 0
  %343 = vmatprep.subr.bf16.mxu0 0
  %344 = vmatpush2.bf16.msra.mxu0 0
  %345 = vmatprep.mubr.bf16.mxu0 0
  %346 = vmatmul.mubr.bf16.gmra.mxu0 %v293
  %v347 = vpop.f32.mrf.mxu0
  %v348 = vadd.f32 %v183, %v347
  %v349 = vpop.f32.mrf.mxu0
  %v350 = vadd.f32 %v185, %v349
  %v351 = vpop.f32.mrf.mxu0
  %v352 = vpop.f32.mrf.mxu0
  %353 = vdwg.mxu0
  %354 = vmatprep.subr.bf16.mxu0 0
  %355 = vmatpush1.bf16.msra.mxu0 0
  %356 = vmatprep.subr.bf16.mxu0 0
  %357 = vmatpush1.bf16.msra.mxu0 0
  %358 = vmatprep.subr.bf16.mxu0 0
  %359 = vmatpush1.bf16.msra.mxu0 0
  %360 = vmatprep.subr.bf16.mxu0 0
  %361 = vmatpush1.bf16.msra.mxu0 0
  %362 = vmatprep.subr.bf16.mxu0 0
  %363 = vmatpush1.bf16.msra.mxu0 0
  %364 = vmatprep.subr.bf16.mxu0 0
  %365 = vmatpush1.bf16.msra.mxu0 0
  %366 = vmatprep.subr.bf16.mxu0 0
  %367 = vmatpush1.bf16.msra.mxu0 0
  %368 = vmatprep.subr.bf16.mxu0 %v305
  %369 = vmatpush1.bf16.msra.mxu0 %v302
  %370 = vmatprep.subr.bf16.mxu0 0
  %371 = vmatpush2.bf16.msra.mxu0 0
  %372 = vmatprep.subr.bf16.mxu0 0
  %373 = vmatpush2.bf16.msra.mxu0 0
  %374 = vmatprep.subr.bf16.mxu0 0
  %375 = vmatpush2.bf16.msra.mxu0 0
  %376 = vmatprep.subr.bf16.mxu0 0
  %377 = vmatpush2.bf16.msra.mxu0 0
  %378 = vmatprep.subr.bf16.mxu0 0
  %379 = vmatpush2.bf16.msra.mxu0 0
  %380 = vmatprep.subr.bf16.mxu0 0
  %381 = vmatpush2.bf16.msra.mxu0 0
  %382 = vmatprep.subr.bf16.mxu0 0
  %383 = vmatpush2.bf16.msra.mxu0 0
  %384 = vmatprep.subr.bf16.mxu0 0
  %385 = vmatpush2.bf16.msra.mxu0 0
  %386 = vmatprep.mubr.bf16.mxu0 0
  %387 = vmatmul.mubr.bf16.gmra.mxu0 %v293
  %v388 = vpop.f32.mrf.mxu0
  %v389 = vadd.f32 %v224, %v388
  %v390 = vpop.f32.mrf.mxu0
  %v391 = vadd.f32 %v226, %v390
  %v392 = vpop.f32.mrf.mxu0
  %v393 = vpop.f32.mrf.mxu0
  %394 = vdwg.mxu0
  %395 = vmatprep.subr.bf16.mxu0 0
  %396 = vmatpush1.bf16.msra.mxu0 0
  %397 = vmatprep.subr.bf16.mxu0 0
  %398 = vmatpush1.bf16.msra.mxu0 0
  %399 = vmatprep.subr.bf16.mxu0 0
  %400 = vmatpush1.bf16.msra.mxu0 0
  %401 = vmatprep.subr.bf16.mxu0 0
  %402 = vmatpush1.bf16.msra.mxu0 0
  %403 = vmatprep.subr.bf16.mxu0 0
  %404 = vmatpush1.bf16.msra.mxu0 0
  %405 = vmatprep.subr.bf16.mxu0 0
  %406 = vmatpush1.bf16.msra.mxu0 0
  %407 = vmatprep.subr.bf16.mxu0 0
  %408 = vmatpush1.bf16.msra.mxu0 0
  %409 = vmatprep.subr.bf16.mxu0 %v311
  %410 = vmatpush1.bf16.msra.mxu0 %v308
  %411 = vmatprep.subr.bf16.mxu0 0
  %412 = vmatpush2.bf16.msra.mxu0 0
  %413 = vmatprep.subr.bf16.mxu0 0
  %414 = vmatpush2.bf16.msra.mxu0 0
  %415 = vmatprep.subr.bf16.mxu0 0
  %416 = vmatpush2.bf16.msra.mxu0 0
  %417 = vmatprep.subr.bf16.mxu0 0
  %418 = vmatpush2.bf16.msra.mxu0 0
  %419 = vmatprep.subr.bf16.mxu0 0
  %420 = vmatpush2.bf16.msra.mxu0 0
  %421 = vmatprep.subr.bf16.mxu0 0
  %422 = vmatpush2.bf16.msra.mxu0 0
  %423 = vmatprep.subr.bf16.mxu0 0
  %424 = vmatpush2.bf16.msra.mxu0 0
  %425 = vmatprep.subr.bf16.mxu0 0
  %426 = vmatpush2.bf16.msra.mxu0 0
  %427 = vmatprep.mubr.bf16.mxu0 0
  %428 = vmatmul.mubr.bf16.gmra.mxu0 %v293
  %v429 = vpop.f32.mrf.mxu0
  %v430 = vadd.f32 %v265, %v429
  %v431 = vpop.f32.mrf.mxu0
  %v432 = vadd.f32 %v267, %v431
  %v433 = vpop.f32.mrf.mxu0
  %v434 = vpop.f32.mrf.mxu0
  %435 = vdwg.mxu0
  %436 = vrot.lane.b32.xlu0 %v78, 127
  %v437 = vpop.permute.xlu0 %436
  %438 = vrot.lane.b32.xlu0 %v86, 127
  %v439 = vpop.permute.xlu0 %438
  %440 = vrot.lane.b32.xlu0 %v85, 127
  %v441 = vpop.permute.xlu0 %440
  %442 = vrot.lane.b32.xlu0 %v87, 127
  %v443 = vpop.permute.xlu0 %442
  %444 = vrot.lane.b32.xlu0 %v95, 127
  %v445 = vpop.permute.xlu0 %444
  %446 = vrot.lane.b32.xlu0 %v103, 127
  %v447 = vpop.permute.xlu0 %446
  %448 = vrot.lane.b32.xlu0 %v102, 127
  %v449 = vpop.permute.xlu0 %448
  %vm450 = vcmask 1039360
  %v451 = vsel %vm450, %v437, %v439
  %v452 = vsel %vm450, %v439, %v441
  %v453 = vsel %vm450, %v441, %v443
  %v454 = vsel %vm450, %v443, %v445
  %v455 = vsel %vm450, %v445, %v447
  %v456 = vsel %vm450, %v447, %v449
  %v458 = vsel %vm125, %v53, 0
  %v461 = vsel %vm129, %v451, 0
  %v464 = vsel %vm129, %v452, 0
  %v467 = vsel %vm129, %v453, 0
  %v470 = vsel %vm129, %v454, 0
  %v473 = vsel %vm129, %v455, 0
  %v476 = vsel %vm129, %v456, 0
  %478 = vmatprep.subr.bf16.mxu0 0
  %479 = vmatpush1.bf16.msra.mxu0 0
  %480 = vmatprep.subr.bf16.mxu0 0
  %481 = vmatpush1.bf16.msra.mxu0 0
  %482 = vmatprep.subr.bf16.mxu0 0
  %483 = vmatpush1.bf16.msra.mxu0 0
  %484 = vmatprep.subr.bf16.mxu0 0
  %485 = vmatpush1.bf16.msra.mxu0 0
  %486 = vmatprep.subr.bf16.mxu0 0
  %487 = vmatpush1.bf16.msra.mxu0 0
  %488 = vmatprep.subr.bf16.mxu0 0
  %489 = vmatpush1.bf16.msra.mxu0 0
  %490 = vmatprep.subr.bf16.mxu0 0
  %491 = vmatpush1.bf16.msra.mxu0 0
  %492 = vmatprep.subr.bf16.mxu0 %v464
  %493 = vmatpush1.bf16.msra.mxu0 %v461
  %494 = vmatprep.subr.bf16.mxu0 0
  %495 = vmatpush2.bf16.msra.mxu0 0
  %496 = vmatprep.subr.bf16.mxu0 0
  %497 = vmatpush2.bf16.msra.mxu0 0
  %498 = vmatprep.subr.bf16.mxu0 0
  %499 = vmatpush2.bf16.msra.mxu0 0
  %500 = vmatprep.subr.bf16.mxu0 0
  %501 = vmatpush2.bf16.msra.mxu0 0
  %502 = vmatprep.subr.bf16.mxu0 0
  %503 = vmatpush2.bf16.msra.mxu0 0
  %504 = vmatprep.subr.bf16.mxu0 0
  %505 = vmatpush2.bf16.msra.mxu0 0
  %506 = vmatprep.subr.bf16.mxu0 0
  %507 = vmatpush2.bf16.msra.mxu0 0
  %508 = vmatprep.subr.bf16.mxu0 0
  %509 = vmatpush2.bf16.msra.mxu0 0
  %510 = vmatprep.mubr.bf16.mxu0 0
  %511 = vmatmul.mubr.bf16.gmra.mxu0 %v458
  %v512 = vpop.f32.mrf.mxu0
  %v513 = vadd.f32 0.0, %v512
  %v514 = vpop.f32.mrf.mxu0
  %v515 = vadd.f32 0.0, %v514
  %v516 = vpop.f32.mrf.mxu0
  %v517 = vpop.f32.mrf.mxu0
  %518 = vdwg.mxu0
  %519 = vmatprep.subr.bf16.mxu0 0
  %520 = vmatpush1.bf16.msra.mxu0 0
  %521 = vmatprep.subr.bf16.mxu0 0
  %522 = vmatpush1.bf16.msra.mxu0 0
  %523 = vmatprep.subr.bf16.mxu0 0
  %524 = vmatpush1.bf16.msra.mxu0 0
  %525 = vmatprep.subr.bf16.mxu0 0
  %526 = vmatpush1.bf16.msra.mxu0 0
  %527 = vmatprep.subr.bf16.mxu0 0
  %528 = vmatpush1.bf16.msra.mxu0 0
  %529 = vmatprep.subr.bf16.mxu0 0
  %530 = vmatpush1.bf16.msra.mxu0 0
  %531 = vmatprep.subr.bf16.mxu0 0
  %532 = vmatpush1.bf16.msra.mxu0 0
  %533 = vmatprep.subr.bf16.mxu0 %v470
  %534 = vmatpush1.bf16.msra.mxu0 %v467
  %535 = vmatprep.subr.bf16.mxu0 0
  %536 = vmatpush2.bf16.msra.mxu0 0
  %537 = vmatprep.subr.bf16.mxu0 0
  %538 = vmatpush2.bf16.msra.mxu0 0
  %539 = vmatprep.subr.bf16.mxu0 0
  %540 = vmatpush2.bf16.msra.mxu0 0
  %541 = vmatprep.subr.bf16.mxu0 0
  %542 = vmatpush2.bf16.msra.mxu0 0
  %543 = vmatprep.subr.bf16.mxu0 0
  %544 = vmatpush2.bf16.msra.mxu0 0
  %545 = vmatprep.subr.bf16.mxu0 0
  %546 = vmatpush2.bf16.msra.mxu0 0
  %547 = vmatprep.subr.bf16.mxu0 0
  %548 = vmatpush2.bf16.msra.mxu0 0
  %549 = vmatprep.subr.bf16.mxu0 0
  %550 = vmatpush2.bf16.msra.mxu0 0
  %551 = vmatprep.mubr.bf16.mxu0 0
  %552 = vmatmul.mubr.bf16.gmra.mxu0 %v458
  %v553 = vpop.f32.mrf.mxu0
  %v554 = vadd.f32 0.0, %v553
  %v555 = vpop.f32.mrf.mxu0
  %v556 = vadd.f32 0.0, %v555
  %v557 = vpop.f32.mrf.mxu0
  %v558 = vpop.f32.mrf.mxu0
  %559 = vdwg.mxu0
  %560 = vmatprep.subr.bf16.mxu0 0
  %561 = vmatpush1.bf16.msra.mxu0 0
  %562 = vmatprep.subr.bf16.mxu0 0
  %563 = vmatpush1.bf16.msra.mxu0 0
  %564 = vmatprep.subr.bf16.mxu0 0
  %565 = vmatpush1.bf16.msra.mxu0 0
  %566 = vmatprep.subr.bf16.mxu0 0
  %567 = vmatpush1.bf16.msra.mxu0 0
  %568 = vmatprep.subr.bf16.mxu0 0
  %569 = vmatpush1.bf16.msra.mxu0 0
  %570 = vmatprep.subr.bf16.mxu0 0
  %571 = vmatpush1.bf16.msra.mxu0 0
  %572 = vmatprep.subr.bf16.mxu0 0
  %573 = vmatpush1.bf16.msra.mxu0 0
  %574 = vmatprep.subr.bf16.mxu0 %v476
  %575 = vmatpush1.bf16.msra.mxu0 %v473
  %576 = vmatprep.subr.bf16.mxu0 0
  %577 = vmatpush2.bf16.msra.mxu0 0
  %578 = vmatprep.subr.bf16.mxu0 0
  %579 = vmatpush2.bf16.msra.mxu0 0
  %580 = vmatprep.subr.bf16.mxu0 0
  %581 = vmatpush2.bf16.msra.mxu0 0
  %582 = vmatprep.subr.bf16.mxu0 0
  %583 = vmatpush2.bf16.msra.mxu0 0
  %584 = vmatprep.subr.bf16.mxu0 0
  %585 = vmatpush2.bf16.msra.mxu0 0
  %586 = vmatprep.subr.bf16.mxu0 0
  %587 = vmatpush2.bf16.msra.mxu0 0
  %588 = vmatprep.subr.bf16.mxu0 0
  %589 = vmatpush2.bf16.msra.mxu0 0
  %590 = vmatprep.subr.bf16.mxu0 0
  %591 = vmatpush2.bf16.msra.mxu0 0
  %592 = vmatprep.mubr.bf16.mxu0 0
  %593 = vmatmul.mubr.bf16.gmra.mxu0 %v458
  %v594 = vpop.f32.mrf.mxu0
  %v595 = vadd.f32 0.0, %v594
  %v596 = vpop.f32.mrf.mxu0
  %v597 = vadd.f32 0.0, %v596
  %v598 = vpop.f32.mrf.mxu0
  %v599 = vpop.f32.mrf.mxu0
  %600 = vdwg.mxu0
  %v601 = vadd.f32 %v348, %v513
  %v602 = vadd.f32 %v350, %v515
  %v603 = vadd.f32 %v389, %v554
  %v604 = vadd.f32 %v391, %v556
  %v605 = vadd.f32 %v430, %v595
  %v606 = vadd.f32 %v432, %v597
  %v608 = vsel %vm125, %v54, 0
  %v611 = vsel %vm129, %v78, 0
  %v614 = vsel %vm129, %v86, 0
  %v617 = vsel %vm129, %v85, 0
  %v620 = vsel %vm129, %v87, 0
  %v623 = vsel %vm129, %v95, 0
  %v626 = vsel %vm129, %v103, 0
  %628 = vmatprep.subr.bf16.mxu0 0
  %629 = vmatpush1.bf16.msra.mxu0 0
  %630 = vmatprep.subr.bf16.mxu0 0
  %631 = vmatpush1.bf16.msra.mxu0 0
  %632 = vmatprep.subr.bf16.mxu0 0
  %633 = vmatpush1.bf16.msra.mxu0 0
  %634 = vmatprep.subr.bf16.mxu0 0
  %635 = vmatpush1.bf16.msra.mxu0 0
  %636 = vmatprep.subr.bf16.mxu0 0
  %637 = vmatpush1.bf16.msra.mxu0 0
  %638 = vmatprep.subr.bf16.mxu0 0
  %639 = vmatpush1.bf16.msra.mxu0 0
  %640 = vmatprep.subr.bf16.mxu0 0
  %641 = vmatpush1.bf16.msra.mxu0 0
  %642 = vmatprep.subr.bf16.mxu0 %v614
  %643 = vmatpush1.bf16.msra.mxu0 %v611
  %644 = vmatprep.subr.bf16.mxu0 0
  %645 = vmatpush2.bf16.msra.mxu0 0
  %646 = vmatprep.subr.bf16.mxu0 0
  %647 = vmatpush2.bf16.msra.mxu0 0
  %648 = vmatprep.subr.bf16.mxu0 0
  %649 = vmatpush2.bf16.msra.mxu0 0
  %650 = vmatprep.subr.bf16.mxu0 0
  %651 = vmatpush2.bf16.msra.mxu0 0
  %652 = vmatprep.subr.bf16.mxu0 0
  %653 = vmatpush2.bf16.msra.mxu0 0
  %654 = vmatprep.subr.bf16.mxu0 0
  %655 = vmatpush2.bf16.msra.mxu0 0
  %656 = vmatprep.subr.bf16.mxu0 0
  %657 = vmatpush2.bf16.msra.mxu0 0
  %658 = vmatprep.subr.bf16.mxu0 0
  %659 = vmatpush2.bf16.msra.mxu0 0
  %660 = vmatprep.mubr.bf16.mxu0 0
  %661 = vmatmul.mubr.bf16.gmra.mxu0 %v608
  %v662 = vpop.f32.mrf.mxu0
  %v663 = vadd.f32 0.0, %v662
  %v664 = vpop.f32.mrf.mxu0
  %v665 = vadd.f32 0.0, %v664
  %v666 = vpop.f32.mrf.mxu0
  %v667 = vpop.f32.mrf.mxu0
  %668 = vdwg.mxu0
  %669 = vmatprep.subr.bf16.mxu0 0
  %670 = vmatpush1.bf16.msra.mxu0 0
  %671 = vmatprep.subr.bf16.mxu0 0
  %672 = vmatpush1.bf16.msra.mxu0 0
  %673 = vmatprep.subr.bf16.mxu0 0
  %674 = vmatpush1.bf16.msra.mxu0 0
  %675 = vmatprep.subr.bf16.mxu0 0
  %676 = vmatpush1.bf16.msra.mxu0 0
  %677 = vmatprep.subr.bf16.mxu0 0
  %678 = vmatpush1.bf16.msra.mxu0 0
  %679 = vmatprep.subr.bf16.mxu0 0
  %680 = vmatpush1.bf16.msra.mxu0 0
  %681 = vmatprep.subr.bf16.mxu0 0
  %682 = vmatpush1.bf16.msra.mxu0 0
  %683 = vmatprep.subr.bf16.mxu0 %v620
  %684 = vmatpush1.bf16.msra.mxu0 %v617
  %685 = vmatprep.subr.bf16.mxu0 0
  %686 = vmatpush2.bf16.msra.mxu0 0
  %687 = vmatprep.subr.bf16.mxu0 0
  %688 = vmatpush2.bf16.msra.mxu0 0
  %689 = vmatprep.subr.bf16.mxu0 0
  %690 = vmatpush2.bf16.msra.mxu0 0
  %691 = vmatprep.subr.bf16.mxu0 0
  %692 = vmatpush2.bf16.msra.mxu0 0
  %693 = vmatprep.subr.bf16.mxu0 0
  %694 = vmatpush2.bf16.msra.mxu0 0
  %695 = vmatprep.subr.bf16.mxu0 0
  %696 = vmatpush2.bf16.msra.mxu0 0
  %697 = vmatprep.subr.bf16.mxu0 0
  %698 = vmatpush2.bf16.msra.mxu0 0
  %699 = vmatprep.subr.bf16.mxu0 0
  %700 = vmatpush2.bf16.msra.mxu0 0
  %701 = vmatprep.mubr.bf16.mxu0 0
  %702 = vmatmul.mubr.bf16.gmra.mxu0 %v608
  %v703 = vpop.f32.mrf.mxu0
  %v704 = vadd.f32 0.0, %v703
  %v705 = vpop.f32.mrf.mxu0
  %v706 = vadd.f32 0.0, %v705
  %v707 = vpop.f32.mrf.mxu0
  %v708 = vpop.f32.mrf.mxu0
  %709 = vdwg.mxu0
  %710 = vmatprep.subr.bf16.mxu0 0
  %711 = vmatpush1.bf16.msra.mxu0 0
  %712 = vmatprep.subr.bf16.mxu0 0
  %713 = vmatpush1.bf16.msra.mxu0 0
  %714 = vmatprep.subr.bf16.mxu0 0
  %715 = vmatpush1.bf16.msra.mxu0 0
  %716 = vmatprep.subr.bf16.mxu0 0
  %717 = vmatpush1.bf16.msra.mxu0 0
  %718 = vmatprep.subr.bf16.mxu0 0
  %719 = vmatpush1.bf16.msra.mxu0 0
  %720 = vmatprep.subr.bf16.mxu0 0
  %721 = vmatpush1.bf16.msra.mxu0 0
  %722 = vmatprep.subr.bf16.mxu0 0
  %723 = vmatpush1.bf16.msra.mxu0 0
  %724 = vmatprep.subr.bf16.mxu0 %v626
  %725 = vmatpush1.bf16.msra.mxu0 %v623
  %726 = vmatprep.subr.bf16.mxu0 0
  %727 = vmatpush2.bf16.msra.mxu0 0
  %728 = vmatprep.subr.bf16.mxu0 0
  %729 = vmatpush2.bf16.msra.mxu0 0
  %730 = vmatprep.subr.bf16.mxu0 0
  %731 = vmatpush2.bf16.msra.mxu0 0
  %732 = vmatprep.subr.bf16.mxu0 0
  %733 = vmatpush2.bf16.msra.mxu0 0
  %734 = vmatprep.subr.bf16.mxu0 0
  %735 = vmatpush2.bf16.msra.mxu0 0
  %736 = vmatprep.subr.bf16.mxu0 0
  %737 = vmatpush2.bf16.msra.mxu0 0
  %738 = vmatprep.subr.bf16.mxu0 0
  %739 = vmatpush2.bf16.msra.mxu0 0
  %740 = vmatprep.subr.bf16.mxu0 0
  %741 = vmatpush2.bf16.msra.mxu0 0
  %742 = vmatprep.mubr.bf16.mxu0 0
  %743 = vmatmul.mubr.bf16.gmra.mxu0 %v608
  %v744 = vpop.f32.mrf.mxu0
  %v745 = vadd.f32 0.0, %v744
  %v746 = vpop.f32.mrf.mxu0
  %v747 = vadd.f32 0.0, %v746
  %v748 = vpop.f32.mrf.mxu0
  %v749 = vpop.f32.mrf.mxu0
  %750 = vdwg.mxu0
  %v751 = vadd.f32 %v601, %v663
  %v752 = vadd.f32 %v602, %v665
  %v753 = vadd.f32 %v603, %v704
  %v754 = vadd.f32 %v604, %v706
  %v755 = vadd.f32 %v605, %v745
  %v756 = vadd.f32 %v606, %v747
  %758 = vset.pattern.permute.xlu0 0
  %759 = vperm.xlu0 %758, %v67
  %v760 = vpop.permute.xlu0 %759
  %v762 = vmul.f32 %v751, %v760
  %v763 = vmul.f32 %v752, %v760
  %v764 = vmul.f32 %v753, %v760
  %v765 = vmul.f32 %v754, %v760
  %v766 = vmul.f32 %v755, %v760
  %v767 = vmul.f32 %v756, %v760
  %769 = vset.pattern.permute.xlu0 0
  %770 = vperm.xlu0 %769, %v68
  %v771 = vpop.permute.xlu0 %770
  %v773 = vadd.f32 %v762, %v771
  %v774 = vadd.f32 %v763, %v771
  %v775 = vadd.f32 %v764, %v771
  %v776 = vadd.f32 %v765, %v771
  %v777 = vadd.f32 %v766, %v771
  %v778 = vadd.f32 %v767, %v771
  %vm779 = vcmp.ge.f32.partialorder %v773, 0.0
  %vm780 = vcmp.ge.f32.partialorder %v774, 0.0
  %vm781 = vcmp.ge.f32.partialorder %v775, 0.0
  %vm782 = vcmp.ge.f32.partialorder %v776, 0.0
  %vm783 = vcmp.ge.f32.partialorder %v777, 0.0
  %vm784 = vcmp.ge.f32.partialorder %v778, 0.0
  %v785 = vmul.f32 %v773, 0.2
  %v786 = vmul.f32 %v774, 0.2
  %v787 = vmul.f32 %v775, 0.2
  %v788 = vmul.f32 %v776, 0.2
  %v789 = vmul.f32 %v777, 0.2
  %v790 = vmul.f32 %v778, 0.2
  %v791 = vsel %vm779, %v773, %v785
  %v792 = vsel %vm780, %v774, %v786
  %v793 = vsel %vm781, %v775, %v787
  %v794 = vsel %vm782, %v776, %v788
  %v795 = vsel %vm783, %v777, %v789
  %v796 = vsel %vm784, %v778, %v790
  %797 = vst [vmem:[%s5] sm:$0xff] %v791
  %798 = vst [vmem:[%s5 + $0x8] sm:$0xff] %v792
  %799 = vst [vmem:[%s5 + $0x10] sm:$0xff] %v793
  %800 = vst [vmem:[%s5 + $0x18] sm:$0xff] %v794
  %801 = vst [vmem:[%s5 + $0x20] sm:$0xff] %v795
  %802 = vst [vmem:[%s5 + $0x28] sm:$0xff] %v796
  %v804 = vsel %vm125, %v56, 0
  %806 = vmatprep.subr.bf16.mxu0 0
  %807 = vmatpush1.bf16.msra.mxu0 0
  %808 = vmatprep.subr.bf16.mxu0 0
  %809 = vmatpush1.bf16.msra.mxu0 0
  %810 = vmatprep.subr.bf16.mxu0 0
  %811 = vmatpush1.bf16.msra.mxu0 0
  %812 = vmatprep.subr.bf16.mxu0 0
  %813 = vmatpush1.bf16.msra.mxu0 0
  %814 = vmatprep.subr.bf16.mxu0 0
  %815 = vmatpush1.bf16.msra.mxu0 0
  %816 = vmatprep.subr.bf16.mxu0 0
  %817 = vmatpush1.bf16.msra.mxu0 0
  %818 = vmatprep.subr.bf16.mxu0 0
  %819 = vmatpush1.bf16.msra.mxu0 0
  %820 = vmatprep.subr.bf16.mxu0 %v299
  %821 = vmatpush1.bf16.msra.mxu0 %v296
  %822 = vmatprep.subr.bf16.mxu0 0
  %823 = vmatpush2.bf16.msra.mxu0 0
  %824 = vmatprep.subr.bf16.mxu0 0
  %825 = vmatpush2.bf16.msra.mxu0 0
  %826 = vmatprep.subr.bf16.mxu0 0
  %827 = vmatpush2.bf16.msra.mxu0 0
  %828 = vmatprep.subr.bf16.mxu0 0
  %829 = vmatpush2.bf16.msra.mxu0 0
  %830 = vmatprep.subr.bf16.mxu0 0
  %831 = vmatpush2.bf16.msra.mxu0 0
  %832 = vmatprep.subr.bf16.mxu0 0
  %833 = vmatpush2.bf16.msra.mxu0 0
  %834 = vmatprep.subr.bf16.mxu0 0
  %835 = vmatpush2.bf16.msra.mxu0 0
  %836 = vmatprep.subr.bf16.mxu0 0
  %837 = vmatpush2.bf16.msra.mxu0 0
  %838 = vmatprep.mubr.bf16.mxu0 0
  %839 = vmatmul.mubr.bf16.gmra.mxu0 %v804
  %v840 = vpop.f32.mrf.mxu0
  %v841 = vadd.f32 0.0, %v840
  %v842 = vpop.f32.mrf.mxu0
  %v843 = vadd.f32 0.0, %v842
  %v844 = vpop.f32.mrf.mxu0
  %v845 = vpop.f32.mrf.mxu0
  %846 = vdwg.mxu0
  %847 = vmatprep.subr.bf16.mxu0 0
  %848 = vmatpush1.bf16.msra.mxu0 0
  %849 = vmatprep.subr.bf16.mxu0 0
  %850 = vmatpush1.bf16.msra.mxu0 0
  %851 = vmatprep.subr.bf16.mxu0 0
  %852 = vmatpush1.bf16.msra.mxu0 0
  %853 = vmatprep.subr.bf16.mxu0 0
  %854 = vmatpush1.bf16.msra.mxu0 0
  %855 = vmatprep.subr.bf16.mxu0 0
  %856 = vmatpush1.bf16.msra.mxu0 0
  %857 = vmatprep.subr.bf16.mxu0 0
  %858 = vmatpush1.bf16.msra.mxu0 0
  %859 = vmatprep.subr.bf16.mxu0 0
  %860 = vmatpush1.bf16.msra.mxu0 0
  %861 = vmatprep.subr.bf16.mxu0 %v305
  %862 = vmatpush1.bf16.msra.mxu0 %v302
  %863 = vmatprep.subr.bf16.mxu0 0
  %864 = vmatpush2.bf16.msra.mxu0 0
  %865 = vmatprep.subr.bf16.mxu0 0
  %866 = vmatpush2.bf16.msra.mxu0 0
  %867 = vmatprep.subr.bf16.mxu0 0
  %868 = vmatpush2.bf16.msra.mxu0 0
  %869 = vmatprep.subr.bf16.mxu0 0
  %870 = vmatpush2.bf16.msra.mxu0 0
  %871 = vmatprep.subr.bf16.mxu0 0
  %872 = vmatpush2.bf16.msra.mxu0 0
  %873 = vmatprep.subr.bf16.mxu0 0
  %874 = vmatpush2.bf16.msra.mxu0 0
  %875 = vmatprep.subr.bf16.mxu0 0
  %876 = vmatpush2.bf16.msra.mxu0 0
  %877 = vmatprep.subr.bf16.mxu0 0
  %878 = vmatpush2.bf16.msra.mxu0 0
  %879 = vmatprep.mubr.bf16.mxu0 0
  %880 = vmatmul.mubr.bf16.gmra.mxu0 %v804
  %v881 = vpop.f32.mrf.mxu0
  %v882 = vadd.f32 0.0, %v881
  %v883 = vpop.f32.mrf.mxu0
  %v884 = vadd.f32 0.0, %v883
  %v885 = vpop.f32.mrf.mxu0
  %v886 = vpop.f32.mrf.mxu0
  %887 = vdwg.mxu0
  %888 = vmatprep.subr.bf16.mxu0 0
  %889 = vmatpush1.bf16.msra.mxu0 0
  %890 = vmatprep.subr.bf16.mxu0 0
  %891 = vmatpush1.bf16.msra.mxu0 0
  %892 = vmatprep.subr.bf16.mxu0 0
  %893 = vmatpush1.bf16.msra.mxu0 0
  %894 = vmatprep.subr.bf16.mxu0 0
  %895 = vmatpush1.bf16.msra.mxu0 0
  %896 = vmatprep.subr.bf16.mxu0 0
  %897 = vmatpush1.bf16.msra.mxu0 0
  %898 = vmatprep.subr.bf16.mxu0 0
  %899 = vmatpush1.bf16.msra.mxu0 0
  %900 = vmatprep.subr.bf16.mxu0 0
  %901 = vmatpush1.bf16.msra.mxu0 0
  %902 = vmatprep.subr.bf16.mxu0 %v311
  %903 = vmatpush1.bf16.msra.mxu0 %v308
  %904 = vmatprep.subr.bf16.mxu0 0
  %905 = vmatpush2.bf16.msra.mxu0 0
  %906 = vmatprep.subr.bf16.mxu0 0
  %907 = vmatpush2.bf16.msra.mxu0 0
  %908 = vmatprep.subr.bf16.mxu0 0
  %909 = vmatpush2.bf16.msra.mxu0 0
  %910 = vmatprep.subr.bf16.mxu0 0
  %911 = vmatpush2.bf16.msra.mxu0 0
  %912 = vmatprep.subr.bf16.mxu0 0
  %913 = vmatpush2.bf16.msra.mxu0 0
  %914 = vmatprep.subr.bf16.mxu0 0
  %915 = vmatpush2.bf16.msra.mxu0 0
  %916 = vmatprep.subr.bf16.mxu0 0
  %917 = vmatpush2.bf16.msra.mxu0 0
  %918 = vmatprep.subr.bf16.mxu0 0
  %919 = vmatpush2.bf16.msra.mxu0 0
  %920 = vmatprep.mubr.bf16.mxu0 0
  %921 = vmatmul.mubr.bf16.gmra.mxu0 %v804
  %v922 = vpop.f32.mrf.mxu0
  %v923 = vadd.f32 0.0, %v922
  %v924 = vpop.f32.mrf.mxu0
  %v925 = vadd.f32 0.0, %v924
  %v926 = vpop.f32.mrf.mxu0
  %v927 = vpop.f32.mrf.mxu0
  %928 = vdwg.mxu0
  %929 = vrot.lane.b32.xlu0 %v78, 108
  %v930 = vpop.permute.xlu0 %929
  %931 = vrot.lane.b32.xlu0 %v86, 108
  %v932 = vpop.permute.xlu0 %931
  %933 = vrot.lane.b32.xlu0 %v85, 108
  %v934 = vpop.permute.xlu0 %933
  %935 = vrot.lane.b32.xlu0 %v87, 108
  %v936 = vpop.permute.xlu0 %935
  %937 = vrot.lane.b32.xlu0 %v95, 108
  %v938 = vpop.permute.xlu0 %937
  %939 = vrot.lane.b32.xlu0 %v103, 108
  %v940 = vpop.permute.xlu0 %939
  %941 = vrot.lane.b32.xlu0 %v102, 108
  %v942 = vpop.permute.xlu0 %941
  %vm943 = vcmask 883712
  %v944 = vsel %vm943, %v930, %v932
  %v945 = vsel %vm943, %v932, %v934
  %v946 = vsel %vm943, %v934, %v936
  %v947 = vsel %vm943, %v936, %v938
  %v948 = vsel %vm943, %v938, %v940
  %v949 = vsel %vm943, %v940, %v942
  %v951 = vsel %vm125, %v55, 0
  %v954 = vsel %vm129, %v944, 0
  %v957 = vsel %vm129, %v945, 0
  %v960 = vsel %vm129, %v946, 0
  %v963 = vsel %vm129, %v947, 0
  %v966 = vsel %vm129, %v948, 0
  %v969 = vsel %vm129, %v949, 0
  %971 = vmatprep.subr.bf16.mxu0 0
  %972 = vmatpush1.bf16.msra.mxu0 0
  %973 = vmatprep.subr.bf16.mxu0 0
  %974 = vmatpush1.bf16.msra.mxu0 0
  %975 = vmatprep.subr.bf16.mxu0 0
  %976 = vmatpush1.bf16.msra.mxu0 0
  %977 = vmatprep.subr.bf16.mxu0 0
  %978 = vmatpush1.bf16.msra.mxu0 0
  %979 = vmatprep.subr.bf16.mxu0 0
  %980 = vmatpush1.bf16.msra.mxu0 0
  %981 = vmatprep.subr.bf16.mxu0 0
  %982 = vmatpush1.bf16.msra.mxu0 0
  %983 = vmatprep.subr.bf16.mxu0 0
  %984 = vmatpush1.bf16.msra.mxu0 0
  %985 = vmatprep.subr.bf16.mxu0 %v957
  %986 = vmatpush1.bf16.msra.mxu0 %v954
  %987 = vmatprep.subr.bf16.mxu0 0
  %988 = vmatpush2.bf16.msra.mxu0 0
  %989 = vmatprep.subr.bf16.mxu0 0
  %990 = vmatpush2.bf16.msra.mxu0 0
  %991 = vmatprep.subr.bf16.mxu0 0
  %992 = vmatpush2.bf16.msra.mxu0 0
  %993 = vmatprep.subr.bf16.mxu0 0
  %994 = vmatpush2.bf16.msra.mxu0 0
  %995 = vmatprep.subr.bf16.mxu0 0
  %996 = vmatpush2.bf16.msra.mxu0 0
  %997 = vmatprep.subr.bf16.mxu0 0
  %998 = vmatpush2.bf16.msra.mxu0 0
  %999 = vmatprep.subr.bf16.mxu0 0
  %1000 = vmatpush2.bf16.msra.mxu0 0
  %1001 = vmatprep.subr.bf16.mxu0 0
  %1002 = vmatpush2.bf16.msra.mxu0 0
  %1003 = vmatprep.mubr.bf16.mxu0 0
  %1004 = vmatmul.mubr.bf16.gmra.mxu0 %v951
  %v1005 = vpop.f32.mrf.mxu0
  %v1006 = vadd.f32 %v841, %v1005
  %v1007 = vpop.f32.mrf.mxu0
  %v1008 = vadd.f32 %v843, %v1007
  %v1009 = vpop.f32.mrf.mxu0
  %v1010 = vpop.f32.mrf.mxu0
  %1011 = vdwg.mxu0
  %1012 = vmatprep.subr.bf16.mxu0 0
  %1013 = vmatpush1.bf16.msra.mxu0 0
  %1014 = vmatprep.subr.bf16.mxu0 0
  %1015 = vmatpush1.bf16.msra.mxu0 0
  %1016 = vmatprep.subr.bf16.mxu0 0
  %1017 = vmatpush1.bf16.msra.mxu0 0
  %1018 = vmatprep.subr.bf16.mxu0 0
  %1019 = vmatpush1.bf16.msra.mxu0 0
  %1020 = vmatprep.subr.bf16.mxu0 0
  %1021 = vmatpush1.bf16.msra.mxu0 0
  %1022 = vmatprep.subr.bf16.mxu0 0
  %1023 = vmatpush1.bf16.msra.mxu0 0
  %1024 = vmatprep.subr.bf16.mxu0 0
  %1025 = vmatpush1.bf16.msra.mxu0 0
  %1026 = vmatprep.subr.bf16.mxu0 %v963
  %1027 = vmatpush1.bf16.msra.mxu0 %v960
  %1028 = vmatprep.subr.bf16.mxu0 0
  %1029 = vmatpush2.bf16.msra.mxu0 0
  %1030 = vmatprep.subr.bf16.mxu0 0
  %1031 = vmatpush2.bf16.msra.mxu0 0
  %1032 = vmatprep.subr.bf16.mxu0 0
  %1033 = vmatpush2.bf16.msra.mxu0 0
  %1034 = vmatprep.subr.bf16.mxu0 0
  %1035 = vmatpush2.bf16.msra.mxu0 0
  %1036 = vmatprep.subr.bf16.mxu0 0
  %1037 = vmatpush2.bf16.msra.mxu0 0
  %1038 = vmatprep.subr.bf16.mxu0 0
  %1039 = vmatpush2.bf16.msra.mxu0 0
  %1040 = vmatprep.subr.bf16.mxu0 0
  %1041 = vmatpush2.bf16.msra.mxu0 0
  %1042 = vmatprep.subr.bf16.mxu0 0
  %1043 = vmatpush2.bf16.msra.mxu0 0
  %1044 = vmatprep.mubr.bf16.mxu0 0
  %1045 = vmatmul.mubr.bf16.gmra.mxu0 %v951
  %v1046 = vpop.f32.mrf.mxu0
  %v1047 = vadd.f32 %v882, %v1046
  %v1048 = vpop.f32.mrf.mxu0
  %v1049 = vadd.f32 %v884, %v1048
  %v1050 = vpop.f32.mrf.mxu0
  %v1051 = vpop.f32.mrf.mxu0
  %1052 = vdwg.mxu0
  %1053 = vmatprep.subr.bf16.mxu0 0
  %1054 = vmatpush1.bf16.msra.mxu0 0
  %1055 = vmatprep.subr.bf16.mxu0 0
  %1056 = vmatpush1.bf16.msra.mxu0 0
  %1057 = vmatprep.subr.bf16.mxu0 0
  %1058 = vmatpush1.bf16.msra.mxu0 0
  %1059 = vmatprep.subr.bf16.mxu0 0
  %1060 = vmatpush1.bf16.msra.mxu0 0
  %1061 = vmatprep.subr.bf16.mxu0 0
  %1062 = vmatpush1.bf16.msra.mxu0 0
  %1063 = vmatprep.subr.bf16.mxu0 0
  %1064 = vmatpush1.bf16.msra.mxu0 0
  %1065 = vmatprep.subr.bf16.mxu0 0
  %1066 = vmatpush1.bf16.msra.mxu0 0
  %1067 = vmatprep.subr.bf16.mxu0 %v969
  %1068 = vmatpush1.bf16.msra.mxu0 %v966
  %1069 = vmatprep.subr.bf16.mxu0 0
  %1070 = vmatpush2.bf16.msra.mxu0 0
  %1071 = vmatprep.subr.bf16.mxu0 0
  %1072 = vmatpush2.bf16.msra.mxu0 0
  %1073 = vmatprep.subr.bf16.mxu0 0
  %1074 = vmatpush2.bf16.msra.mxu0 0
  %1075 = vmatprep.subr.bf16.mxu0 0
  %1076 = vmatpush2.bf16.msra.mxu0 0
  %1077 = vmatprep.subr.bf16.mxu0 0
  %1078 = vmatpush2.bf16.msra.mxu0 0
  %1079 = vmatprep.subr.bf16.mxu0 0
  %1080 = vmatpush2.bf16.msra.mxu0 0
  %1081 = vmatprep.subr.bf16.mxu0 0
  %1082 = vmatpush2.bf16.msra.mxu0 0
  %1083 = vmatprep.subr.bf16.mxu0 0
  %1084 = vmatpush2.bf16.msra.mxu0 0
  %1085 = vmatprep.mubr.bf16.mxu0 0
  %1086 = vmatmul.mubr.bf16.gmra.mxu0 %v951
  %v1087 = vpop.f32.mrf.mxu0
  %v1088 = vadd.f32 %v923, %v1087
  %v1089 = vpop.f32.mrf.mxu0
  %v1090 = vadd.f32 %v925, %v1089
  %v1091 = vpop.f32.mrf.mxu0
  %v1092 = vpop.f32.mrf.mxu0
  %1093 = vdwg.mxu0
  %1094 = vrot.lane.b32.xlu0 %v78, 126
  %v1095 = vpop.permute.xlu0 %1094
  %1096 = vrot.lane.b32.xlu0 %v86, 126
  %v1097 = vpop.permute.xlu0 %1096
  %1098 = vrot.lane.b32.xlu0 %v85, 126
  %v1099 = vpop.permute.xlu0 %1098
  %1100 = vrot.lane.b32.xlu0 %v87, 126
  %v1101 = vpop.permute.xlu0 %1100
  %1102 = vrot.lane.b32.xlu0 %v95, 126
  %v1103 = vpop.permute.xlu0 %1102
  %1104 = vrot.lane.b32.xlu0 %v103, 126
  %v1105 = vpop.permute.xlu0 %1104
  %1106 = vrot.lane.b32.xlu0 %v102, 126
  %v1107 = vpop.permute.xlu0 %1106
  %vm1108 = vcmask 1031168
  %v1109 = vsel %vm1108, %v1095, %v1097
  %v1110 = vsel %vm1108, %v1097, %v1099
  %v1111 = vsel %vm1108, %v1099, %v1101
  %v1112 = vsel %vm1108, %v1101, %v1103
  %v1113 = vsel %vm1108, %v1103, %v1105
  %v1114 = vsel %vm1108, %v1105, %v1107
  %v1116 = vsel %vm125, %v57, 0
  %v1119 = vsel %vm129, %v1109, 0
  %v1122 = vsel %vm129, %v1110, 0
  %v1125 = vsel %vm129, %v1111, 0
  %v1128 = vsel %vm129, %v1112, 0
  %v1131 = vsel %vm129, %v1113, 0
  %v1134 = vsel %vm129, %v1114, 0
  %1136 = vmatprep.subr.bf16.mxu0 0
  %1137 = vmatpush1.bf16.msra.mxu0 0
  %1138 = vmatprep.subr.bf16.mxu0 0
  %1139 = vmatpush1.bf16.msra.mxu0 0
  %1140 = vmatprep.subr.bf16.mxu0 0
  %1141 = vmatpush1.bf16.msra.mxu0 0
  %1142 = vmatprep.subr.bf16.mxu0 0
  %1143 = vmatpush1.bf16.msra.mxu0 0
  %1144 = vmatprep.subr.bf16.mxu0 0
  %1145 = vmatpush1.bf16.msra.mxu0 0
  %1146 = vmatprep.subr.bf16.mxu0 0
  %1147 = vmatpush1.bf16.msra.mxu0 0
  %1148 = vmatprep.subr.bf16.mxu0 0
  %1149 = vmatpush1.bf16.msra.mxu0 0
  %1150 = vmatprep.subr.bf16.mxu0 %v1122
  %1151 = vmatpush1.bf16.msra.mxu0 %v1119
  %1152 = vmatprep.subr.bf16.mxu0 0
  %1153 = vmatpush2.bf16.msra.mxu0 0
  %1154 = vmatprep.subr.bf16.mxu0 0
  %1155 = vmatpush2.bf16.msra.mxu0 0
  %1156 = vmatprep.subr.bf16.mxu0 0
  %1157 = vmatpush2.bf16.msra.mxu0 0
  %1158 = vmatprep.subr.bf16.mxu0 0
  %1159 = vmatpush2.bf16.msra.mxu0 0
  %1160 = vmatprep.subr.bf16.mxu0 0
  %1161 = vmatpush2.bf16.msra.mxu0 0
  %1162 = vmatprep.subr.bf16.mxu0 0
  %1163 = vmatpush2.bf16.msra.mxu0 0
  %1164 = vmatprep.subr.bf16.mxu0 0
  %1165 = vmatpush2.bf16.msra.mxu0 0
  %1166 = vmatprep.subr.bf16.mxu0 0
  %1167 = vmatpush2.bf16.msra.mxu0 0
  %1168 = vmatprep.mubr.bf16.mxu0 0
  %1169 = vmatmul.mubr.bf16.gmra.mxu0 %v1116
  %v1170 = vpop.f32.mrf.mxu0
  %v1171 = vadd.f32 0.0, %v1170
  %v1172 = vpop.f32.mrf.mxu0
  %v1173 = vadd.f32 0.0, %v1172
  %v1174 = vpop.f32.mrf.mxu0
  %v1175 = vpop.f32.mrf.mxu0
  %1176 = vdwg.mxu0
  %1177 = vmatprep.subr.bf16.mxu0 0
  %1178 = vmatpush1.bf16.msra.mxu0 0
  %1179 = vmatprep.subr.bf16.mxu0 0
  %1180 = vmatpush1.bf16.msra.mxu0 0
  %1181 = vmatprep.subr.bf16.mxu0 0
  %1182 = vmatpush1.bf16.msra.mxu0 0
  %1183 = vmatprep.subr.bf16.mxu0 0
  %1184 = vmatpush1.bf16.msra.mxu0 0
  %1185 = vmatprep.subr.bf16.mxu0 0
  %1186 = vmatpush1.bf16.msra.mxu0 0
  %1187 = vmatprep.subr.bf16.mxu0 0
  %1188 = vmatpush1.bf16.msra.mxu0 0
  %1189 = vmatprep.subr.bf16.mxu0 0
  %1190 = vmatpush1.bf16.msra.mxu0 0
  %1191 = vmatprep.subr.bf16.mxu0 %v1128
  %1192 = vmatpush1.bf16.msra.mxu0 %v1125
  %1193 = vmatprep.subr.bf16.mxu0 0
  %1194 = vmatpush2.bf16.msra.mxu0 0
  %1195 = vmatprep.subr.bf16.mxu0 0
  %1196 = vmatpush2.bf16.msra.mxu0 0
  %1197 = vmatprep.subr.bf16.mxu0 0
  %1198 = vmatpush2.bf16.msra.mxu0 0
  %1199 = vmatprep.subr.bf16.mxu0 0
  %1200 = vmatpush2.bf16.msra.mxu0 0
  %1201 = vmatprep.subr.bf16.mxu0 0
  %1202 = vmatpush2.bf16.msra.mxu0 0
  %1203 = vmatprep.subr.bf16.mxu0 0
  %1204 = vmatpush2.bf16.msra.mxu0 0
  %1205 = vmatprep.subr.bf16.mxu0 0
  %1206 = vmatpush2.bf16.msra.mxu0 0
  %1207 = vmatprep.subr.bf16.mxu0 0
  %1208 = vmatpush2.bf16.msra.mxu0 0
  %1209 = vmatprep.mubr.bf16.mxu0 0
  %1210 = vmatmul.mubr.bf16.gmra.mxu0 %v1116
  %v1211 = vpop.f32.mrf.mxu0
  %v1212 = vadd.f32 0.0, %v1211
  %v1213 = vpop.f32.mrf.mxu0
  %v1214 = vadd.f32 0.0, %v1213
  %v1215 = vpop.f32.mrf.mxu0
  %v1216 = vpop.f32.mrf.mxu0
  %1217 = vdwg.mxu0
  %1218 = vmatprep.subr.bf16.mxu0 0
  %1219 = vmatpush1.bf16.msra.mxu0 0
  %1220 = vmatprep.subr.bf16.mxu0 0
  %1221 = vmatpush1.bf16.msra.mxu0 0
  %1222 = vmatprep.subr.bf16.mxu0 0
  %1223 = vmatpush1.bf16.msra.mxu0 0
  %1224 = vmatprep.subr.bf16.mxu0 0
  %1225 = vmatpush1.bf16.msra.mxu0 0
  %1226 = vmatprep.subr.bf16.mxu0 0
  %1227 = vmatpush1.bf16.msra.mxu0 0
  %1228 = vmatprep.subr.bf16.mxu0 0
  %1229 = vmatpush1.bf16.msra.mxu0 0
  %1230 = vmatprep.subr.bf16.mxu0 0
  %1231 = vmatpush1.bf16.msra.mxu0 0
  %1232 = vmatprep.subr.bf16.mxu0 %v1134
  %1233 = vmatpush1.bf16.msra.mxu0 %v1131
  %1234 = vmatprep.subr.bf16.mxu0 0
  %1235 = vmatpush2.bf16.msra.mxu0 0
  %1236 = vmatprep.subr.bf16.mxu0 0
  %1237 = vmatpush2.bf16.msra.mxu0 0
  %1238 = vmatprep.subr.bf16.mxu0 0
  %1239 = vmatpush2.bf16.msra.mxu0 0
  %1240 = vmatprep.subr.bf16.mxu0 0
  %1241 = vmatpush2.bf16.msra.mxu0 0
  %1242 = vmatprep.subr.bf16.mxu0 0
  %1243 = vmatpush2.bf16.msra.mxu0 0
  %1244 = vmatprep.subr.bf16.mxu0 0
  %1245 = vmatpush2.bf16.msra.mxu0 0
  %1246 = vmatprep.subr.bf16.mxu0 0
  %1247 = vmatpush2.bf16.msra.mxu0 0
  %1248 = vmatprep.subr.bf16.mxu0 0
  %1249 = vmatpush2.bf16.msra.mxu0 0
  %1250 = vmatprep.mubr.bf16.mxu0 0
  %1251 = vmatmul.mubr.bf16.gmra.mxu0 %v1116
  %v1252 = vpop.f32.mrf.mxu0
  %v1253 = vadd.f32 0.0, %v1252
  %v1254 = vpop.f32.mrf.mxu0
  %v1255 = vadd.f32 0.0, %v1254
  %v1256 = vpop.f32.mrf.mxu0
  %v1257 = vpop.f32.mrf.mxu0
  %1258 = vdwg.mxu0
  %v1259 = vadd.f32 %v1006, %v1171
  %v1260 = vadd.f32 %v1008, %v1173
  %v1261 = vadd.f32 %v1047, %v1212
  %v1262 = vadd.f32 %v1049, %v1214
  %v1263 = vadd.f32 %v1088, %v1253
  %v1264 = vadd.f32 %v1090, %v1255
  %v1266 = vsel %vm125, %v58, 0
  %1268 = vmatprep.subr.bf16.mxu0 0
  %1269 = vmatpush1.bf16.msra.mxu0 0
  %1270 = vmatprep.subr.bf16.mxu0 0
  %1271 = vmatpush1.bf16.msra.mxu0 0
  %1272 = vmatprep.subr.bf16.mxu0 0
  %1273 = vmatpush1.bf16.msra.mxu0 0
  %1274 = vmatprep.subr.bf16.mxu0 0
  %1275 = vmatpush1.bf16.msra.mxu0 0
  %1276 = vmatprep.subr.bf16.mxu0 0
  %1277 = vmatpush1.bf16.msra.mxu0 0
  %1278 = vmatprep.subr.bf16.mxu0 0
  %1279 = vmatpush1.bf16.msra.mxu0 0
  %1280 = vmatprep.subr.bf16.mxu0 0
  %1281 = vmatpush1.bf16.msra.mxu0 0
  %1282 = vmatprep.subr.bf16.mxu0 %v464
  %1283 = vmatpush1.bf16.msra.mxu0 %v461
  %1284 = vmatprep.subr.bf16.mxu0 0
  %1285 = vmatpush2.bf16.msra.mxu0 0
  %1286 = vmatprep.subr.bf16.mxu0 0
  %1287 = vmatpush2.bf16.msra.mxu0 0
  %1288 = vmatprep.subr.bf16.mxu0 0
  %1289 = vmatpush2.bf16.msra.mxu0 0
  %1290 = vmatprep.subr.bf16.mxu0 0
  %1291 = vmatpush2.bf16.msra.mxu0 0
  %1292 = vmatprep.subr.bf16.mxu0 0
  %1293 = vmatpush2.bf16.msra.mxu0 0
  %1294 = vmatprep.subr.bf16.mxu0 0
  %1295 = vmatpush2.bf16.msra.mxu0 0
  %1296 = vmatprep.subr.bf16.mxu0 0
  %1297 = vmatpush2.bf16.msra.mxu0 0
  %1298 = vmatprep.subr.bf16.mxu0 0
  %1299 = vmatpush2.bf16.msra.mxu0 0
  %1300 = vmatprep.mubr.bf16.mxu0 0
  %1301 = vmatmul.mubr.bf16.gmra.mxu0 %v1266
  %v1302 = vpop.f32.mrf.mxu0
  %v1303 = vadd.f32 0.0, %v1302
  %v1304 = vpop.f32.mrf.mxu0
  %v1305 = vadd.f32 0.0, %v1304
  %v1306 = vpop.f32.mrf.mxu0
  %v1307 = vpop.f32.mrf.mxu0
  %1308 = vdwg.mxu0
  %1309 = vmatprep.subr.bf16.mxu0 0
  %1310 = vmatpush1.bf16.msra.mxu0 0
  %1311 = vmatprep.subr.bf16.mxu0 0
  %1312 = vmatpush1.bf16.msra.mxu0 0
  %1313 = vmatprep.subr.bf16.mxu0 0
  %1314 = vmatpush1.bf16.msra.mxu0 0
  %1315 = vmatprep.subr.bf16.mxu0 0
  %1316 = vmatpush1.bf16.msra.mxu0 0
  %1317 = vmatprep.subr.bf16.mxu0 0
  %1318 = vmatpush1.bf16.msra.mxu0 0
  %1319 = vmatprep.subr.bf16.mxu0 0
  %1320 = vmatpush1.bf16.msra.mxu0 0
  %1321 = vmatprep.subr.bf16.mxu0 0
  %1322 = vmatpush1.bf16.msra.mxu0 0
  %1323 = vmatprep.subr.bf16.mxu0 %v470
  %1324 = vmatpush1.bf16.msra.mxu0 %v467
  %1325 = vmatprep.subr.bf16.mxu0 0
  %1326 = vmatpush2.bf16.msra.mxu0 0
  %1327 = vmatprep.subr.bf16.mxu0 0
  %1328 = vmatpush2.bf16.msra.mxu0 0
  %1329 = vmatprep.subr.bf16.mxu0 0
  %1330 = vmatpush2.bf16.msra.mxu0 0
  %1331 = vmatprep.subr.bf16.mxu0 0
  %1332 = vmatpush2.bf16.msra.mxu0 0
  %1333 = vmatprep.subr.bf16.mxu0 0
  %1334 = vmatpush2.bf16.msra.mxu0 0
  %1335 = vmatprep.subr.bf16.mxu0 0
  %1336 = vmatpush2.bf16.msra.mxu0 0
  %1337 = vmatprep.subr.bf16.mxu0 0
  %1338 = vmatpush2.bf16.msra.mxu0 0
  %1339 = vmatprep.subr.bf16.mxu0 0
  %1340 = vmatpush2.bf16.msra.mxu0 0
  %1341 = vmatprep.mubr.bf16.mxu0 0
  %1342 = vmatmul.mubr.bf16.gmra.mxu0 %v1266
  %v1343 = vpop.f32.mrf.mxu0
  %v1344 = vadd.f32 0.0, %v1343
  %v1345 = vpop.f32.mrf.mxu0
  %v1346 = vadd.f32 0.0, %v1345
  %v1347 = vpop.f32.mrf.mxu0
  %v1348 = vpop.f32.mrf.mxu0
  %1349 = vdwg.mxu0
  %1350 = vmatprep.subr.bf16.mxu0 0
  %1351 = vmatpush1.bf16.msra.mxu0 0
  %1352 = vmatprep.subr.bf16.mxu0 0
  %1353 = vmatpush1.bf16.msra.mxu0 0
  %1354 = vmatprep.subr.bf16.mxu0 0
  %1355 = vmatpush1.bf16.msra.mxu0 0
  %1356 = vmatprep.subr.bf16.mxu0 0
  %1357 = vmatpush1.bf16.msra.mxu0 0
  %1358 = vmatprep.subr.bf16.mxu0 0
  %1359 = vmatpush1.bf16.msra.mxu0 0
  %1360 = vmatprep.subr.bf16.mxu0 0
  %1361 = vmatpush1.bf16.msra.mxu0 0
  %1362 = vmatprep.subr.bf16.mxu0 0
  %1363 = vmatpush1.bf16.msra.mxu0 0
  %1364 = vmatprep.subr.bf16.mxu0 %v476
  %1365 = vmatpush1.bf16.msra.mxu0 %v473
  %1366 = vmatprep.subr.bf16.mxu0 0
  %1367 = vmatpush2.bf16.msra.mxu0 0
  %1368 = vmatprep.subr.bf16.mxu0 0
  %1369 = vmatpush2.bf16.msra.mxu0 0
  %1370 = vmatprep.subr.bf16.mxu0 0
  %1371 = vmatpush2.bf16.msra.mxu0 0
  %1372 = vmatprep.subr.bf16.mxu0 0
  %1373 = vmatpush2.bf16.msra.mxu0 0
  %1374 = vmatprep.subr.bf16.mxu0 0
  %1375 = vmatpush2.bf16.msra.mxu0 0
  %1376 = vmatprep.subr.bf16.mxu0 0
  %1377 = vmatpush2.bf16.msra.mxu0 0
  %1378 = vmatprep.subr.bf16.mxu0 0
  %1379 = vmatpush2.bf16.msra.mxu0 0
  %1380 = vmatprep.subr.bf16.mxu0 0
  %1381 = vmatpush2.bf16.msra.mxu0 0
  %1382 = vmatprep.mubr.bf16.mxu0 0
  %1383 = vmatmul.mubr.bf16.gmra.mxu0 %v1266
  %v1384 = vpop.f32.mrf.mxu0
  %v1385 = vadd.f32 0.0, %v1384
  %v1386 = vpop.f32.mrf.mxu0
  %v1387 = vadd.f32 0.0, %v1386
  %v1388 = vpop.f32.mrf.mxu0
  %v1389 = vpop.f32.mrf.mxu0
  %1390 = vdwg.mxu0
  %v1391 = vadd.f32 %v1259, %v1303
  %v1392 = vadd.f32 %v1260, %v1305
  %v1393 = vadd.f32 %v1261, %v1344
  %v1394 = vadd.f32 %v1262, %v1346
  %v1395 = vadd.f32 %v1263, %v1385
  %v1396 = vadd.f32 %v1264, %v1387
  %v1397 = vmul.f32 %v1391, %v760
  %v1398 = vmul.f32 %v1392, %v760
  %v1399 = vmul.f32 %v1393, %v760
  %v1400 = vmul.f32 %v1394, %v760
  %v1401 = vmul.f32 %v1395, %v760
  %v1402 = vmul.f32 %v1396, %v760
  %v1403 = vadd.f32 %v1397, %v771
  %v1404 = vadd.f32 %v1398, %v771
  %v1405 = vadd.f32 %v1399, %v771
  %v1406 = vadd.f32 %v1400, %v771
  %v1407 = vadd.f32 %v1401, %v771
  %v1408 = vadd.f32 %v1402, %v771
  %vm1409 = vcmp.ge.f32.partialorder %v1403, 0.0
  %vm1410 = vcmp.ge.f32.partialorder %v1404, 0.0
  %vm1411 = vcmp.ge.f32.partialorder %v1405, 0.0
  %vm1412 = vcmp.ge.f32.partialorder %v1406, 0.0
  %vm1413 = vcmp.ge.f32.partialorder %v1407, 0.0
  %vm1414 = vcmp.ge.f32.partialorder %v1408, 0.0
  %v1415 = vmul.f32 %v1403, 0.2
  %v1416 = vmul.f32 %v1404, 0.2
  %v1417 = vmul.f32 %v1405, 0.2
  %v1418 = vmul.f32 %v1406, 0.2
  %v1419 = vmul.f32 %v1407, 0.2
  %v1420 = vmul.f32 %v1408, 0.2
  %v1421 = vsel %vm1409, %v1403, %v1415
  %v1422 = vsel %vm1410, %v1404, %v1416
  %v1423 = vsel %vm1411, %v1405, %v1417
  %v1424 = vsel %vm1412, %v1406, %v1418
  %v1425 = vsel %vm1413, %v1407, %v1419
  %v1426 = vsel %vm1414, %v1408, %v1420
  %s1427 = scalar_lea.vmem %s5, 48
  %1428 = vst [vmem:[%s1427] sm:$0xff] %v1421
  %1429 = vst [vmem:[%s1427 + $0x8] sm:$0xff] %v1422
  %1430 = vst [vmem:[%s1427 + $0x10] sm:$0xff] %v1423
  %1431 = vst [vmem:[%s1427 + $0x18] sm:$0xff] %v1424
  %1432 = vst [vmem:[%s1427 + $0x20] sm:$0xff] %v1425
  %1433 = vst [vmem:[%s1427 + $0x28] sm:$0xff] %v1426
  %1434 = vrot.lane.b32.xlu0 %v78, 92
  %v1435 = vpop.permute.xlu0 %1434
  %1436 = vrot.lane.b32.xlu0 %v86, 92
  %v1437 = vpop.permute.xlu0 %1436
  %1438 = vrot.lane.b32.xlu0 %v85, 92
  %v1439 = vpop.permute.xlu0 %1438
  %1440 = vrot.lane.b32.xlu0 %v87, 92
  %v1441 = vpop.permute.xlu0 %1440
  %1442 = vrot.lane.b32.xlu0 %v95, 92
  %v1443 = vpop.permute.xlu0 %1442
  %1444 = vrot.lane.b32.xlu0 %v103, 92
  %v1445 = vpop.permute.xlu0 %1444
  %1446 = vrot.lane.b32.xlu0 %v102, 92
  %v1447 = vpop.permute.xlu0 %1446
  %vm1448 = vcmask 752640
  %v1449 = vsel %vm1448, %v1435, %v1437
  %v1450 = vsel %vm1448, %v1437, %v1439
  %v1451 = vsel %vm1448, %v1439, %v1441
  %v1452 = vsel %vm1448, %v1441, %v1443
  %v1453 = vsel %vm1448, %v1443, %v1445
  %v1454 = vsel %vm1448, %v1445, %v1447
  %v1456 = vsel %vm125, %v60, 0
  %v1459 = vsel %vm129, %v1449, 0
  %v1462 = vsel %vm129, %v1450, 0
  %v1465 = vsel %vm129, %v1451, 0
  %v1468 = vsel %vm129, %v1452, 0
  %v1471 = vsel %vm129, %v1453, 0
  %v1474 = vsel %vm129, %v1454, 0
  %1476 = vmatprep.subr.bf16.mxu0 0
  %1477 = vmatpush1.bf16.msra.mxu0 0
  %1478 = vmatprep.subr.bf16.mxu0 0
  %1479 = vmatpush1.bf16.msra.mxu0 0
  %1480 = vmatprep.subr.bf16.mxu0 0
  %1481 = vmatpush1.bf16.msra.mxu0 0
  %1482 = vmatprep.subr.bf16.mxu0 0
  %1483 = vmatpush1.bf16.msra.mxu0 0
  %1484 = vmatprep.subr.bf16.mxu0 0
  %1485 = vmatpush1.bf16.msra.mxu0 0
  %1486 = vmatprep.subr.bf16.mxu0 0
  %1487 = vmatpush1.bf16.msra.mxu0 0
  %1488 = vmatprep.subr.bf16.mxu0 0
  %1489 = vmatpush1.bf16.msra.mxu0 0
  %1490 = vmatprep.subr.bf16.mxu0 %v1462
  %1491 = vmatpush1.bf16.msra.mxu0 %v1459
  %1492 = vmatprep.subr.bf16.mxu0 0
  %1493 = vmatpush2.bf16.msra.mxu0 0
  %1494 = vmatprep.subr.bf16.mxu0 0
  %1495 = vmatpush2.bf16.msra.mxu0 0
  %1496 = vmatprep.subr.bf16.mxu0 0
  %1497 = vmatpush2.bf16.msra.mxu0 0
  %1498 = vmatprep.subr.bf16.mxu0 0
  %1499 = vmatpush2.bf16.msra.mxu0 0
  %1500 = vmatprep.subr.bf16.mxu0 0
  %1501 = vmatpush2.bf16.msra.mxu0 0
  %1502 = vmatprep.subr.bf16.mxu0 0
  %1503 = vmatpush2.bf16.msra.mxu0 0
  %1504 = vmatprep.subr.bf16.mxu0 0
  %1505 = vmatpush2.bf16.msra.mxu0 0
  %1506 = vmatprep.subr.bf16.mxu0 0
  %1507 = vmatpush2.bf16.msra.mxu0 0
  %1508 = vmatprep.mubr.bf16.mxu0 0
  %1509 = vmatmul.mubr.bf16.gmra.mxu0 %v1456
  %v1510 = vpop.f32.mrf.mxu0
  %v1511 = vadd.f32 0.0, %v1510
  %v1512 = vpop.f32.mrf.mxu0
  %v1513 = vadd.f32 0.0, %v1512
  %v1514 = vpop.f32.mrf.mxu0
  %v1515 = vpop.f32.mrf.mxu0
  %1516 = vdwg.mxu0
  %1517 = vmatprep.subr.bf16.mxu0 0
  %1518 = vmatpush1.bf16.msra.mxu0 0
  %1519 = vmatprep.subr.bf16.mxu0 0
  %1520 = vmatpush1.bf16.msra.mxu0 0
  %1521 = vmatprep.subr.bf16.mxu0 0
  %1522 = vmatpush1.bf16.msra.mxu0 0
  %1523 = vmatprep.subr.bf16.mxu0 0
  %1524 = vmatpush1.bf16.msra.mxu0 0
  %1525 = vmatprep.subr.bf16.mxu0 0
  %1526 = vmatpush1.bf16.msra.mxu0 0
  %1527 = vmatprep.subr.bf16.mxu0 0
  %1528 = vmatpush1.bf16.msra.mxu0 0
  %1529 = vmatprep.subr.bf16.mxu0 0
  %1530 = vmatpush1.bf16.msra.mxu0 0
  %1531 = vmatprep.subr.bf16.mxu0 %v1468
  %1532 = vmatpush1.bf16.msra.mxu0 %v1465
  %1533 = vmatprep.subr.bf16.mxu0 0
  %1534 = vmatpush2.bf16.msra.mxu0 0
  %1535 = vmatprep.subr.bf16.mxu0 0
  %1536 = vmatpush2.bf16.msra.mxu0 0
  %1537 = vmatprep.subr.bf16.mxu0 0
  %1538 = vmatpush2.bf16.msra.mxu0 0
  %1539 = vmatprep.subr.bf16.mxu0 0
  %1540 = vmatpush2.bf16.msra.mxu0 0
  %1541 = vmatprep.subr.bf16.mxu0 0
  %1542 = vmatpush2.bf16.msra.mxu0 0
  %1543 = vmatprep.subr.bf16.mxu0 0
  %1544 = vmatpush2.bf16.msra.mxu0 0
  %1545 = vmatprep.subr.bf16.mxu0 0
  %1546 = vmatpush2.bf16.msra.mxu0 0
  %1547 = vmatprep.subr.bf16.mxu0 0
  %1548 = vmatpush2.bf16.msra.mxu0 0
  %1549 = vmatprep.mubr.bf16.mxu0 0
  %1550 = vmatmul.mubr.bf16.gmra.mxu0 %v1456
  %v1551 = vpop.f32.mrf.mxu0
  %v1552 = vadd.f32 0.0, %v1551
  %v1553 = vpop.f32.mrf.mxu0
  %v1554 = vadd.f32 0.0, %v1553
  %v1555 = vpop.f32.mrf.mxu0
  %v1556 = vpop.f32.mrf.mxu0
  %1557 = vdwg.mxu0
  %1558 = vmatprep.subr.bf16.mxu0 0
  %1559 = vmatpush1.bf16.msra.mxu0 0
  %1560 = vmatprep.subr.bf16.mxu0 0
  %1561 = vmatpush1.bf16.msra.mxu0 0
  %1562 = vmatprep.subr.bf16.mxu0 0
  %1563 = vmatpush1.bf16.msra.mxu0 0
  %1564 = vmatprep.subr.bf16.mxu0 0
  %1565 = vmatpush1.bf16.msra.mxu0 0
  %1566 = vmatprep.subr.bf16.mxu0 0
  %1567 = vmatpush1.bf16.msra.mxu0 0
  %1568 = vmatprep.subr.bf16.mxu0 0
  %1569 = vmatpush1.bf16.msra.mxu0 0
  %1570 = vmatprep.subr.bf16.mxu0 0
  %1571 = vmatpush1.bf16.msra.mxu0 0
  %1572 = vmatprep.subr.bf16.mxu0 %v1474
  %1573 = vmatpush1.bf16.msra.mxu0 %v1471
  %1574 = vmatprep.subr.bf16.mxu0 0
  %1575 = vmatpush2.bf16.msra.mxu0 0
  %1576 = vmatprep.subr.bf16.mxu0 0
  %1577 = vmatpush2.bf16.msra.mxu0 0
  %1578 = vmatprep.subr.bf16.mxu0 0
  %1579 = vmatpush2.bf16.msra.mxu0 0
  %1580 = vmatprep.subr.bf16.mxu0 0
  %1581 = vmatpush2.bf16.msra.mxu0 0
  %1582 = vmatprep.subr.bf16.mxu0 0
  %1583 = vmatpush2.bf16.msra.mxu0 0
  %1584 = vmatprep.subr.bf16.mxu0 0
  %1585 = vmatpush2.bf16.msra.mxu0 0
  %1586 = vmatprep.subr.bf16.mxu0 0
  %1587 = vmatpush2.bf16.msra.mxu0 0
  %1588 = vmatprep.subr.bf16.mxu0 0
  %1589 = vmatpush2.bf16.msra.mxu0 0
  %1590 = vmatprep.mubr.bf16.mxu0 0
  %1591 = vmatmul.mubr.bf16.gmra.mxu0 %v1456
  %v1592 = vpop.f32.mrf.mxu0
  %v1593 = vadd.f32 0.0, %v1592
  %v1594 = vpop.f32.mrf.mxu0
  %v1595 = vadd.f32 0.0, %v1594
  %v1596 = vpop.f32.mrf.mxu0
  %v1597 = vpop.f32.mrf.mxu0
  %1598 = vdwg.mxu0
  %1599 = vrot.lane.b32.xlu0 %v78, 91
  %v1600 = vpop.permute.xlu0 %1599
  %1601 = vrot.lane.b32.xlu0 %v86, 91
  %v1602 = vpop.permute.xlu0 %1601
  %1603 = vrot.lane.b32.xlu0 %v85, 91
  %v1604 = vpop.permute.xlu0 %1603
  %1605 = vrot.lane.b32.xlu0 %v87, 91
  %v1606 = vpop.permute.xlu0 %1605
  %1607 = vrot.lane.b32.xlu0 %v95, 91
  %v1608 = vpop.permute.xlu0 %1607
  %1609 = vrot.lane.b32.xlu0 %v103, 91
  %v1610 = vpop.permute.xlu0 %1609
  %1611 = vrot.lane.b32.xlu0 %v102, 91
  %v1612 = vpop.permute.xlu0 %1611
  %vm1613 = vcmask 744448
  %v1614 = vsel %vm1613, %v1600, %v1602
  %v1615 = vsel %vm1613, %v1602, %v1604
  %v1616 = vsel %vm1613, %v1604, %v1606
  %v1617 = vsel %vm1613, %v1606, %v1608
  %v1618 = vsel %vm1613, %v1608, %v1610
  %v1619 = vsel %vm1613, %v1610, %v1612
  %v1621 = vsel %vm125, %v59, 0
  %v1624 = vsel %vm129, %v1614, 0
  %v1627 = vsel %vm129, %v1615, 0
  %v1630 = vsel %vm129, %v1616, 0
  %v1633 = vsel %vm129, %v1617, 0
  %v1636 = vsel %vm129, %v1618, 0
  %v1639 = vsel %vm129, %v1619, 0
  %1641 = vmatprep.subr.bf16.mxu0 0
  %1642 = vmatpush1.bf16.msra.mxu0 0
  %1643 = vmatprep.subr.bf16.mxu0 0
  %1644 = vmatpush1.bf16.msra.mxu0 0
  %1645 = vmatprep.subr.bf16.mxu0 0
  %1646 = vmatpush1.bf16.msra.mxu0 0
  %1647 = vmatprep.subr.bf16.mxu0 0
  %1648 = vmatpush1.bf16.msra.mxu0 0
  %1649 = vmatprep.subr.bf16.mxu0 0
  %1650 = vmatpush1.bf16.msra.mxu0 0
  %1651 = vmatprep.subr.bf16.mxu0 0
  %1652 = vmatpush1.bf16.msra.mxu0 0
  %1653 = vmatprep.subr.bf16.mxu0 0
  %1654 = vmatpush1.bf16.msra.mxu0 0
  %1655 = vmatprep.subr.bf16.mxu0 %v1627
  %1656 = vmatpush1.bf16.msra.mxu0 %v1624
  %1657 = vmatprep.subr.bf16.mxu0 0
  %1658 = vmatpush2.bf16.msra.mxu0 0
  %1659 = vmatprep.subr.bf16.mxu0 0
  %1660 = vmatpush2.bf16.msra.mxu0 0
  %1661 = vmatprep.subr.bf16.mxu0 0
  %1662 = vmatpush2.bf16.msra.mxu0 0
  %1663 = vmatprep.subr.bf16.mxu0 0
  %1664 = vmatpush2.bf16.msra.mxu0 0
  %1665 = vmatprep.subr.bf16.mxu0 0
  %1666 = vmatpush2.bf16.msra.mxu0 0
  %1667 = vmatprep.subr.bf16.mxu0 0
  %1668 = vmatpush2.bf16.msra.mxu0 0
  %1669 = vmatprep.subr.bf16.mxu0 0
  %1670 = vmatpush2.bf16.msra.mxu0 0
  %1671 = vmatprep.subr.bf16.mxu0 0
  %1672 = vmatpush2.bf16.msra.mxu0 0
  %1673 = vmatprep.mubr.bf16.mxu0 0
  %1674 = vmatmul.mubr.bf16.gmra.mxu0 %v1621
  %v1675 = vpop.f32.mrf.mxu0
  %v1676 = vadd.f32 %v1511, %v1675
  %v1677 = vpop.f32.mrf.mxu0
  %v1678 = vadd.f32 %v1513, %v1677
  %v1679 = vpop.f32.mrf.mxu0
  %v1680 = vpop.f32.mrf.mxu0
  %1681 = vdwg.mxu0
  %1682 = vmatprep.subr.bf16.mxu0 0
  %1683 = vmatpush1.bf16.msra.mxu0 0
  %1684 = vmatprep.subr.bf16.mxu0 0
  %1685 = vmatpush1.bf16.msra.mxu0 0
  %1686 = vmatprep.subr.bf16.mxu0 0
  %1687 = vmatpush1.bf16.msra.mxu0 0
  %1688 = vmatprep.subr.bf16.mxu0 0
  %1689 = vmatpush1.bf16.msra.mxu0 0
  %1690 = vmatprep.subr.bf16.mxu0 0
  %1691 = vmatpush1.bf16.msra.mxu0 0
  %1692 = vmatprep.subr.bf16.mxu0 0
  %1693 = vmatpush1.bf16.msra.mxu0 0
  %1694 = vmatprep.subr.bf16.mxu0 0
  %1695 = vmatpush1.bf16.msra.mxu0 0
  %1696 = vmatprep.subr.bf16.mxu0 %v1633
  %1697 = vmatpush1.bf16.msra.mxu0 %v1630
  %1698 = vmatprep.subr.bf16.mxu0 0
  %1699 = vmatpush2.bf16.msra.mxu0 0
  %1700 = vmatprep.subr.bf16.mxu0 0
  %1701 = vmatpush2.bf16.msra.mxu0 0
  %1702 = vmatprep.subr.bf16.mxu0 0
  %1703 = vmatpush2.bf16.msra.mxu0 0
  %1704 = vmatprep.subr.bf16.mxu0 0
  %1705 = vmatpush2.bf16.msra.mxu0 0
  %1706 = vmatprep.subr.bf16.mxu0 0
  %1707 = vmatpush2.bf16.msra.mxu0 0
  %1708 = vmatprep.subr.bf16.mxu0 0
  %1709 = vmatpush2.bf16.msra.mxu0 0
  %1710 = vmatprep.subr.bf16.mxu0 0
  %1711 = vmatpush2.bf16.msra.mxu0 0
  %1712 = vmatprep.subr.bf16.mxu0 0
  %1713 = vmatpush2.bf16.msra.mxu0 0
  %1714 = vmatprep.mubr.bf16.mxu0 0
  %1715 = vmatmul.mubr.bf16.gmra.mxu0 %v1621
  %v1716 = vpop.f32.mrf.mxu0
  %v1717 = vadd.f32 %v1552, %v1716
  %v1718 = vpop.f32.mrf.mxu0
  %v1719 = vadd.f32 %v1554, %v1718
  %v1720 = vpop.f32.mrf.mxu0
  %v1721 = vpop.f32.mrf.mxu0
  %1722 = vdwg.mxu0
  %1723 = vmatprep.subr.bf16.mxu0 0
  %1724 = vmatpush1.bf16.msra.mxu0 0
  %1725 = vmatprep.subr.bf16.mxu0 0
  %1726 = vmatpush1.bf16.msra.mxu0 0
  %1727 = vmatprep.subr.bf16.mxu0 0
  %1728 = vmatpush1.bf16.msra.mxu0 0
  %1729 = vmatprep.subr.bf16.mxu0 0
  %1730 = vmatpush1.bf16.msra.mxu0 0
  %1731 = vmatprep.subr.bf16.mxu0 0
  %1732 = vmatpush1.bf16.msra.mxu0 0
  %1733 = vmatprep.subr.bf16.mxu0 0
  %1734 = vmatpush1.bf16.msra.mxu0 0
  %1735 = vmatprep.subr.bf16.mxu0 0
  %1736 = vmatpush1.bf16.msra.mxu0 0
  %1737 = vmatprep.subr.bf16.mxu0 %v1639
  %1738 = vmatpush1.bf16.msra.mxu0 %v1636
  %1739 = vmatprep.subr.bf16.mxu0 0
  %1740 = vmatpush2.bf16.msra.mxu0 0
  %1741 = vmatprep.subr.bf16.mxu0 0
  %1742 = vmatpush2.bf16.msra.mxu0 0
  %1743 = vmatprep.subr.bf16.mxu0 0
  %1744 = vmatpush2.bf16.msra.mxu0 0
  %1745 = vmatprep.subr.bf16.mxu0 0
  %1746 = vmatpush2.bf16.msra.mxu0 0
  %1747 = vmatprep.subr.bf16.mxu0 0
  %1748 = vmatpush2.bf16.msra.mxu0 0
  %1749 = vmatprep.subr.bf16.mxu0 0
  %1750 = vmatpush2.bf16.msra.mxu0 0
  %1751 = vmatprep.subr.bf16.mxu0 0
  %1752 = vmatpush2.bf16.msra.mxu0 0
  %1753 = vmatprep.subr.bf16.mxu0 0
  %1754 = vmatpush2.bf16.msra.mxu0 0
  %1755 = vmatprep.mubr.bf16.mxu0 0
  %1756 = vmatmul.mubr.bf16.gmra.mxu0 %v1621
  %v1757 = vpop.f32.mrf.mxu0
  %v1758 = vadd.f32 %v1593, %v1757
  %v1759 = vpop.f32.mrf.mxu0
  %v1760 = vadd.f32 %v1595, %v1759
  %v1761 = vpop.f32.mrf.mxu0
  %v1762 = vpop.f32.mrf.mxu0
  %1763 = vdwg.mxu0
  %v1765 = vsel %vm125, %v61, 0
  %1767 = vmatprep.subr.bf16.mxu0 0
  %1768 = vmatpush1.bf16.msra.mxu0 0
  %1769 = vmatprep.subr.bf16.mxu0 0
  %1770 = vmatpush1.bf16.msra.mxu0 0
  %1771 = vmatprep.subr.bf16.mxu0 0
  %1772 = vmatpush1.bf16.msra.mxu0 0
  %1773 = vmatprep.subr.bf16.mxu0 0
  %1774 = vmatpush1.bf16.msra.mxu0 0
  %1775 = vmatprep.subr.bf16.mxu0 0
  %1776 = vmatpush1.bf16.msra.mxu0 0
  %1777 = vmatprep.subr.bf16.mxu0 0
  %1778 = vmatpush1.bf16.msra.mxu0 0
  %1779 = vmatprep.subr.bf16.mxu0 0
  %1780 = vmatpush1.bf16.msra.mxu0 0
  %1781 = vmatprep.subr.bf16.mxu0 %v299
  %1782 = vmatpush1.bf16.msra.mxu0 %v296
  %1783 = vmatprep.subr.bf16.mxu0 0
  %1784 = vmatpush2.bf16.msra.mxu0 0
  %1785 = vmatprep.subr.bf16.mxu0 0
  %1786 = vmatpush2.bf16.msra.mxu0 0
  %1787 = vmatprep.subr.bf16.mxu0 0
  %1788 = vmatpush2.bf16.msra.mxu0 0
  %1789 = vmatprep.subr.bf16.mxu0 0
  %1790 = vmatpush2.bf16.msra.mxu0 0
  %1791 = vmatprep.subr.bf16.mxu0 0
  %1792 = vmatpush2.bf16.msra.mxu0 0
  %1793 = vmatprep.subr.bf16.mxu0 0
  %1794 = vmatpush2.bf16.msra.mxu0 0
  %1795 = vmatprep.subr.bf16.mxu0 0
  %1796 = vmatpush2.bf16.msra.mxu0 0
  %1797 = vmatprep.subr.bf16.mxu0 0
  %1798 = vmatpush2.bf16.msra.mxu0 0
  %1799 = vmatprep.mubr.bf16.mxu0 0
  %1800 = vmatmul.mubr.bf16.gmra.mxu0 %v1765
  %v1801 = vpop.f32.mrf.mxu0
  %v1802 = vadd.f32 0.0, %v1801
  %v1803 = vpop.f32.mrf.mxu0
  %v1804 = vadd.f32 0.0, %v1803
  %v1805 = vpop.f32.mrf.mxu0
  %v1806 = vpop.f32.mrf.mxu0
  %1807 = vdwg.mxu0
  %1808 = vmatprep.subr.bf16.mxu0 0
  %1809 = vmatpush1.bf16.msra.mxu0 0
  %1810 = vmatprep.subr.bf16.mxu0 0
  %1811 = vmatpush1.bf16.msra.mxu0 0
  %1812 = vmatprep.subr.bf16.mxu0 0
  %1813 = vmatpush1.bf16.msra.mxu0 0
  %1814 = vmatprep.subr.bf16.mxu0 0
  %1815 = vmatpush1.bf16.msra.mxu0 0
  %1816 = vmatprep.subr.bf16.mxu0 0
  %1817 = vmatpush1.bf16.msra.mxu0 0
  %1818 = vmatprep.subr.bf16.mxu0 0
  %1819 = vmatpush1.bf16.msra.mxu0 0
  %1820 = vmatprep.subr.bf16.mxu0 0
  %1821 = vmatpush1.bf16.msra.mxu0 0
  %1822 = vmatprep.subr.bf16.mxu0 %v305
  %1823 = vmatpush1.bf16.msra.mxu0 %v302
  %1824 = vmatprep.subr.bf16.mxu0 0
  %1825 = vmatpush2.bf16.msra.mxu0 0
  %1826 = vmatprep.subr.bf16.mxu0 0
  %1827 = vmatpush2.bf16.msra.mxu0 0
  %1828 = vmatprep.subr.bf16.mxu0 0
  %1829 = vmatpush2.bf16.msra.mxu0 0
  %1830 = vmatprep.subr.bf16.mxu0 0
  %1831 = vmatpush2.bf16.msra.mxu0 0
  %1832 = vmatprep.subr.bf16.mxu0 0
  %1833 = vmatpush2.bf16.msra.mxu0 0
  %1834 = vmatprep.subr.bf16.mxu0 0
  %1835 = vmatpush2.bf16.msra.mxu0 0
  %1836 = vmatprep.subr.bf16.mxu0 0
  %1837 = vmatpush2.bf16.msra.mxu0 0
  %1838 = vmatprep.subr.bf16.mxu0 0
  %1839 = vmatpush2.bf16.msra.mxu0 0
  %1840 = vmatprep.mubr.bf16.mxu0 0
  %1841 = vmatmul.mubr.bf16.gmra.mxu0 %v1765
  %v1842 = vpop.f32.mrf.mxu0
  %v1843 = vadd.f32 0.0, %v1842
  %v1844 = vpop.f32.mrf.mxu0
  %v1845 = vadd.f32 0.0, %v1844
  %v1846 = vpop.f32.mrf.mxu0
  %v1847 = vpop.f32.mrf.mxu0
  %1848 = vdwg.mxu0
  %1849 = vmatprep.subr.bf16.mxu0 0
  %1850 = vmatpush1.bf16.msra.mxu0 0
  %1851 = vmatprep.subr.bf16.mxu0 0
  %1852 = vmatpush1.bf16.msra.mxu0 0
  %1853 = vmatprep.subr.bf16.mxu0 0
  %1854 = vmatpush1.bf16.msra.mxu0 0
  %1855 = vmatprep.subr.bf16.mxu0 0
  %1856 = vmatpush1.bf16.msra.mxu0 0
  %1857 = vmatprep.subr.bf16.mxu0 0
  %1858 = vmatpush1.bf16.msra.mxu0 0
  %1859 = vmatprep.subr.bf16.mxu0 0
  %1860 = vmatpush1.bf16.msra.mxu0 0
  %1861 = vmatprep.subr.bf16.mxu0 0
  %1862 = vmatpush1.bf16.msra.mxu0 0
  %1863 = vmatprep.subr.bf16.mxu0 %v311
  %1864 = vmatpush1.bf16.msra.mxu0 %v308
  %1865 = vmatprep.subr.bf16.mxu0 0
  %1866 = vmatpush2.bf16.msra.mxu0 0
  %1867 = vmatprep.subr.bf16.mxu0 0
  %1868 = vmatpush2.bf16.msra.mxu0 0
  %1869 = vmatprep.subr.bf16.mxu0 0
  %1870 = vmatpush2.bf16.msra.mxu0 0
  %1871 = vmatprep.subr.bf16.mxu0 0
  %1872 = vmatpush2.bf16.msra.mxu0 0
  %1873 = vmatprep.subr.bf16.mxu0 0
  %1874 = vmatpush2.bf16.msra.mxu0 0
  %1875 = vmatprep.subr.bf16.mxu0 0
  %1876 = vmatpush2.bf16.msra.mxu0 0
  %1877 = vmatprep.subr.bf16.mxu0 0
  %1878 = vmatpush2.bf16.msra.mxu0 0
  %1879 = vmatprep.subr.bf16.mxu0 0
  %1880 = vmatpush2.bf16.msra.mxu0 0
  %1881 = vmatprep.mubr.bf16.mxu0 0
  %1882 = vmatmul.mubr.bf16.gmra.mxu0 %v1765
  %v1883 = vpop.f32.mrf.mxu0
  %v1884 = vadd.f32 0.0, %v1883
  %v1885 = vpop.f32.mrf.mxu0
  %v1886 = vadd.f32 0.0, %v1885
  %v1887 = vpop.f32.mrf.mxu0
  %v1888 = vpop.f32.mrf.mxu0
  %1889 = vdwg.mxu0
  %v1890 = vadd.f32 %v1676, %v1802
  %v1891 = vadd.f32 %v1678, %v1804
  %v1892 = vadd.f32 %v1717, %v1843
  %v1893 = vadd.f32 %v1719, %v1845
  %v1894 = vadd.f32 %v1758, %v1884
  %v1895 = vadd.f32 %v1760, %v1886
  %v1897 = vsel %vm125, %v62, 0
  %1899 = vmatprep.subr.bf16.mxu0 0
  %1900 = vmatpush1.bf16.msra.mxu0 0
  %1901 = vmatprep.subr.bf16.mxu0 0
  %1902 = vmatpush1.bf16.msra.mxu0 0
  %1903 = vmatprep.subr.bf16.mxu0 0
  %1904 = vmatpush1.bf16.msra.mxu0 0
  %1905 = vmatprep.subr.bf16.mxu0 0
  %1906 = vmatpush1.bf16.msra.mxu0 0
  %1907 = vmatprep.subr.bf16.mxu0 0
  %1908 = vmatpush1.bf16.msra.mxu0 0
  %1909 = vmatprep.subr.bf16.mxu0 0
  %1910 = vmatpush1.bf16.msra.mxu0 0
  %1911 = vmatprep.subr.bf16.mxu0 0
  %1912 = vmatpush1.bf16.msra.mxu0 0
  %1913 = vmatprep.subr.bf16.mxu0 %v134
  %1914 = vmatpush1.bf16.msra.mxu0 %v131
  %1915 = vmatprep.subr.bf16.mxu0 0
  %1916 = vmatpush2.bf16.msra.mxu0 0
  %1917 = vmatprep.subr.bf16.mxu0 0
  %1918 = vmatpush2.bf16.msra.mxu0 0
  %1919 = vmatprep.subr.bf16.mxu0 0
  %1920 = vmatpush2.bf16.msra.mxu0 0
  %1921 = vmatprep.subr.bf16.mxu0 0
  %1922 = vmatpush2.bf16.msra.mxu0 0
  %1923 = vmatprep.subr.bf16.mxu0 0
  %1924 = vmatpush2.bf16.msra.mxu0 0
  %1925 = vmatprep.subr.bf16.mxu0 0
  %1926 = vmatpush2.bf16.msra.mxu0 0
  %1927 = vmatprep.subr.bf16.mxu0 0
  %1928 = vmatpush2.bf16.msra.mxu0 0
  %1929 = vmatprep.subr.bf16.mxu0 0
  %1930 = vmatpush2.bf16.msra.mxu0 0
  %1931 = vmatprep.mubr.bf16.mxu0 0
  %1932 = vmatmul.mubr.bf16.gmra.mxu0 %v1897
  %v1933 = vpop.f32.mrf.mxu0
  %v1934 = vadd.f32 0.0, %v1933
  %v1935 = vpop.f32.mrf.mxu0
  %v1936 = vadd.f32 0.0, %v1935
  %v1937 = vpop.f32.mrf.mxu0
  %v1938 = vpop.f32.mrf.mxu0
  %1939 = vdwg.mxu0
  %1940 = vmatprep.subr.bf16.mxu0 0
  %1941 = vmatpush1.bf16.msra.mxu0 0
  %1942 = vmatprep.subr.bf16.mxu0 0
  %1943 = vmatpush1.bf16.msra.mxu0 0
  %1944 = vmatprep.subr.bf16.mxu0 0
  %1945 = vmatpush1.bf16.msra.mxu0 0
  %1946 = vmatprep.subr.bf16.mxu0 0
  %1947 = vmatpush1.bf16.msra.mxu0 0
  %1948 = vmatprep.subr.bf16.mxu0 0
  %1949 = vmatpush1.bf16.msra.mxu0 0
  %1950 = vmatprep.subr.bf16.mxu0 0
  %1951 = vmatpush1.bf16.msra.mxu0 0
  %1952 = vmatprep.subr.bf16.mxu0 0
  %1953 = vmatpush1.bf16.msra.mxu0 0
  %1954 = vmatprep.subr.bf16.mxu0 %v140
  %1955 = vmatpush1.bf16.msra.mxu0 %v137
  %1956 = vmatprep.subr.bf16.mxu0 0
  %1957 = vmatpush2.bf16.msra.mxu0 0
  %1958 = vmatprep.subr.bf16.mxu0 0
  %1959 = vmatpush2.bf16.msra.mxu0 0
  %1960 = vmatprep.subr.bf16.mxu0 0
  %1961 = vmatpush2.bf16.msra.mxu0 0
  %1962 = vmatprep.subr.bf16.mxu0 0
  %1963 = vmatpush2.bf16.msra.mxu0 0
  %1964 = vmatprep.subr.bf16.mxu0 0
  %1965 = vmatpush2.bf16.msra.mxu0 0
  %1966 = vmatprep.subr.bf16.mxu0 0
  %1967 = vmatpush2.bf16.msra.mxu0 0
  %1968 = vmatprep.subr.bf16.mxu0 0
  %1969 = vmatpush2.bf16.msra.mxu0 0
  %1970 = vmatprep.subr.bf16.mxu0 0
  %1971 = vmatpush2.bf16.msra.mxu0 0
  %1972 = vmatprep.mubr.bf16.mxu0 0
  %1973 = vmatmul.mubr.bf16.gmra.mxu0 %v1897
  %v1974 = vpop.f32.mrf.mxu0
  %v1975 = vadd.f32 0.0, %v1974
  %v1976 = vpop.f32.mrf.mxu0
  %v1977 = vadd.f32 0.0, %v1976
  %v1978 = vpop.f32.mrf.mxu0
  %v1979 = vpop.f32.mrf.mxu0
  %1980 = vdwg.mxu0
  %1981 = vmatprep.subr.bf16.mxu0 0
  %1982 = vmatpush1.bf16.msra.mxu0 0
  %1983 = vmatprep.subr.bf16.mxu0 0
  %1984 = vmatpush1.bf16.msra.mxu0 0
  %1985 = vmatprep.subr.bf16.mxu0 0
  %1986 = vmatpush1.bf16.msra.mxu0 0
  %1987 = vmatprep.subr.bf16.mxu0 0
  %1988 = vmatpush1.bf16.msra.mxu0 0
  %1989 = vmatprep.subr.bf16.mxu0 0
  %1990 = vmatpush1.bf16.msra.mxu0 0
  %1991 = vmatprep.subr.bf16.mxu0 0
  %1992 = vmatpush1.bf16.msra.mxu0 0
  %1993 = vmatprep.subr.bf16.mxu0 0
  %1994 = vmatpush1.bf16.msra.mxu0 0
  %1995 = vmatprep.subr.bf16.mxu0 %v146
  %1996 = vmatpush1.bf16.msra.mxu0 %v143
  %1997 = vmatprep.subr.bf16.mxu0 0
  %1998 = vmatpush2.bf16.msra.mxu0 0
  %1999 = vmatprep.subr.bf16.mxu0 0
  %2000 = vmatpush2.bf16.msra.mxu0 0
  %2001 = vmatprep.subr.bf16.mxu0 0
  %2002 = vmatpush2.bf16.msra.mxu0 0
  %2003 = vmatprep.subr.bf16.mxu0 0
  %2004 = vmatpush2.bf16.msra.mxu0 0
  %2005 = vmatprep.subr.bf16.mxu0 0
  %2006 = vmatpush2.bf16.msra.mxu0 0
  %2007 = vmatprep.subr.bf16.mxu0 0
  %2008 = vmatpush2.bf16.msra.mxu0 0
  %2009 = vmatprep.subr.bf16.mxu0 0
  %2010 = vmatpush2.bf16.msra.mxu0 0
  %2011 = vmatprep.subr.bf16.mxu0 0
  %2012 = vmatpush2.bf16.msra.mxu0 0
  %2013 = vmatprep.mubr.bf16.mxu0 0
  %2014 = vmatmul.mubr.bf16.gmra.mxu0 %v1897
  %v2015 = vpop.f32.mrf.mxu0
  %v2016 = vadd.f32 0.0, %v2015
  %v2017 = vpop.f32.mrf.mxu0
  %v2018 = vadd.f32 0.0, %v2017
  %v2019 = vpop.f32.mrf.mxu0
  %v2020 = vpop.f32.mrf.mxu0
  %2021 = vdwg.mxu0
  %v2022 = vadd.f32 %v1890, %v1934
  %v2023 = vadd.f32 %v1891, %v1936
  %v2024 = vadd.f32 %v1892, %v1975
  %v2025 = vadd.f32 %v1893, %v1977
  %v2026 = vadd.f32 %v1894, %v2016
  %v2027 = vadd.f32 %v1895, %v2018
  %v2028 = vmul.f32 %v2022, %v760
  %v2029 = vmul.f32 %v2023, %v760
  %v2030 = vmul.f32 %v2024, %v760
  %v2031 = vmul.f32 %v2025, %v760
  %v2032 = vmul.f32 %v2026, %v760
  %v2033 = vmul.f32 %v2027, %v760
  %v2034 = vadd.f32 %v2028, %v771
  %v2035 = vadd.f32 %v2029, %v771
  %v2036 = vadd.f32 %v2030, %v771
  %v2037 = vadd.f32 %v2031, %v771
  %v2038 = vadd.f32 %v2032, %v771
  %v2039 = vadd.f32 %v2033, %v771
  %vm2040 = vcmp.ge.f32.partialorder %v2034, 0.0
  %vm2041 = vcmp.ge.f32.partialorder %v2035, 0.0
  %vm2042 = vcmp.ge.f32.partialorder %v2036, 0.0
  %vm2043 = vcmp.ge.f32.partialorder %v2037, 0.0
  %vm2044 = vcmp.ge.f32.partialorder %v2038, 0.0
  %vm2045 = vcmp.ge.f32.partialorder %v2039, 0.0
  %v2046 = vmul.f32 %v2034, 0.2
  %v2047 = vmul.f32 %v2035, 0.2
  %v2048 = vmul.f32 %v2036, 0.2
  %v2049 = vmul.f32 %v2037, 0.2
  %v2050 = vmul.f32 %v2038, 0.2
  %v2051 = vmul.f32 %v2039, 0.2
  %v2052 = vsel %vm2040, %v2034, %v2046
  %v2053 = vsel %vm2041, %v2035, %v2047
  %v2054 = vsel %vm2042, %v2036, %v2048
  %v2055 = vsel %vm2043, %v2037, %v2049
  %v2056 = vsel %vm2044, %v2038, %v2050
  %v2057 = vsel %vm2045, %v2039, %v2051
  %s2058 = scalar_lea.vmem %s5, 96
  %2059 = vst [vmem:[%s2058] sm:$0xff] %v2052
  %2060 = vst [vmem:[%s2058 + $0x8] sm:$0xff] %v2053
  %2061 = vst [vmem:[%s2058 + $0x10] sm:$0xff] %v2054
  %2062 = vst [vmem:[%s2058 + $0x18] sm:$0xff] %v2055
  %2063 = vst [vmem:[%s2058 + $0x20] sm:$0xff] %v2056
  %2064 = vst [vmem:[%s2058 + $0x28] sm:$0xff] %v2057
  %v2066 = vsel %vm125, %v64, 0
  %2068 = vmatprep.subr.bf16.mxu0 0
  %2069 = vmatpush1.bf16.msra.mxu0 0
  %2070 = vmatprep.subr.bf16.mxu0 0
  %2071 = vmatpush1.bf16.msra.mxu0 0
  %2072 = vmatprep.subr.bf16.mxu0 0
  %2073 = vmatpush1.bf16.msra.mxu0 0
  %2074 = vmatprep.subr.bf16.mxu0 0
  %2075 = vmatpush1.bf16.msra.mxu0 0
  %2076 = vmatprep.subr.bf16.mxu0 0
  %2077 = vmatpush1.bf16.msra.mxu0 0
  %2078 = vmatprep.subr.bf16.mxu0 0
  %2079 = vmatpush1.bf16.msra.mxu0 0
  %2080 = vmatprep.subr.bf16.mxu0 0
  %2081 = vmatpush1.bf16.msra.mxu0 0
  %2082 = vmatprep.subr.bf16.mxu0 %v1627
  %2083 = vmatpush1.bf16.msra.mxu0 %v1624
  %2084 = vmatprep.subr.bf16.mxu0 0
  %2085 = vmatpush2.bf16.msra.mxu0 0
  %2086 = vmatprep.subr.bf16.mxu0 0
  %2087 = vmatpush2.bf16.msra.mxu0 0
  %2088 = vmatprep.subr.bf16.mxu0 0
  %2089 = vmatpush2.bf16.msra.mxu0 0
  %2090 = vmatprep.subr.bf16.mxu0 0
  %2091 = vmatpush2.bf16.msra.mxu0 0
  %2092 = vmatprep.subr.bf16.mxu0 0
  %2093 = vmatpush2.bf16.msra.mxu0 0
  %2094 = vmatprep.subr.bf16.mxu0 0
  %2095 = vmatpush2.bf16.msra.mxu0 0
  %2096 = vmatprep.subr.bf16.mxu0 0
  %2097 = vmatpush2.bf16.msra.mxu0 0
  %2098 = vmatprep.subr.bf16.mxu0 0
  %2099 = vmatpush2.bf16.msra.mxu0 0
  %2100 = vmatprep.mubr.bf16.mxu0 0
  %2101 = vmatmul.mubr.bf16.gmra.mxu0 %v2066
  %v2102 = vpop.f32.mrf.mxu0
  %v2103 = vadd.f32 0.0, %v2102
  %v2104 = vpop.f32.mrf.mxu0
  %v2105 = vadd.f32 0.0, %v2104
  %v2106 = vpop.f32.mrf.mxu0
  %v2107 = vpop.f32.mrf.mxu0
  %2108 = vdwg.mxu0
  %2109 = vmatprep.subr.bf16.mxu0 0
  %2110 = vmatpush1.bf16.msra.mxu0 0
  %2111 = vmatprep.subr.bf16.mxu0 0
  %2112 = vmatpush1.bf16.msra.mxu0 0
  %2113 = vmatprep.subr.bf16.mxu0 0
  %2114 = vmatpush1.bf16.msra.mxu0 0
  %2115 = vmatprep.subr.bf16.mxu0 0
  %2116 = vmatpush1.bf16.msra.mxu0 0
  %2117 = vmatprep.subr.bf16.mxu0 0
  %2118 = vmatpush1.bf16.msra.mxu0 0
  %2119 = vmatprep.subr.bf16.mxu0 0
  %2120 = vmatpush1.bf16.msra.mxu0 0
  %2121 = vmatprep.subr.bf16.mxu0 0
  %2122 = vmatpush1.bf16.msra.mxu0 0
  %2123 = vmatprep.subr.bf16.mxu0 %v1633
  %2124 = vmatpush1.bf16.msra.mxu0 %v1630
  %2125 = vmatprep.subr.bf16.mxu0 0
  %2126 = vmatpush2.bf16.msra.mxu0 0
  %2127 = vmatprep.subr.bf16.mxu0 0
  %2128 = vmatpush2.bf16.msra.mxu0 0
  %2129 = vmatprep.subr.bf16.mxu0 0
  %2130 = vmatpush2.bf16.msra.mxu0 0
  %2131 = vmatprep.subr.bf16.mxu0 0
  %2132 = vmatpush2.bf16.msra.mxu0 0
  %2133 = vmatprep.subr.bf16.mxu0 0
  %2134 = vmatpush2.bf16.msra.mxu0 0
  %2135 = vmatprep.subr.bf16.mxu0 0
  %2136 = vmatpush2.bf16.msra.mxu0 0
  %2137 = vmatprep.subr.bf16.mxu0 0
  %2138 = vmatpush2.bf16.msra.mxu0 0
  %2139 = vmatprep.subr.bf16.mxu0 0
  %2140 = vmatpush2.bf16.msra.mxu0 0
  %2141 = vmatprep.mubr.bf16.mxu0 0
  %2142 = vmatmul.mubr.bf16.gmra.mxu0 %v2066
  %v2143 = vpop.f32.mrf.mxu0
  %v2144 = vadd.f32 0.0, %v2143
  %v2145 = vpop.f32.mrf.mxu0
  %v2146 = vadd.f32 0.0, %v2145
  %v2147 = vpop.f32.mrf.mxu0
  %v2148 = vpop.f32.mrf.mxu0
  %2149 = vdwg.mxu0
  %2150 = vmatprep.subr.bf16.mxu0 0
  %2151 = vmatpush1.bf16.msra.mxu0 0
  %2152 = vmatprep.subr.bf16.mxu0 0
  %2153 = vmatpush1.bf16.msra.mxu0 0
  %2154 = vmatprep.subr.bf16.mxu0 0
  %2155 = vmatpush1.bf16.msra.mxu0 0
  %2156 = vmatprep.subr.bf16.mxu0 0
  %2157 = vmatpush1.bf16.msra.mxu0 0
  %2158 = vmatprep.subr.bf16.mxu0 0
  %2159 = vmatpush1.bf16.msra.mxu0 0
  %2160 = vmatprep.subr.bf16.mxu0 0
  %2161 = vmatpush1.bf16.msra.mxu0 0
  %2162 = vmatprep.subr.bf16.mxu0 0
  %2163 = vmatpush1.bf16.msra.mxu0 0
  %2164 = vmatprep.subr.bf16.mxu0 %v1639
  %2165 = vmatpush1.bf16.msra.mxu0 %v1636
  %2166 = vmatprep.subr.bf16.mxu0 0
  %2167 = vmatpush2.bf16.msra.mxu0 0
  %2168 = vmatprep.subr.bf16.mxu0 0
  %2169 = vmatpush2.bf16.msra.mxu0 0
  %2170 = vmatprep.subr.bf16.mxu0 0
  %2171 = vmatpush2.bf16.msra.mxu0 0
  %2172 = vmatprep.subr.bf16.mxu0 0
  %2173 = vmatpush2.bf16.msra.mxu0 0
  %2174 = vmatprep.subr.bf16.mxu0 0
  %2175 = vmatpush2.bf16.msra.mxu0 0
  %2176 = vmatprep.subr.bf16.mxu0 0
  %2177 = vmatpush2.bf16.msra.mxu0 0
  %2178 = vmatprep.subr.bf16.mxu0 0
  %2179 = vmatpush2.bf16.msra.mxu0 0
  %2180 = vmatprep.subr.bf16.mxu0 0
  %2181 = vmatpush2.bf16.msra.mxu0 0
  %2182 = vmatprep.mubr.bf16.mxu0 0
  %2183 = vmatmul.mubr.bf16.gmra.mxu0 %v2066
  %v2184 = vpop.f32.mrf.mxu0
  %v2185 = vadd.f32 0.0, %v2184
  %v2186 = vpop.f32.mrf.mxu0
  %v2187 = vadd.f32 0.0, %v2186
  %v2188 = vpop.f32.mrf.mxu0
  %v2189 = vpop.f32.mrf.mxu0
  %2190 = vdwg.mxu0
  %2191 = vrot.lane.b32.xlu0 %v78, 90
  %v2192 = vpop.permute.xlu0 %2191
  %2193 = vrot.lane.b32.xlu0 %v86, 90
  %v2194 = vpop.permute.xlu0 %2193
  %2195 = vrot.lane.b32.xlu0 %v85, 90
  %v2196 = vpop.permute.xlu0 %2195
  %2197 = vrot.lane.b32.xlu0 %v87, 90
  %v2198 = vpop.permute.xlu0 %2197
  %2199 = vrot.lane.b32.xlu0 %v95, 90
  %v2200 = vpop.permute.xlu0 %2199
  %2201 = vrot.lane.b32.xlu0 %v103, 90
  %v2202 = vpop.permute.xlu0 %2201
  %2203 = vrot.lane.b32.xlu0 %v102, 90
  %v2204 = vpop.permute.xlu0 %2203
  %vm2205 = vcmask 736256
  %v2206 = vsel %vm2205, %v2192, %v2194
  %v2207 = vsel %vm2205, %v2194, %v2196
  %v2208 = vsel %vm2205, %v2196, %v2198
  %v2209 = vsel %vm2205, %v2198, %v2200
  %v2210 = vsel %vm2205, %v2200, %v2202
  %v2211 = vsel %vm2205, %v2202, %v2204
  %v2213 = vsel %vm125, %v63, 0
  %v2216 = vsel %vm129, %v2206, 0
  %v2219 = vsel %vm129, %v2207, 0
  %v2222 = vsel %vm129, %v2208, 0
  %v2225 = vsel %vm129, %v2209, 0
  %v2228 = vsel %vm129, %v2210, 0
  %v2231 = vsel %vm129, %v2211, 0
  %2233 = vmatprep.subr.bf16.mxu0 0
  %2234 = vmatpush1.bf16.msra.mxu0 0
  %2235 = vmatprep.subr.bf16.mxu0 0
  %2236 = vmatpush1.bf16.msra.mxu0 0
  %2237 = vmatprep.subr.bf16.mxu0 0
  %2238 = vmatpush1.bf16.msra.mxu0 0
  %2239 = vmatprep.subr.bf16.mxu0 0
  %2240 = vmatpush1.bf16.msra.mxu0 0
  %2241 = vmatprep.subr.bf16.mxu0 0
  %2242 = vmatpush1.bf16.msra.mxu0 0
  %2243 = vmatprep.subr.bf16.mxu0 0
  %2244 = vmatpush1.bf16.msra.mxu0 0
  %2245 = vmatprep.subr.bf16.mxu0 0
  %2246 = vmatpush1.bf16.msra.mxu0 0
  %2247 = vmatprep.subr.bf16.mxu0 %v2219
  %2248 = vmatpush1.bf16.msra.mxu0 %v2216
  %2249 = vmatprep.subr.bf16.mxu0 0
  %2250 = vmatpush2.bf16.msra.mxu0 0
  %2251 = vmatprep.subr.bf16.mxu0 0
  %2252 = vmatpush2.bf16.msra.mxu0 0
  %2253 = vmatprep.subr.bf16.mxu0 0
  %2254 = vmatpush2.bf16.msra.mxu0 0
  %2255 = vmatprep.subr.bf16.mxu0 0
  %2256 = vmatpush2.bf16.msra.mxu0 0
  %2257 = vmatprep.subr.bf16.mxu0 0
  %2258 = vmatpush2.bf16.msra.mxu0 0
  %2259 = vmatprep.subr.bf16.mxu0 0
  %2260 = vmatpush2.bf16.msra.mxu0 0
  %2261 = vmatprep.subr.bf16.mxu0 0
  %2262 = vmatpush2.bf16.msra.mxu0 0
  %2263 = vmatprep.subr.bf16.mxu0 0
  %2264 = vmatpush2.bf16.msra.mxu0 0
  %2265 = vmatprep.mubr.bf16.mxu0 0
  %2266 = vmatmul.mubr.bf16.gmra.mxu0 %v2213
  %v2267 = vpop.f32.mrf.mxu0
  %v2268 = vadd.f32 %v2103, %v2267
  %v2269 = vpop.f32.mrf.mxu0
  %v2270 = vadd.f32 %v2105, %v2269
  %v2271 = vpop.f32.mrf.mxu0
  %v2272 = vpop.f32.mrf.mxu0
  %2273 = vdwg.mxu0
  %2274 = vmatprep.subr.bf16.mxu0 0
  %2275 = vmatpush1.bf16.msra.mxu0 0
  %2276 = vmatprep.subr.bf16.mxu0 0
  %2277 = vmatpush1.bf16.msra.mxu0 0
  %2278 = vmatprep.subr.bf16.mxu0 0
  %2279 = vmatpush1.bf16.msra.mxu0 0
  %2280 = vmatprep.subr.bf16.mxu0 0
  %2281 = vmatpush1.bf16.msra.mxu0 0
  %2282 = vmatprep.subr.bf16.mxu0 0
  %2283 = vmatpush1.bf16.msra.mxu0 0
  %2284 = vmatprep.subr.bf16.mxu0 0
  %2285 = vmatpush1.bf16.msra.mxu0 0
  %2286 = vmatprep.subr.bf16.mxu0 0
  %2287 = vmatpush1.bf16.msra.mxu0 0
  %2288 = vmatprep.subr.bf16.mxu0 %v2225
  %2289 = vmatpush1.bf16.msra.mxu0 %v2222
  %2290 = vmatprep.subr.bf16.mxu0 0
  %2291 = vmatpush2.bf16.msra.mxu0 0
  %2292 = vmatprep.subr.bf16.mxu0 0
  %2293 = vmatpush2.bf16.msra.mxu0 0
  %2294 = vmatprep.subr.bf16.mxu0 0
  %2295 = vmatpush2.bf16.msra.mxu0 0
  %2296 = vmatprep.subr.bf16.mxu0 0
  %2297 = vmatpush2.bf16.msra.mxu0 0
  %2298 = vmatprep.subr.bf16.mxu0 0
  %2299 = vmatpush2.bf16.msra.mxu0 0
  %2300 = vmatprep.subr.bf16.mxu0 0
  %2301 = vmatpush2.bf16.msra.mxu0 0
  %2302 = vmatprep.subr.bf16.mxu0 0
  %2303 = vmatpush2.bf16.msra.mxu0 0
  %2304 = vmatprep.subr.bf16.mxu0 0
  %2305 = vmatpush2.bf16.msra.mxu0 0
  %2306 = vmatprep.mubr.bf16.mxu0 0
  %2307 = vmatmul.mubr.bf16.gmra.mxu0 %v2213
  %v2308 = vpop.f32.mrf.mxu0
  %v2309 = vadd.f32 %v2144, %v2308
  %v2310 = vpop.f32.mrf.mxu0
  %v2311 = vadd.f32 %v2146, %v2310
  %v2312 = vpop.f32.mrf.mxu0
  %v2313 = vpop.f32.mrf.mxu0
  %2314 = vdwg.mxu0
  %2315 = vmatprep.subr.bf16.mxu0 0
  %2316 = vmatpush1.bf16.msra.mxu0 0
  %2317 = vmatprep.subr.bf16.mxu0 0
  %2318 = vmatpush1.bf16.msra.mxu0 0
  %2319 = vmatprep.subr.bf16.mxu0 0
  %2320 = vmatpush1.bf16.msra.mxu0 0
  %2321 = vmatprep.subr.bf16.mxu0 0
  %2322 = vmatpush1.bf16.msra.mxu0 0
  %2323 = vmatprep.subr.bf16.mxu0 0
  %2324 = vmatpush1.bf16.msra.mxu0 0
  %2325 = vmatprep.subr.bf16.mxu0 0
  %2326 = vmatpush1.bf16.msra.mxu0 0
  %2327 = vmatprep.subr.bf16.mxu0 0
  %2328 = vmatpush1.bf16.msra.mxu0 0
  %2329 = vmatprep.subr.bf16.mxu0 %v2231
  %2330 = vmatpush1.bf16.msra.mxu0 %v2228
  %2331 = vmatprep.subr.bf16.mxu0 0
  %2332 = vmatpush2.bf16.msra.mxu0 0
  %2333 = vmatprep.subr.bf16.mxu0 0
  %2334 = vmatpush2.bf16.msra.mxu0 0
  %2335 = vmatprep.subr.bf16.mxu0 0
  %2336 = vmatpush2.bf16.msra.mxu0 0
  %2337 = vmatprep.subr.bf16.mxu0 0
  %2338 = vmatpush2.bf16.msra.mxu0 0
  %2339 = vmatprep.subr.bf16.mxu0 0
  %2340 = vmatpush2.bf16.msra.mxu0 0
  %2341 = vmatprep.subr.bf16.mxu0 0
  %2342 = vmatpush2.bf16.msra.mxu0 0
  %2343 = vmatprep.subr.bf16.mxu0 0
  %2344 = vmatpush2.bf16.msra.mxu0 0
  %2345 = vmatprep.subr.bf16.mxu0 0
  %2346 = vmatpush2.bf16.msra.mxu0 0
  %2347 = vmatprep.mubr.bf16.mxu0 0
  %2348 = vmatmul.mubr.bf16.gmra.mxu0 %v2213
  %v2349 = vpop.f32.mrf.mxu0
  %v2350 = vadd.f32 %v2185, %v2349
  %v2351 = vpop.f32.mrf.mxu0
  %v2352 = vadd.f32 %v2187, %v2351
  %v2353 = vpop.f32.mrf.mxu0
  %v2354 = vpop.f32.mrf.mxu0
  %2355 = vdwg.mxu0
  %v2357 = vsel %vm125, %v65, 0
  %2359 = vmatprep.subr.bf16.mxu0 0
  %2360 = vmatpush1.bf16.msra.mxu0 0
  %2361 = vmatprep.subr.bf16.mxu0 0
  %2362 = vmatpush1.bf16.msra.mxu0 0
  %2363 = vmatprep.subr.bf16.mxu0 0
  %2364 = vmatpush1.bf16.msra.mxu0 0
  %2365 = vmatprep.subr.bf16.mxu0 0
  %2366 = vmatpush1.bf16.msra.mxu0 0
  %2367 = vmatprep.subr.bf16.mxu0 0
  %2368 = vmatpush1.bf16.msra.mxu0 0
  %2369 = vmatprep.subr.bf16.mxu0 0
  %2370 = vmatpush1.bf16.msra.mxu0 0
  %2371 = vmatprep.subr.bf16.mxu0 0
  %2372 = vmatpush1.bf16.msra.mxu0 0
  %2373 = vmatprep.subr.bf16.mxu0 %v957
  %2374 = vmatpush1.bf16.msra.mxu0 %v954
  %2375 = vmatprep.subr.bf16.mxu0 0
  %2376 = vmatpush2.bf16.msra.mxu0 0
  %2377 = vmatprep.subr.bf16.mxu0 0
  %2378 = vmatpush2.bf16.msra.mxu0 0
  %2379 = vmatprep.subr.bf16.mxu0 0
  %2380 = vmatpush2.bf16.msra.mxu0 0
  %2381 = vmatprep.subr.bf16.mxu0 0
  %2382 = vmatpush2.bf16.msra.mxu0 0
  %2383 = vmatprep.subr.bf16.mxu0 0
  %2384 = vmatpush2.bf16.msra.mxu0 0
  %2385 = vmatprep.subr.bf16.mxu0 0
  %2386 = vmatpush2.bf16.msra.mxu0 0
  %2387 = vmatprep.subr.bf16.mxu0 0
  %2388 = vmatpush2.bf16.msra.mxu0 0
  %2389 = vmatprep.subr.bf16.mxu0 0
  %2390 = vmatpush2.bf16.msra.mxu0 0
  %2391 = vmatprep.mubr.bf16.mxu0 0
  %2392 = vmatmul.mubr.bf16.gmra.mxu0 %v2357
  %v2393 = vpop.f32.mrf.mxu0
  %v2394 = vadd.f32 0.0, %v2393
  %v2395 = vpop.f32.mrf.mxu0
  %v2396 = vadd.f32 0.0, %v2395
  %v2397 = vpop.f32.mrf.mxu0
  %v2398 = vpop.f32.mrf.mxu0
  %2399 = vdwg.mxu0
  %2400 = vmatprep.subr.bf16.mxu0 0
  %2401 = vmatpush1.bf16.msra.mxu0 0
  %2402 = vmatprep.subr.bf16.mxu0 0
  %2403 = vmatpush1.bf16.msra.mxu0 0
  %2404 = vmatprep.subr.bf16.mxu0 0
  %2405 = vmatpush1.bf16.msra.mxu0 0
  %2406 = vmatprep.subr.bf16.mxu0 0
  %2407 = vmatpush1.bf16.msra.mxu0 0
  %2408 = vmatprep.subr.bf16.mxu0 0
  %2409 = vmatpush1.bf16.msra.mxu0 0
  %2410 = vmatprep.subr.bf16.mxu0 0
  %2411 = vmatpush1.bf16.msra.mxu0 0
  %2412 = vmatprep.subr.bf16.mxu0 0
  %2413 = vmatpush1.bf16.msra.mxu0 0
  %2414 = vmatprep.subr.bf16.mxu0 %v963
  %2415 = vmatpush1.bf16.msra.mxu0 %v960
  %2416 = vmatprep.subr.bf16.mxu0 0
  %2417 = vmatpush2.bf16.msra.mxu0 0
  %2418 = vmatprep.subr.bf16.mxu0 0
  %2419 = vmatpush2.bf16.msra.mxu0 0
  %2420 = vmatprep.subr.bf16.mxu0 0
  %2421 = vmatpush2.bf16.msra.mxu0 0
  %2422 = vmatprep.subr.bf16.mxu0 0
  %2423 = vmatpush2.bf16.msra.mxu0 0
  %2424 = vmatprep.subr.bf16.mxu0 0
  %2425 = vmatpush2.bf16.msra.mxu0 0
  %2426 = vmatprep.subr.bf16.mxu0 0
  %2427 = vmatpush2.bf16.msra.mxu0 0
  %2428 = vmatprep.subr.bf16.mxu0 0
  %2429 = vmatpush2.bf16.msra.mxu0 0
  %2430 = vmatprep.subr.bf16.mxu0 0
  %2431 = vmatpush2.bf16.msra.mxu0 0
  %2432 = vmatprep.mubr.bf16.mxu0 0
  %2433 = vmatmul.mubr.bf16.gmra.mxu0 %v2357
  %v2434 = vpop.f32.mrf.mxu0
  %v2435 = vadd.f32 0.0, %v2434
  %v2436 = vpop.f32.mrf.mxu0
  %v2437 = vadd.f32 0.0, %v2436
  %v2438 = vpop.f32.mrf.mxu0
  %v2439 = vpop.f32.mrf.mxu0
  %2440 = vdwg.mxu0
  %2441 = vmatprep.subr.bf16.mxu0 0
  %2442 = vmatpush1.bf16.msra.mxu0 0
  %2443 = vmatprep.subr.bf16.mxu0 0
  %2444 = vmatpush1.bf16.msra.mxu0 0
  %2445 = vmatprep.subr.bf16.mxu0 0
  %2446 = vmatpush1.bf16.msra.mxu0 0
  %2447 = vmatprep.subr.bf16.mxu0 0
  %2448 = vmatpush1.bf16.msra.mxu0 0
  %2449 = vmatprep.subr.bf16.mxu0 0
  %2450 = vmatpush1.bf16.msra.mxu0 0
  %2451 = vmatprep.subr.bf16.mxu0 0
  %2452 = vmatpush1.bf16.msra.mxu0 0
  %2453 = vmatprep.subr.bf16.mxu0 0
  %2454 = vmatpush1.bf16.msra.mxu0 0
  %2455 = vmatprep.subr.bf16.mxu0 %v969
  %2456 = vmatpush1.bf16.msra.mxu0 %v966
  %2457 = vmatprep.subr.bf16.mxu0 0
  %2458 = vmatpush2.bf16.msra.mxu0 0
  %2459 = vmatprep.subr.bf16.mxu0 0
  %2460 = vmatpush2.bf16.msra.mxu0 0
  %2461 = vmatprep.subr.bf16.mxu0 0
  %2462 = vmatpush2.bf16.msra.mxu0 0
  %2463 = vmatprep.subr.bf16.mxu0 0
  %2464 = vmatpush2.bf16.msra.mxu0 0
  %2465 = vmatprep.subr.bf16.mxu0 0
  %2466 = vmatpush2.bf16.msra.mxu0 0
  %2467 = vmatprep.subr.bf16.mxu0 0
  %2468 = vmatpush2.bf16.msra.mxu0 0
  %2469 = vmatprep.subr.bf16.mxu0 0
  %2470 = vmatpush2.bf16.msra.mxu0 0
  %2471 = vmatprep.subr.bf16.mxu0 0
  %2472 = vmatpush2.bf16.msra.mxu0 0
  %2473 = vmatprep.mubr.bf16.mxu0 0
  %2474 = vmatmul.mubr.bf16.gmra.mxu0 %v2357
  %v2475 = vpop.f32.mrf.mxu0
  %v2476 = vadd.f32 0.0, %v2475
  %v2477 = vpop.f32.mrf.mxu0
  %v2478 = vadd.f32 0.0, %v2477
  %v2479 = vpop.f32.mrf.mxu0
  %v2480 = vpop.f32.mrf.mxu0
  %2481 = vdwg.mxu0
  %v2482 = vadd.f32 %v2268, %v2394
  %v2483 = vadd.f32 %v2270, %v2396
  %v2484 = vadd.f32 %v2309, %v2435
  %v2485 = vadd.f32 %v2311, %v2437
  %v2486 = vadd.f32 %v2350, %v2476
  %v2487 = vadd.f32 %v2352, %v2478
  %v2489 = vsel %vm125, %v66, 0
  %2491 = vmatprep.subr.bf16.mxu0 0
  %2492 = vmatpush1.bf16.msra.mxu0 0
  %2493 = vmatprep.subr.bf16.mxu0 0
  %2494 = vmatpush1.bf16.msra.mxu0 0
  %2495 = vmatprep.subr.bf16.mxu0 0
  %2496 = vmatpush1.bf16.msra.mxu0 0
  %2497 = vmatprep.subr.bf16.mxu0 0
  %2498 = vmatpush1.bf16.msra.mxu0 0
  %2499 = vmatprep.subr.bf16.mxu0 0
  %2500 = vmatpush1.bf16.msra.mxu0 0
  %2501 = vmatprep.subr.bf16.mxu0 0
  %2502 = vmatpush1.bf16.msra.mxu0 0
  %2503 = vmatprep.subr.bf16.mxu0 0
  %2504 = vmatpush1.bf16.msra.mxu0 0
  %2505 = vmatprep.subr.bf16.mxu0 %v299
  %2506 = vmatpush1.bf16.msra.mxu0 %v296
  %2507 = vmatprep.subr.bf16.mxu0 0
  %2508 = vmatpush2.bf16.msra.mxu0 0
  %2509 = vmatprep.subr.bf16.mxu0 0
  %2510 = vmatpush2.bf16.msra.mxu0 0
  %2511 = vmatprep.subr.bf16.mxu0 0
  %2512 = vmatpush2.bf16.msra.mxu0 0
  %2513 = vmatprep.subr.bf16.mxu0 0
  %2514 = vmatpush2.bf16.msra.mxu0 0
  %2515 = vmatprep.subr.bf16.mxu0 0
  %2516 = vmatpush2.bf16.msra.mxu0 0
  %2517 = vmatprep.subr.bf16.mxu0 0
  %2518 = vmatpush2.bf16.msra.mxu0 0
  %2519 = vmatprep.subr.bf16.mxu0 0
  %2520 = vmatpush2.bf16.msra.mxu0 0
  %2521 = vmatprep.subr.bf16.mxu0 0
  %2522 = vmatpush2.bf16.msra.mxu0 0
  %2523 = vmatprep.mubr.bf16.mxu0 0
  %2524 = vmatmul.mubr.bf16.gmra.mxu0 %v2489
  %v2525 = vpop.f32.mrf.mxu0
  %v2526 = vadd.f32 0.0, %v2525
  %v2527 = vpop.f32.mrf.mxu0
  %v2528 = vadd.f32 0.0, %v2527
  %v2529 = vpop.f32.mrf.mxu0
  %v2530 = vpop.f32.mrf.mxu0
  %2531 = vdwg.mxu0
  %2532 = vmatprep.subr.bf16.mxu0 0
  %2533 = vmatpush1.bf16.msra.mxu0 0
  %2534 = vmatprep.subr.bf16.mxu0 0
  %2535 = vmatpush1.bf16.msra.mxu0 0
  %2536 = vmatprep.subr.bf16.mxu0 0
  %2537 = vmatpush1.bf16.msra.mxu0 0
  %2538 = vmatprep.subr.bf16.mxu0 0
  %2539 = vmatpush1.bf16.msra.mxu0 0
  %2540 = vmatprep.subr.bf16.mxu0 0
  %2541 = vmatpush1.bf16.msra.mxu0 0
  %2542 = vmatprep.subr.bf16.mxu0 0
  %2543 = vmatpush1.bf16.msra.mxu0 0
  %2544 = vmatprep.subr.bf16.mxu0 0
  %2545 = vmatpush1.bf16.msra.mxu0 0
  %2546 = vmatprep.subr.bf16.mxu0 %v305
  %2547 = vmatpush1.bf16.msra.mxu0 %v302
  %2548 = vmatprep.subr.bf16.mxu0 0
  %2549 = vmatpush2.bf16.msra.mxu0 0
  %2550 = vmatprep.subr.bf16.mxu0 0
  %2551 = vmatpush2.bf16.msra.mxu0 0
  %2552 = vmatprep.subr.bf16.mxu0 0
  %2553 = vmatpush2.bf16.msra.mxu0 0
  %2554 = vmatprep.subr.bf16.mxu0 0
  %2555 = vmatpush2.bf16.msra.mxu0 0
  %2556 = vmatprep.subr.bf16.mxu0 0
  %2557 = vmatpush2.bf16.msra.mxu0 0
  %2558 = vmatprep.subr.bf16.mxu0 0
  %2559 = vmatpush2.bf16.msra.mxu0 0
  %2560 = vmatprep.subr.bf16.mxu0 0
  %2561 = vmatpush2.bf16.msra.mxu0 0
  %2562 = vmatprep.subr.bf16.mxu0 0
  %2563 = vmatpush2.bf16.msra.mxu0 0
  %2564 = vmatprep.mubr.bf16.mxu0 0
  %2565 = vmatmul.mubr.bf16.gmra.mxu0 %v2489
  %v2566 = vpop.f32.mrf.mxu0
  %v2567 = vadd.f32 0.0, %v2566
  %v2568 = vpop.f32.mrf.mxu0
  %v2569 = vadd.f32 0.0, %v2568
  %v2570 = vpop.f32.mrf.mxu0
  %v2571 = vpop.f32.mrf.mxu0
  %2572 = vdwg.mxu0
  %2573 = vmatprep.subr.bf16.mxu0 0
  %2574 = vmatpush1.bf16.msra.mxu0 0
  %2575 = vmatprep.subr.bf16.mxu0 0
  %2576 = vmatpush1.bf16.msra.mxu0 0
  %2577 = vmatprep.subr.bf16.mxu0 0
  %2578 = vmatpush1.bf16.msra.mxu0 0
  %2579 = vmatprep.subr.bf16.mxu0 0
  %2580 = vmatpush1.bf16.msra.mxu0 0
  %2581 = vmatprep.subr.bf16.mxu0 0
  %2582 = vmatpush1.bf16.msra.mxu0 0
  %2583 = vmatprep.subr.bf16.mxu0 0
  %2584 = vmatpush1.bf16.msra.mxu0 0
  %2585 = vmatprep.subr.bf16.mxu0 0
  %2586 = vmatpush1.bf16.msra.mxu0 0
  %2587 = vmatprep.subr.bf16.mxu0 %v311
  %2588 = vmatpush1.bf16.msra.mxu0 %v308
  %2589 = vmatprep.subr.bf16.mxu0 0
  %2590 = vmatpush2.bf16.msra.mxu0 0
  %2591 = vmatprep.subr.bf16.mxu0 0
  %2592 = vmatpush2.bf16.msra.mxu0 0
  %2593 = vmatprep.subr.bf16.mxu0 0
  %2594 = vmatpush2.bf16.msra.mxu0 0
  %2595 = vmatprep.subr.bf16.mxu0 0
  %2596 = vmatpush2.bf16.msra.mxu0 0
  %2597 = vmatprep.subr.bf16.mxu0 0
  %2598 = vmatpush2.bf16.msra.mxu0 0
  %2599 = vmatprep.subr.bf16.mxu0 0
  %2600 = vmatpush2.bf16.msra.mxu0 0
  %2601 = vmatprep.subr.bf16.mxu0 0
  %2602 = vmatpush2.bf16.msra.mxu0 0
  %2603 = vmatprep.subr.bf16.mxu0 0
  %2604 = vmatpush2.bf16.msra.mxu0 0
  %2605 = vmatprep.mubr.bf16.mxu0 0
  %2606 = vmatmul.mubr.bf16.gmra.mxu0 %v2489
  %v2607 = vpop.f32.mrf.mxu0
  %v2608 = vadd.f32 0.0, %v2607
  %v2609 = vpop.f32.mrf.mxu0
  %v2610 = vadd.f32 0.0, %v2609
  %v2611 = vpop.f32.mrf.mxu0
  %v2612 = vpop.f32.mrf.mxu0
  %2613 = vdwg.mxu0
  %v2614 = vadd.f32 %v2482, %v2526
  %v2615 = vadd.f32 %v2483, %v2528
  %v2616 = vadd.f32 %v2484, %v2567
  %v2617 = vadd.f32 %v2485, %v2569
  %v2618 = vadd.f32 %v2486, %v2608
  %v2619 = vadd.f32 %v2487, %v2610
  %v2620 = vmul.f32 %v2614, %v760
  %v2621 = vmul.f32 %v2615, %v760
  %v2622 = vmul.f32 %v2616, %v760
  %v2623 = vmul.f32 %v2617, %v760
  %v2624 = vmul.f32 %v2618, %v760
  %v2625 = vmul.f32 %v2619, %v760
  %v2626 = vadd.f32 %v2620, %v771
  %v2627 = vadd.f32 %v2621, %v771
  %v2628 = vadd.f32 %v2622, %v771
  %v2629 = vadd.f32 %v2623, %v771
  %v2630 = vadd.f32 %v2624, %v771
  %v2631 = vadd.f32 %v2625, %v771
  %vm2632 = vcmp.ge.f32.partialorder %v2626, 0.0
  %vm2633 = vcmp.ge.f32.partialorder %v2627, 0.0
  %vm2634 = vcmp.ge.f32.partialorder %v2628, 0.0
  %vm2635 = vcmp.ge.f32.partialorder %v2629, 0.0
  %vm2636 = vcmp.ge.f32.partialorder %v2630, 0.0
  %vm2637 = vcmp.ge.f32.partialorder %v2631, 0.0
  %v2638 = vmul.f32 %v2626, 0.2
  %v2639 = vmul.f32 %v2627, 0.2
  %v2640 = vmul.f32 %v2628, 0.2
  %v2641 = vmul.f32 %v2629, 0.2
  %v2642 = vmul.f32 %v2630, 0.2
  %v2643 = vmul.f32 %v2631, 0.2
  %v2644 = vsel %vm2632, %v2626, %v2638
  %v2645 = vsel %vm2633, %v2627, %v2639
  %v2646 = vsel %vm2634, %v2628, %v2640
  %v2647 = vsel %vm2635, %v2629, %v2641
  %v2648 = vsel %vm2636, %v2630, %v2642
  %v2649 = vsel %vm2637, %v2631, %v2643
  %s2650 = scalar_lea.vmem %s5, 144
  %2651 = vst [vmem:[%s2650] sm:$0xff] %v2644
  %2652 = vst [vmem:[%s2650 + $0x8] sm:$0xff] %v2645
  %2653 = vst [vmem:[%s2650 + $0x10] sm:$0xff] %v2646
  %2654 = vst [vmem:[%s2650 + $0x18] sm:$0xff] %v2647
  %2655 = vst [vmem:[%s2650 + $0x20] sm:$0xff] %v2648
  %2656 = vst [vmem:[%s2650 + $0x28] sm:$0xff] %v2649
  // Predicated region
  $region22: #{trans_conv_block.3} parent=0 // pred_check
    _
  $region23: #{trans_conv_block.3} parent=0 // pred_check_branch
    %2658 = sbr.rel (0) target = $region25
  $region24: #{trans_conv_block.3} parent=0 // pred_region
    _
  $region25: #{trans_conv_block.3} parent=0 // pred_fallthru
    _
  // Predicated region
  $region26: #{trans_conv_block.3} parent=0 // pred_check
    _
  $region27: #{trans_conv_block.3} parent=0 // pred_check_branch
    %2660 = sbr.rel (0) target = $region29
  $region28: #{trans_conv_block.3} parent=0 // pred_region
    _
  $region29: #{trans_conv_block.3} parent=0 // pred_fallthru
    _

// kernel: trans_conv_block.2
$region0: #{trans_conv_block.2}
  #allocation0 [shape = 'u32[]', space=smem, size = 0x4, offset = 0x4, fixed_abs, tag = 'smem constant byte address 0x4 - core index']
  #allocation1 [shape = 'u32[144,128]{1,0:T(1,128)}', space=vmem, size = 0x12000, scoped, tag = 'internal scratch']
  #allocation2 [shape = 'bf16[4,896]{1,0:T(4,128)(2,1)}', space=vmem, size = 0x1c00, scoped, tag = 'scratch operand']
  %s0 = inlined_call_operand.vmem [shape: bf16[4,1536], index: 0, kind: input, shape index: {}, may-alias: {0,1}]
  %s1 = inlined_call_operand.vmem [shape: bf16[4,1536], index: 1, kind: input, shape index: {}, may-alias: {0,1}]
  %s2 = inlined_call_operand.vmem [shape: f32[1,1536], index: 2, kind: input, shape index: {}]
  %s3 = inlined_call_operand.vmem [shape: bf16[16,8,4], index: 3, kind: input, shape index: {}]
  %s4 = inlined_call_operand.vmem [shape: f32[1,8,1], index: 4, kind: output, shape index: {0}]
  %s5 = inlined_call_operand.vmem [shape: f32[1,8,1], index: 5, kind: output, shape index: {1}]
  %6 = xla_tuple %s4, %s5
  %s7 = sld [smem:[#allocation0]]
  $region38: #{trans_conv_block.2} parent=0
    _
  %s9 = ssub.s32 1, %s7
  %s10 = scalar_select 0, %s9, %s7
  // Predicated region
  $region2: #{trans_conv_block.2} parent=0 // pred_check
    _
  $region3: #{trans_conv_block.2} parent=0 // pred_check_branch
    %12 = sbr.rel (0) target = $region5
  $region4: #{trans_conv_block.2} parent=0 // pred_region
    %s13 = sadd.s32 0, 0
    %s14 = smul.u32 6, %s13
    %p15 = scmp.lt.s32.totalorder %s14, 11
    %s16 = scalar_select %p15, %s14, 11
    %s17 = smul.addr %s16, 2
    %s18 = scalar_lea.vmem %s0, %s17
    %s19 = sadd.s32 0, 0
    %s20 = smul.u32 6, %s19
  $region5: #{trans_conv_block.2} parent=0 // pred_fallthru
    _
  // Predicated region
  $region6: #{trans_conv_block.2} parent=0 // pred_check
    _
  $region7: #{trans_conv_block.2} parent=0 // pred_check_branch
    %22 = sbr.rel (0) target = $region9
  $region8: #{trans_conv_block.2} parent=0 // pred_region
    %s23 = sadd.s32 0, 0
    %s24 = sadd.s32 %s23, 1
    %s25 = smul.u32 6, %s24
    %p26 = scmp.lt.s32.totalorder %s25, 11
    %s27 = scalar_select %p26, %s25, 11
    %s28 = smul.addr %s27, 2
    %s29 = scalar_lea.vmem %s1, %s28
    %s30 = sadd.s32 0, 0
    %s31 = sadd.s32 %s30, 1
    %s32 = smul.u32 6, %s31
  $region9: #{trans_conv_block.2} parent=0 // pred_fallthru
    _
  // Predicated region
  $region10: #{trans_conv_block.2} parent=0 // pred_check
    _
  $region11: #{trans_conv_block.2} parent=0 // pred_check_branch
    %34 = sbr.rel (0) target = $region13
  $region12: #{trans_conv_block.2} parent=0 // pred_region
    %s35 = sadd.s32 0, 0
    %s36 = smul.u32 6, %s35
    %p37 = scmp.lt.s32.totalorder %s36, 11
    %s38 = scalar_select %p37, %s36, 11
    %s39 = scalar_lea.vmem %s2, %s38
    %s40 = sadd.s32 0, 0
    %s41 = smul.u32 6, %s40
  $region13: #{trans_conv_block.2} parent=0 // pred_fallthru
    _
  // Predicated region
  $region14: #{trans_conv_block.2} parent=0 // pred_check
    _
  $region15: #{trans_conv_block.2} parent=0 // pred_check_branch
    %43 = sbr.rel (0) target = $region17
  $region16: #{trans_conv_block.2} parent=0 // pred_region
    _
  $region17: #{trans_conv_block.2} parent=0 // pred_fallthru
    _
  %s44 = sadd.s32 0, 0
  %s45 = smul.u32 6, %s44
  %p46 = scmp.lt.s32.totalorder %s45, 11
  %s47 = scalar_select %p46, %s45, 11
  %s48 = smul.addr %s47, 2
  %s49 = scalar_lea.vmem %s0, %s48
  %s50 = sadd.s32 0, 0
  %s51 = sadd.s32 %s50, 1
  %s52 = smul.u32 6, %s51
  %p53 = scmp.lt.s32.totalorder %s52, 11
  %s54 = scalar_select %p53, %s52, 11
  %s55 = smul.addr %s54, 2
  %s56 = scalar_lea.vmem %s1, %s55
  %s57 = sadd.s32 0, 0
  %s58 = smul.u32 6, %s57
  %p59 = scmp.lt.s32.totalorder %s58, 11
  %s60 = scalar_select %p59, %s58, 11
  %s61 = scalar_lea.vmem %s2, %s60
  %s62 = sadd.s32 0, 0
  %s63 = smul.u32 6, %s62
  %p64 = scmp.lt.s32.totalorder %s63, 11
  %s65 = scalar_select %p64, %s63, 11
  %s66 = smul.addr %s65, 2
  %s67 = scalar_lea.vmem %s0, %s66
  %s68 = sadd.s32 0, 0
  %s69 = smul.u32 6, %s68
  %s70 = sadd.s32 0, 0
  %s71 = sadd.s32 %s70, 1
  %s72 = smul.u32 6, %s71
  %p73 = scmp.lt.s32.totalorder %s72, 11
  %s74 = scalar_select %p73, %s72, 11
  %s75 = smul.addr %s74, 2
  %s76 = scalar_lea.vmem %s1, %s75
  %s77 = sadd.s32 0, 0
  %s78 = sadd.s32 %s77, 1
  %s79 = smul.u32 6, %s78
  %s80 = sadd.s32 0, 0
  %s81 = smul.u32 6, %s80
  %p82 = scmp.lt.s32.totalorder %s81, 11
  %s83 = scalar_select %p82, %s81, 11
  %s84 = scalar_lea.vmem %s2, %s83
  %s85 = sadd.s32 0, 0
  %s86 = smul.u32 6, %s85
  %p88 = scmp.eq.s32.totalorder 0, 0
  // Predicated region
  $region18: #{trans_conv_block.2} parent=0 // pred_check
    %p89 = pneg %p88
  $region19: #{trans_conv_block.2} parent=0 // pred_check_branch
    %91 = sbr.rel (%p89) target = $region21
  $region20: #{trans_conv_block.2} parent=0 // pred_region
    %vm92 = vcmask 7168
    %93 = vst.msk [vmem:[%s4] sm:$0xff] %vm92, 0.0
    %94 = vst.msk [vmem:[%s5] sm:$0xff] %vm92, 0.0
  $region21: #{trans_conv_block.2} parent=0 // pred_fallthru
    _
  %v95 = vld [vmem:[%s67] sm:$0xff]
  %v96 = vld [vmem:[%s67 + $0x8] sm:$0xf]
  %97 = vst [vmem:[#allocation2] sm:$0xff] %v95
  %98 = vst [vmem:[#allocation2 + $0x8] sm:$0xf] %v96
  %v99 = vld [vmem:[%s76] sm:$0x3]
  %100 = vst [vmem:[#allocation2 + $0xc] sm:$0x3] %v99
  %v101 = vld [vmem:[#allocation2] sm:$0xff]
  %v102 = vld [vmem:[#allocation2 + $0x8] sm:$0x3f]
  %v103 = vld [vmem:[%s3] sm:$0xf]
  %v104 = vld [vmem:[%s3 + $0x4] sm:$0xf]
  %v105 = vld [vmem:[%s3 + $0x8] sm:$0xf]
  %v106 = vld [vmem:[%s3 + $0xc] sm:$0xf]
  %v107 = vld [vmem:[%s3 + $0x10] sm:$0xf]
  %v108 = vld [vmem:[%s3 + $0x14] sm:$0xf]
  %v109 = vld [vmem:[%s3 + $0x18] sm:$0xf]
  %v110 = vld [vmem:[%s3 + $0x1c] sm:$0xf]
  %v111 = vld [vmem:[%s3 + $0x20] sm:$0xf]
  %v112 = vld [vmem:[%s3 + $0x24] sm:$0xf]
  %v113 = vld [vmem:[%s3 + $0x28] sm:$0xf]
  %v114 = vld [vmem:[%s3 + $0x2c] sm:$0xf]
  %v115 = vld [vmem:[%s3 + $0x30] sm:$0xf]
  %v116 = vld [vmem:[%s3 + $0x34] sm:$0xf]
  %v117 = vld [vmem:[%s3 + $0x38] sm:$0xf]
  %v118 = vld [vmem:[%s3 + $0x3c] sm:$0xf]
  %v119 = vld [vmem:[%s84] sm:$0x3f]
  %v122 = vcombine.high %v101, %v101
  %v124 = vunpack.c.l.s4 1983009808
  %v125 = vunpack.c.0.s8 %v124
  %v126 = vlaneseq
  %v127 = vshrl.u32 %v126, 7
  %v128 = vsub.s32 %v125, %v127
  %v129 = vrot.slane %v101, %v128
  %v131 = vunpack.c.l.s4 1983009808
  %v132 = vunpack.c.0.s8 %v131
  %v133 = vlaneseq
  %v134 = vshrl.u32 %v133, 7
  %v135 = vsub.s32 %v132, %v134
  %v136 = vrot.slane %v122, %v135
  %v137 = vcombine.high %v129, %v129
  %v138 = vcombine.high %v136, %v136
  %v139 = vcombine.high %v102, %v102
  %v141 = vunpack.c.l.s4 1983009808
  %v142 = vunpack.c.0.s8 %v141
  %v143 = vlaneseq
  %v144 = vshrl.u32 %v143, 7
  %v145 = vsub.s32 %v142, %v144
  %v146 = vrot.slane %v102, %v145
  %v148 = vunpack.c.l.s4 1983009808
  %v149 = vunpack.c.0.s8 %v148
  %v150 = vlaneseq
  %v151 = vshrl.u32 %v150, 7
  %v152 = vsub.s32 %v149, %v151
  %v153 = vrot.slane %v139, %v152
  %v154 = vcombine.high %v146, %v146
  %155 = vrot.lane.b32.xlu0 %v129, 110
  %v156 = vpop.permute.xlu0 %155
  %157 = vrot.lane.b32.xlu0 %v137, 110
  %v158 = vpop.permute.xlu0 %157
  %159 = vrot.lane.b32.xlu0 %v136, 110
  %v160 = vpop.permute.xlu0 %159
  %161 = vrot.lane.b32.xlu0 %v138, 110
  %v162 = vpop.permute.xlu0 %161
  %163 = vrot.lane.b32.xlu0 %v146, 110
  %v164 = vpop.permute.xlu0 %163
  %165 = vrot.lane.b32.xlu0 %v154, 110
  %v166 = vpop.permute.xlu0 %165
  %167 = vrot.lane.b32.xlu0 %v153, 110
  %v168 = vpop.permute.xlu0 %167
  %vm169 = vcmask 900096
  %v170 = vsel %vm169, %v156, %v158
  %v171 = vsel %vm169, %v158, %v160
  %v172 = vsel %vm169, %v160, %v162
  %v173 = vsel %vm169, %v162, %v164
  %v174 = vsel %vm169, %v164, %v166
  %v175 = vsel %vm169, %v166, %v168
  %vm176 = vcmask 31744
  %v178 = vsel %vm176, %v104, 0
  %vm180 = vcmask 1041408
  %v182 = vsel %vm180, %v170, 0
  %v185 = vsel %vm180, %v171, 0
  %v188 = vsel %vm180, %v172, 0
  %v191 = vsel %vm180, %v173, 0
  %v194 = vsel %vm180, %v174, 0
  %v197 = vsel %vm180, %v175, 0
  %199 = vmatprep.subr.bf16.mxu0 0
  %200 = vmatpush1.bf16.msra.mxu0 0
  %201 = vmatprep.subr.bf16.mxu0 0
  %202 = vmatpush1.bf16.msra.mxu0 0
  %203 = vmatprep.subr.bf16.mxu0 0
  %204 = vmatpush1.bf16.msra.mxu0 0
  %205 = vmatprep.subr.bf16.mxu0 0
  %206 = vmatpush1.bf16.msra.mxu0 0
  %207 = vmatprep.subr.bf16.mxu0 0
  %208 = vmatpush1.bf16.msra.mxu0 0
  %209 = vmatprep.subr.bf16.mxu0 0
  %210 = vmatpush1.bf16.msra.mxu0 0
  %211 = vmatprep.subr.bf16.mxu0 0
  %212 = vmatpush1.bf16.msra.mxu0 0
  %213 = vmatprep.subr.bf16.mxu0 %v185
  %214 = vmatpush1.bf16.msra.mxu0 %v182
  %215 = vmatprep.subr.bf16.mxu0 0
  %216 = vmatpush2.bf16.msra.mxu0 0
  %217 = vmatprep.subr.bf16.mxu0 0
  %218 = vmatpush2.bf16.msra.mxu0 0
  %219 = vmatprep.subr.bf16.mxu0 0
  %220 = vmatpush2.bf16.msra.mxu0 0
  %221 = vmatprep.subr.bf16.mxu0 0
  %222 = vmatpush2.bf16.msra.mxu0 0
  %223 = vmatprep.subr.bf16.mxu0 0
  %224 = vmatpush2.bf16.msra.mxu0 0
  %225 = vmatprep.subr.bf16.mxu0 0
  %226 = vmatpush2.bf16.msra.mxu0 0
  %227 = vmatprep.subr.bf16.mxu0 0
  %228 = vmatpush2.bf16.msra.mxu0 0
  %229 = vmatprep.subr.bf16.mxu0 0
  %230 = vmatpush2.bf16.msra.mxu0 0
  %231 = vmatprep.mubr.bf16.mxu0 0
  %232 = vmatmul.mubr.bf16.gmra.mxu0 %v178
  %v233 = vpop.f32.mrf.mxu0
  %v234 = vadd.f32 0.0, %v233
  %v235 = vpop.f32.mrf.mxu0
  %v236 = vadd.f32 0.0, %v235
  %v237 = vpop.f32.mrf.mxu0
  %v238 = vpop.f32.mrf.mxu0
  %239 = vdwg.mxu0
  %240 = vmatprep.subr.bf16.mxu0 0
  %241 = vmatpush1.bf16.msra.mxu0 0
  %242 = vmatprep.subr.bf16.mxu0 0
  %243 = vmatpush1.bf16.msra.mxu0 0
  %244 = vmatprep.subr.bf16.mxu0 0
  %245 = vmatpush1.bf16.msra.mxu0 0
  %246 = vmatprep.subr.bf16.mxu0 0
  %247 = vmatpush1.bf16.msra.mxu0 0
  %248 = vmatprep.subr.bf16.mxu0 0
  %249 = vmatpush1.bf16.msra.mxu0 0
  %250 = vmatprep.subr.bf16.mxu0 0
  %251 = vmatpush1.bf16.msra.mxu0 0
  %252 = vmatprep.subr.bf16.mxu0 0
  %253 = vmatpush1.bf16.msra.mxu0 0
  %254 = vmatprep.subr.bf16.mxu0 %v191
  %255 = vmatpush1.bf16.msra.mxu0 %v188
  %256 = vmatprep.subr.bf16.mxu0 0
  %257 = vmatpush2.bf16.msra.mxu0 0
  %258 = vmatprep.subr.bf16.mxu0 0
  %259 = vmatpush2.bf16.msra.mxu0 0
  %260 = vmatprep.subr.bf16.mxu0 0
  %261 = vmatpush2.bf16.msra.mxu0 0
  %262 = vmatprep.subr.bf16.mxu0 0
  %263 = vmatpush2.bf16.msra.mxu0 0
  %264 = vmatprep.subr.bf16.mxu0 0
  %265 = vmatpush2.bf16.msra.mxu0 0
  %266 = vmatprep.subr.bf16.mxu0 0
  %267 = vmatpush2.bf16.msra.mxu0 0
  %268 = vmatprep.subr.bf16.mxu0 0
  %269 = vmatpush2.bf16.msra.mxu0 0
  %270 = vmatprep.subr.bf16.mxu0 0
  %271 = vmatpush2.bf16.msra.mxu0 0
  %272 = vmatprep.mubr.bf16.mxu0 0
  %273 = vmatmul.mubr.bf16.gmra.mxu0 %v178
  %v274 = vpop.f32.mrf.mxu0
  %v275 = vadd.f32 0.0, %v274
  %v276 = vpop.f32.mrf.mxu0
  %v277 = vadd.f32 0.0, %v276
  %v278 = vpop.f32.mrf.mxu0
  %v279 = vpop.f32.mrf.mxu0
  %280 = vdwg.mxu0
  %281 = vmatprep.subr.bf16.mxu0 0
  %282 = vmatpush1.bf16.msra.mxu0 0
  %283 = vmatprep.subr.bf16.mxu0 0
  %284 = vmatpush1.bf16.msra.mxu0 0
  %285 = vmatprep.subr.bf16.mxu0 0
  %286 = vmatpush1.bf16.msra.mxu0 0
  %287 = vmatprep.subr.bf16.mxu0 0
  %288 = vmatpush1.bf16.msra.mxu0 0
  %289 = vmatprep.subr.bf16.mxu0 0
  %290 = vmatpush1.bf16.msra.mxu0 0
  %291 = vmatprep.subr.bf16.mxu0 0
  %292 = vmatpush1.bf16.msra.mxu0 0
  %293 = vmatprep.subr.bf16.mxu0 0
  %294 = vmatpush1.bf16.msra.mxu0 0
  %295 = vmatprep.subr.bf16.mxu0 %v197
  %296 = vmatpush1.bf16.msra.mxu0 %v194
  %297 = vmatprep.subr.bf16.mxu0 0
  %298 = vmatpush2.bf16.msra.mxu0 0
  %299 = vmatprep.subr.bf16.mxu0 0
  %300 = vmatpush2.bf16.msra.mxu0 0
  %301 = vmatprep.subr.bf16.mxu0 0
  %302 = vmatpush2.bf16.msra.mxu0 0
  %303 = vmatprep.subr.bf16.mxu0 0
  %304 = vmatpush2.bf16.msra.mxu0 0
  %305 = vmatprep.subr.bf16.mxu0 0
  %306 = vmatpush2.bf16.msra.mxu0 0
  %307 = vmatprep.subr.bf16.mxu0 0
  %308 = vmatpush2.bf16.msra.mxu0 0
  %309 = vmatprep.subr.bf16.mxu0 0
  %310 = vmatpush2.bf16.msra.mxu0 0
  %311 = vmatprep.subr.bf16.mxu0 0
  %312 = vmatpush2.bf16.msra.mxu0 0
  %313 = vmatprep.mubr.bf16.mxu0 0
  %314 = vmatmul.mubr.bf16.gmra.mxu0 %v178
  %v315 = vpop.f32.mrf.mxu0
  %v316 = vadd.f32 0.0, %v315
  %v317 = vpop.f32.mrf.mxu0
  %v318 = vadd.f32 0.0, %v317
  %v319 = vpop.f32.mrf.mxu0
  %v320 = vpop.f32.mrf.mxu0
  %321 = vdwg.mxu0
  %322 = vrot.lane.b32.xlu0 %v129, 109
  %v323 = vpop.permute.xlu0 %322
  %324 = vrot.lane.b32.xlu0 %v137, 109
  %v325 = vpop.permute.xlu0 %324
  %326 = vrot.lane.b32.xlu0 %v136, 109
  %v327 = vpop.permute.xlu0 %326
  %328 = vrot.lane.b32.xlu0 %v138, 109
  %v329 = vpop.permute.xlu0 %328
  %330 = vrot.lane.b32.xlu0 %v146, 109
  %v331 = vpop.permute.xlu0 %330
  %332 = vrot.lane.b32.xlu0 %v154, 109
  %v333 = vpop.permute.xlu0 %332
  %334 = vrot.lane.b32.xlu0 %v153, 109
  %v335 = vpop.permute.xlu0 %334
  %vm336 = vcmask 891904
  %v337 = vsel %vm336, %v323, %v325
  %v338 = vsel %vm336, %v325, %v327
  %v339 = vsel %vm336, %v327, %v329
  %v340 = vsel %vm336, %v329, %v331
  %v341 = vsel %vm336, %v331, %v333
  %v342 = vsel %vm336, %v333, %v335
  %v344 = vsel %vm176, %v103, 0
  %v347 = vsel %vm180, %v337, 0
  %v350 = vsel %vm180, %v338, 0
  %v353 = vsel %vm180, %v339, 0
  %v356 = vsel %vm180, %v340, 0
  %v359 = vsel %vm180, %v341, 0
  %v362 = vsel %vm180, %v342, 0
  %364 = vmatprep.subr.bf16.mxu0 0
  %365 = vmatpush1.bf16.msra.mxu0 0
  %366 = vmatprep.subr.bf16.mxu0 0
  %367 = vmatpush1.bf16.msra.mxu0 0
  %368 = vmatprep.subr.bf16.mxu0 0
  %369 = vmatpush1.bf16.msra.mxu0 0
  %370 = vmatprep.subr.bf16.mxu0 0
  %371 = vmatpush1.bf16.msra.mxu0 0
  %372 = vmatprep.subr.bf16.mxu0 0
  %373 = vmatpush1.bf16.msra.mxu0 0
  %374 = vmatprep.subr.bf16.mxu0 0
  %375 = vmatpush1.bf16.msra.mxu0 0
  %376 = vmatprep.subr.bf16.mxu0 0
  %377 = vmatpush1.bf16.msra.mxu0 0
  %378 = vmatprep.subr.bf16.mxu0 %v350
  %379 = vmatpush1.bf16.msra.mxu0 %v347
  %380 = vmatprep.subr.bf16.mxu0 0
  %381 = vmatpush2.bf16.msra.mxu0 0
  %382 = vmatprep.subr.bf16.mxu0 0
  %383 = vmatpush2.bf16.msra.mxu0 0
  %384 = vmatprep.subr.bf16.mxu0 0
  %385 = vmatpush2.bf16.msra.mxu0 0
  %386 = vmatprep.subr.bf16.mxu0 0
  %387 = vmatpush2.bf16.msra.mxu0 0
  %388 = vmatprep.subr.bf16.mxu0 0
  %389 = vmatpush2.bf16.msra.mxu0 0
  %390 = vmatprep.subr.bf16.mxu0 0
  %391 = vmatpush2.bf16.msra.mxu0 0
  %392 = vmatprep.subr.bf16.mxu0 0
  %393 = vmatpush2.bf16.msra.mxu0 0
  %394 = vmatprep.subr.bf16.mxu0 0
  %395 = vmatpush2.bf16.msra.mxu0 0
  %396 = vmatprep.mubr.bf16.mxu0 0
  %397 = vmatmul.mubr.bf16.gmra.mxu0 %v344
  %v398 = vpop.f32.mrf.mxu0
  %v399 = vadd.f32 %v234, %v398
  %v400 = vpop.f32.mrf.mxu0
  %v401 = vadd.f32 %v236, %v400
  %v402 = vpop.f32.mrf.mxu0
  %v403 = vpop.f32.mrf.mxu0
  %404 = vdwg.mxu0
  %405 = vmatprep.subr.bf16.mxu0 0
  %406 = vmatpush1.bf16.msra.mxu0 0
  %407 = vmatprep.subr.bf16.mxu0 0
  %408 = vmatpush1.bf16.msra.mxu0 0
  %409 = vmatprep.subr.bf16.mxu0 0
  %410 = vmatpush1.bf16.msra.mxu0 0
  %411 = vmatprep.subr.bf16.mxu0 0
  %412 = vmatpush1.bf16.msra.mxu0 0
  %413 = vmatprep.subr.bf16.mxu0 0
  %414 = vmatpush1.bf16.msra.mxu0 0
  %415 = vmatprep.subr.bf16.mxu0 0
  %416 = vmatpush1.bf16.msra.mxu0 0
  %417 = vmatprep.subr.bf16.mxu0 0
  %418 = vmatpush1.bf16.msra.mxu0 0
  %419 = vmatprep.subr.bf16.mxu0 %v356
  %420 = vmatpush1.bf16.msra.mxu0 %v353
  %421 = vmatprep.subr.bf16.mxu0 0
  %422 = vmatpush2.bf16.msra.mxu0 0
  %423 = vmatprep.subr.bf16.mxu0 0
  %424 = vmatpush2.bf16.msra.mxu0 0
  %425 = vmatprep.subr.bf16.mxu0 0
  %426 = vmatpush2.bf16.msra.mxu0 0
  %427 = vmatprep.subr.bf16.mxu0 0
  %428 = vmatpush2.bf16.msra.mxu0 0
  %429 = vmatprep.subr.bf16.mxu0 0
  %430 = vmatpush2.bf16.msra.mxu0 0
  %431 = vmatprep.subr.bf16.mxu0 0
  %432 = vmatpush2.bf16.msra.mxu0 0
  %433 = vmatprep.subr.bf16.mxu0 0
  %434 = vmatpush2.bf16.msra.mxu0 0
  %435 = vmatprep.subr.bf16.mxu0 0
  %436 = vmatpush2.bf16.msra.mxu0 0
  %437 = vmatprep.mubr.bf16.mxu0 0
  %438 = vmatmul.mubr.bf16.gmra.mxu0 %v344
  %v439 = vpop.f32.mrf.mxu0
  %v440 = vadd.f32 %v275, %v439
  %v441 = vpop.f32.mrf.mxu0
  %v442 = vadd.f32 %v277, %v441
  %v443 = vpop.f32.mrf.mxu0
  %v444 = vpop.f32.mrf.mxu0
  %445 = vdwg.mxu0
  %446 = vmatprep.subr.bf16.mxu0 0
  %447 = vmatpush1.bf16.msra.mxu0 0
  %448 = vmatprep.subr.bf16.mxu0 0
  %449 = vmatpush1.bf16.msra.mxu0 0
  %450 = vmatprep.subr.bf16.mxu0 0
  %451 = vmatpush1.bf16.msra.mxu0 0
  %452 = vmatprep.subr.bf16.mxu0 0
  %453 = vmatpush1.bf16.msra.mxu0 0
  %454 = vmatprep.subr.bf16.mxu0 0
  %455 = vmatpush1.bf16.msra.mxu0 0
  %456 = vmatprep.subr.bf16.mxu0 0
  %457 = vmatpush1.bf16.msra.mxu0 0
  %458 = vmatprep.subr.bf16.mxu0 0
  %459 = vmatpush1.bf16.msra.mxu0 0
  %460 = vmatprep.subr.bf16.mxu0 %v362
  %461 = vmatpush1.bf16.msra.mxu0 %v359
  %462 = vmatprep.subr.bf16.mxu0 0
  %463 = vmatpush2.bf16.msra.mxu0 0
  %464 = vmatprep.subr.bf16.mxu0 0
  %465 = vmatpush2.bf16.msra.mxu0 0
  %466 = vmatprep.subr.bf16.mxu0 0
  %467 = vmatpush2.bf16.msra.mxu0 0
  %468 = vmatprep.subr.bf16.mxu0 0
  %469 = vmatpush2.bf16.msra.mxu0 0
  %470 = vmatprep.subr.bf16.mxu0 0
  %471 = vmatpush2.bf16.msra.mxu0 0
  %472 = vmatprep.subr.bf16.mxu0 0
  %473 = vmatpush2.bf16.msra.mxu0 0
  %474 = vmatprep.subr.bf16.mxu0 0
  %475 = vmatpush2.bf16.msra.mxu0 0
  %476 = vmatprep.subr.bf16.mxu0 0
  %477 = vmatpush2.bf16.msra.mxu0 0
  %478 = vmatprep.mubr.bf16.mxu0 0
  %479 = vmatmul.mubr.bf16.gmra.mxu0 %v344
  %v480 = vpop.f32.mrf.mxu0
  %v481 = vadd.f32 %v316, %v480
  %v482 = vpop.f32.mrf.mxu0
  %v483 = vadd.f32 %v318, %v482
  %v484 = vpop.f32.mrf.mxu0
  %v485 = vpop.f32.mrf.mxu0
  %486 = vdwg.mxu0
  %487 = vrot.lane.b32.xlu0 %v129, 127
  %v488 = vpop.permute.xlu0 %487
  %489 = vrot.lane.b32.xlu0 %v137, 127
  %v490 = vpop.permute.xlu0 %489
  %491 = vrot.lane.b32.xlu0 %v136, 127
  %v492 = vpop.permute.xlu0 %491
  %493 = vrot.lane.b32.xlu0 %v138, 127
  %v494 = vpop.permute.xlu0 %493
  %495 = vrot.lane.b32.xlu0 %v146, 127
  %v496 = vpop.permute.xlu0 %495
  %497 = vrot.lane.b32.xlu0 %v154, 127
  %v498 = vpop.permute.xlu0 %497
  %499 = vrot.lane.b32.xlu0 %v153, 127
  %v500 = vpop.permute.xlu0 %499
  %vm501 = vcmask 1039360
  %v502 = vsel %vm501, %v488, %v490
  %v503 = vsel %vm501, %v490, %v492
  %v504 = vsel %vm501, %v492, %v494
  %v505 = vsel %vm501, %v494, %v496
  %v506 = vsel %vm501, %v496, %v498
  %v507 = vsel %vm501, %v498, %v500
  %v509 = vsel %vm176, %v105, 0
  %v512 = vsel %vm180, %v502, 0
  %v515 = vsel %vm180, %v503, 0
  %v518 = vsel %vm180, %v504, 0
  %v521 = vsel %vm180, %v505, 0
  %v524 = vsel %vm180, %v506, 0
  %v527 = vsel %vm180, %v507, 0
  %529 = vmatprep.subr.bf16.mxu0 0
  %530 = vmatpush1.bf16.msra.mxu0 0
  %531 = vmatprep.subr.bf16.mxu0 0
  %532 = vmatpush1.bf16.msra.mxu0 0
  %533 = vmatprep.subr.bf16.mxu0 0
  %534 = vmatpush1.bf16.msra.mxu0 0
  %535 = vmatprep.subr.bf16.mxu0 0
  %536 = vmatpush1.bf16.msra.mxu0 0
  %537 = vmatprep.subr.bf16.mxu0 0
  %538 = vmatpush1.bf16.msra.mxu0 0
  %539 = vmatprep.subr.bf16.mxu0 0
  %540 = vmatpush1.bf16.msra.mxu0 0
  %541 = vmatprep.subr.bf16.mxu0 0
  %542 = vmatpush1.bf16.msra.mxu0 0
  %543 = vmatprep.subr.bf16.mxu0 %v515
  %544 = vmatpush1.bf16.msra.mxu0 %v512
  %545 = vmatprep.subr.bf16.mxu0 0
  %546 = vmatpush2.bf16.msra.mxu0 0
  %547 = vmatprep.subr.bf16.mxu0 0
  %548 = vmatpush2.bf16.msra.mxu0 0
  %549 = vmatprep.subr.bf16.mxu0 0
  %550 = vmatpush2.bf16.msra.mxu0 0
  %551 = vmatprep.subr.bf16.mxu0 0
  %552 = vmatpush2.bf16.msra.mxu0 0
  %553 = vmatprep.subr.bf16.mxu0 0
  %554 = vmatpush2.bf16.msra.mxu0 0
  %555 = vmatprep.subr.bf16.mxu0 0
  %556 = vmatpush2.bf16.msra.mxu0 0
  %557 = vmatprep.subr.bf16.mxu0 0
  %558 = vmatpush2.bf16.msra.mxu0 0
  %559 = vmatprep.subr.bf16.mxu0 0
  %560 = vmatpush2.bf16.msra.mxu0 0
  %561 = vmatprep.mubr.bf16.mxu0 0
  %562 = vmatmul.mubr.bf16.gmra.mxu0 %v509
  %v563 = vpop.f32.mrf.mxu0
  %v564 = vadd.f32 0.0, %v563
  %v565 = vpop.f32.mrf.mxu0
  %v566 = vadd.f32 0.0, %v565
  %v567 = vpop.f32.mrf.mxu0
  %v568 = vpop.f32.mrf.mxu0
  %569 = vdwg.mxu0
  %570 = vmatprep.subr.bf16.mxu0 0
  %571 = vmatpush1.bf16.msra.mxu0 0
  %572 = vmatprep.subr.bf16.mxu0 0
  %573 = vmatpush1.bf16.msra.mxu0 0
  %574 = vmatprep.subr.bf16.mxu0 0
  %575 = vmatpush1.bf16.msra.mxu0 0
  %576 = vmatprep.subr.bf16.mxu0 0
  %577 = vmatpush1.bf16.msra.mxu0 0
  %578 = vmatprep.subr.bf16.mxu0 0
  %579 = vmatpush1.bf16.msra.mxu0 0
  %580 = vmatprep.subr.bf16.mxu0 0
  %581 = vmatpush1.bf16.msra.mxu0 0
  %582 = vmatprep.subr.bf16.mxu0 0
  %583 = vmatpush1.bf16.msra.mxu0 0
  %584 = vmatprep.subr.bf16.mxu0 %v521
  %585 = vmatpush1.bf16.msra.mxu0 %v518
  %586 = vmatprep.subr.bf16.mxu0 0
  %587 = vmatpush2.bf16.msra.mxu0 0
  %588 = vmatprep.subr.bf16.mxu0 0
  %589 = vmatpush2.bf16.msra.mxu0 0
  %590 = vmatprep.subr.bf16.mxu0 0
  %591 = vmatpush2.bf16.msra.mxu0 0
  %592 = vmatprep.subr.bf16.mxu0 0
  %593 = vmatpush2.bf16.msra.mxu0 0
  %594 = vmatprep.subr.bf16.mxu0 0
  %595 = vmatpush2.bf16.msra.mxu0 0
  %596 = vmatprep.subr.bf16.mxu0 0
  %597 = vmatpush2.bf16.msra.mxu0 0
  %598 = vmatprep.subr.bf16.mxu0 0
  %599 = vmatpush2.bf16.msra.mxu0 0
  %600 = vmatprep.subr.bf16.mxu0 0
  %601 = vmatpush2.bf16.msra.mxu0 0
  %602 = vmatprep.mubr.bf16.mxu0 0
  %603 = vmatmul.mubr.bf16.gmra.mxu0 %v509
  %v604 = vpop.f32.mrf.mxu0
  %v605 = vadd.f32 0.0, %v604
  %v606 = vpop.f32.mrf.mxu0
  %v607 = vadd.f32 0.0, %v606
  %v608 = vpop.f32.mrf.mxu0
  %v609 = vpop.f32.mrf.mxu0
  %610 = vdwg.mxu0
  %611 = vmatprep.subr.bf16.mxu0 0
  %612 = vmatpush1.bf16.msra.mxu0 0
  %613 = vmatprep.subr.bf16.mxu0 0
  %614 = vmatpush1.bf16.msra.mxu0 0
  %615 = vmatprep.subr.bf16.mxu0 0
  %616 = vmatpush1.bf16.msra.mxu0 0
  %617 = vmatprep.subr.bf16.mxu0 0
  %618 = vmatpush1.bf16.msra.mxu0 0
  %619 = vmatprep.subr.bf16.mxu0 0
  %620 = vmatpush1.bf16.msra.mxu0 0
  %621 = vmatprep.subr.bf16.mxu0 0
  %622 = vmatpush1.bf16.msra.mxu0 0
  %623 = vmatprep.subr.bf16.mxu0 0
  %624 = vmatpush1.bf16.msra.mxu0 0
  %625 = vmatprep.subr.bf16.mxu0 %v527
  %626 = vmatpush1.bf16.msra.mxu0 %v524
  %627 = vmatprep.subr.bf16.mxu0 0
  %628 = vmatpush2.bf16.msra.mxu0 0
  %629 = vmatprep.subr.bf16.mxu0 0
  %630 = vmatpush2.bf16.msra.mxu0 0
  %631 = vmatprep.subr.bf16.mxu0 0
  %632 = vmatpush2.bf16.msra.mxu0 0
  %633 = vmatprep.subr.bf16.mxu0 0
  %634 = vmatpush2.bf16.msra.mxu0 0
  %635 = vmatprep.subr.bf16.mxu0 0
  %636 = vmatpush2.bf16.msra.mxu0 0
  %637 = vmatprep.subr.bf16.mxu0 0
  %638 = vmatpush2.bf16.msra.mxu0 0
  %639 = vmatprep.subr.bf16.mxu0 0
  %640 = vmatpush2.bf16.msra.mxu0 0
  %641 = vmatprep.subr.bf16.mxu0 0
  %642 = vmatpush2.bf16.msra.mxu0 0
  %643 = vmatprep.mubr.bf16.mxu0 0
  %644 = vmatmul.mubr.bf16.gmra.mxu0 %v509
  %v645 = vpop.f32.mrf.mxu0
  %v646 = vadd.f32 0.0, %v645
  %v647 = vpop.f32.mrf.mxu0
  %v648 = vadd.f32 0.0, %v647
  %v649 = vpop.f32.mrf.mxu0
  %v650 = vpop.f32.mrf.mxu0
  %651 = vdwg.mxu0
  %v652 = vadd.f32 %v399, %v564
  %v653 = vadd.f32 %v401, %v566
  %v654 = vadd.f32 %v440, %v605
  %v655 = vadd.f32 %v442, %v607
  %v656 = vadd.f32 %v481, %v646
  %v657 = vadd.f32 %v483, %v648
  %v659 = vsel %vm176, %v106, 0
  %v662 = vsel %vm180, %v129, 0
  %v665 = vsel %vm180, %v137, 0
  %v668 = vsel %vm180, %v136, 0
  %v671 = vsel %vm180, %v138, 0
  %v674 = vsel %vm180, %v146, 0
  %v677 = vsel %vm180, %v154, 0
  %679 = vmatprep.subr.bf16.mxu0 0
  %680 = vmatpush1.bf16.msra.mxu0 0
  %681 = vmatprep.subr.bf16.mxu0 0
  %682 = vmatpush1.bf16.msra.mxu0 0
  %683 = vmatprep.subr.bf16.mxu0 0
  %684 = vmatpush1.bf16.msra.mxu0 0
  %685 = vmatprep.subr.bf16.mxu0 0
  %686 = vmatpush1.bf16.msra.mxu0 0
  %687 = vmatprep.subr.bf16.mxu0 0
  %688 = vmatpush1.bf16.msra.mxu0 0
  %689 = vmatprep.subr.bf16.mxu0 0
  %690 = vmatpush1.bf16.msra.mxu0 0
  %691 = vmatprep.subr.bf16.mxu0 0
  %692 = vmatpush1.bf16.msra.mxu0 0
  %693 = vmatprep.subr.bf16.mxu0 %v665
  %694 = vmatpush1.bf16.msra.mxu0 %v662
  %695 = vmatprep.subr.bf16.mxu0 0
  %696 = vmatpush2.bf16.msra.mxu0 0
  %697 = vmatprep.subr.bf16.mxu0 0
  %698 = vmatpush2.bf16.msra.mxu0 0
  %699 = vmatprep.subr.bf16.mxu0 0
  %700 = vmatpush2.bf16.msra.mxu0 0
  %701 = vmatprep.subr.bf16.mxu0 0
  %702 = vmatpush2.bf16.msra.mxu0 0
  %703 = vmatprep.subr.bf16.mxu0 0
  %704 = vmatpush2.bf16.msra.mxu0 0
  %705 = vmatprep.subr.bf16.mxu0 0
  %706 = vmatpush2.bf16.msra.mxu0 0
  %707 = vmatprep.subr.bf16.mxu0 0
  %708 = vmatpush2.bf16.msra.mxu0 0
  %709 = vmatprep.subr.bf16.mxu0 0
  %710 = vmatpush2.bf16.msra.mxu0 0
  %711 = vmatprep.mubr.bf16.mxu0 0
  %712 = vmatmul.mubr.bf16.gmra.mxu0 %v659
  %v713 = vpop.f32.mrf.mxu0
  %v714 = vadd.f32 0.0, %v713
  %v715 = vpop.f32.mrf.mxu0
  %v716 = vadd.f32 0.0, %v715
  %v717 = vpop.f32.mrf.mxu0
  %v718 = vpop.f32.mrf.mxu0
  %719 = vdwg.mxu0
  %720 = vmatprep.subr.bf16.mxu0 0
  %721 = vmatpush1.bf16.msra.mxu0 0
  %722 = vmatprep.subr.bf16.mxu0 0
  %723 = vmatpush1.bf16.msra.mxu0 0
  %724 = vmatprep.subr.bf16.mxu0 0
  %725 = vmatpush1.bf16.msra.mxu0 0
  %726 = vmatprep.subr.bf16.mxu0 0
  %727 = vmatpush1.bf16.msra.mxu0 0
  %728 = vmatprep.subr.bf16.mxu0 0
  %729 = vmatpush1.bf16.msra.mxu0 0
  %730 = vmatprep.subr.bf16.mxu0 0
  %731 = vmatpush1.bf16.msra.mxu0 0
  %732 = vmatprep.subr.bf16.mxu0 0
  %733 = vmatpush1.bf16.msra.mxu0 0
  %734 = vmatprep.subr.bf16.mxu0 %v671
  %735 = vmatpush1.bf16.msra.mxu0 %v668
  %736 = vmatprep.subr.bf16.mxu0 0
  %737 = vmatpush2.bf16.msra.mxu0 0
  %738 = vmatprep.subr.bf16.mxu0 0
  %739 = vmatpush2.bf16.msra.mxu0 0
  %740 = vmatprep.subr.bf16.mxu0 0
  %741 = vmatpush2.bf16.msra.mxu0 0
  %742 = vmatprep.subr.bf16.mxu0 0
  %743 = vmatpush2.bf16.msra.mxu0 0
  %744 = vmatprep.subr.bf16.mxu0 0
  %745 = vmatpush2.bf16.msra.mxu0 0
  %746 = vmatprep.subr.bf16.mxu0 0
  %747 = vmatpush2.bf16.msra.mxu0 0
  %748 = vmatprep.subr.bf16.mxu0 0
  %749 = vmatpush2.bf16.msra.mxu0 0
  %750 = vmatprep.subr.bf16.mxu0 0
  %751 = vmatpush2.bf16.msra.mxu0 0
  %752 = vmatprep.mubr.bf16.mxu0 0
  %753 = vmatmul.mubr.bf16.gmra.mxu0 %v659
  %v754 = vpop.f32.mrf.mxu0
  %v755 = vadd.f32 0.0, %v754
  %v756 = vpop.f32.mrf.mxu0
  %v757 = vadd.f32 0.0, %v756
  %v758 = vpop.f32.mrf.mxu0
  %v759 = vpop.f32.mrf.mxu0
  %760 = vdwg.mxu0
  %761 = vmatprep.subr.bf16.mxu0 0
  %762 = vmatpush1.bf16.msra.mxu0 0
  %763 = vmatprep.subr.bf16.mxu0 0
  %764 = vmatpush1.bf16.msra.mxu0 0
  %765 = vmatprep.subr.bf16.mxu0 0
  %766 = vmatpush1.bf16.msra.mxu0 0
  %767 = vmatprep.subr.bf16.mxu0 0
  %768 = vmatpush1.bf16.msra.mxu0 0
  %769 = vmatprep.subr.bf16.mxu0 0
  %770 = vmatpush1.bf16.msra.mxu0 0
  %771 = vmatprep.subr.bf16.mxu0 0
  %772 = vmatpush1.bf16.msra.mxu0 0
  %773 = vmatprep.subr.bf16.mxu0 0
  %774 = vmatpush1.bf16.msra.mxu0 0
  %775 = vmatprep.subr.bf16.mxu0 %v677
  %776 = vmatpush1.bf16.msra.mxu0 %v674
  %777 = vmatprep.subr.bf16.mxu0 0
  %778 = vmatpush2.bf16.msra.mxu0 0
  %779 = vmatprep.subr.bf16.mxu0 0
  %780 = vmatpush2.bf16.msra.mxu0 0
  %781 = vmatprep.subr.bf16.mxu0 0
  %782 = vmatpush2.bf16.msra.mxu0 0
  %783 = vmatprep.subr.bf16.mxu0 0
  %784 = vmatpush2.bf16.msra.mxu0 0
  %785 = vmatprep.subr.bf16.mxu0 0
  %786 = vmatpush2.bf16.msra.mxu0 0
  %787 = vmatprep.subr.bf16.mxu0 0
  %788 = vmatpush2.bf16.msra.mxu0 0
  %789 = vmatprep.subr.bf16.mxu0 0
  %790 = vmatpush2.bf16.msra.mxu0 0
  %791 = vmatprep.subr.bf16.mxu0 0
  %792 = vmatpush2.bf16.msra.mxu0 0
  %793 = vmatprep.mubr.bf16.mxu0 0
  %794 = vmatmul.mubr.bf16.gmra.mxu0 %v659
  %v795 = vpop.f32.mrf.mxu0
  %v796 = vadd.f32 0.0, %v795
  %v797 = vpop.f32.mrf.mxu0
  %v798 = vadd.f32 0.0, %v797
  %v799 = vpop.f32.mrf.mxu0
  %v800 = vpop.f32.mrf.mxu0
  %801 = vdwg.mxu0
  %v802 = vadd.f32 %v652, %v714
  %v803 = vadd.f32 %v653, %v716
  %v804 = vadd.f32 %v654, %v755
  %v805 = vadd.f32 %v655, %v757
  %v806 = vadd.f32 %v656, %v796
  %v807 = vadd.f32 %v657, %v798
  %v809 = vlaneseq
  %v810 = vshrl.u32 %v809, 7
  %v811 = vsub.s32 0, %v810
  %v812 = vrot.slane %v119, %v811
  %v813 = vlaneseq
  %v814 = vshrl.u32 %v813, 7
  %v815 = vsub.s32 1, %v814
  %v816 = vrot.slane %v119, %v815
  %v817 = vlaneseq
  %v818 = vshrl.u32 %v817, 7
  %v819 = vsub.s32 2, %v818
  %v820 = vrot.slane %v119, %v819
  %v821 = vlaneseq
  %v822 = vshrl.u32 %v821, 7
  %v823 = vsub.s32 3, %v822
  %v824 = vrot.slane %v119, %v823
  %v825 = vlaneseq
  %v826 = vshrl.u32 %v825, 7
  %v827 = vsub.s32 4, %v826
  %v828 = vrot.slane %v119, %v827
  %v829 = vlaneseq
  %v830 = vshrl.u32 %v829, 7
  %v831 = vsub.s32 5, %v830
  %v832 = vrot.slane %v119, %v831
  %v839 = vmul.f32 %v802, %v812
  %v840 = vmul.f32 %v803, %v816
  %v841 = vmul.f32 %v804, %v820
  %v842 = vmul.f32 %v805, %v824
  %v843 = vmul.f32 %v806, %v828
  %v844 = vmul.f32 %v807, %v832
  %v845 = vadd.f32 %v839, %v840
  %v846 = vadd.f32 %v845, %v841
  %v847 = vadd.f32 %v846, %v842
  %v848 = vadd.f32 %v847, %v843
  %v849 = vadd.f32 %v848, %v844
  %850 = vadd.xlane.f32.xlu0 %v849
  %v851 = vpop.xlane.xlu0 %850
  %v852 = vadd.f32 %v851, 0.0
  %v853 = vmul.f32 %v839, %v802
  %v854 = vmul.f32 %v840, %v803
  %v855 = vmul.f32 %v841, %v804
  %v856 = vmul.f32 %v842, %v805
  %v857 = vmul.f32 %v843, %v806
  %v858 = vmul.f32 %v844, %v807
  %v859 = vadd.f32 %v853, %v854
  %v860 = vadd.f32 %v859, %v855
  %v861 = vadd.f32 %v860, %v856
  %v862 = vadd.f32 %v861, %v857
  %v863 = vadd.f32 %v862, %v858
  %864 = vadd.xlane.f32.xlu0 %v863
  %v865 = vpop.xlane.xlu0 %864
  %v866 = vadd.f32 %v865, 0.0
  %v868 = vsel %vm176, %v108, 0
  %870 = vmatprep.subr.bf16.mxu0 0
  %871 = vmatpush1.bf16.msra.mxu0 0
  %872 = vmatprep.subr.bf16.mxu0 0
  %873 = vmatpush1.bf16.msra.mxu0 0
  %874 = vmatprep.subr.bf16.mxu0 0
  %875 = vmatpush1.bf16.msra.mxu0 0
  %876 = vmatprep.subr.bf16.mxu0 0
  %877 = vmatpush1.bf16.msra.mxu0 0
  %878 = vmatprep.subr.bf16.mxu0 0
  %879 = vmatpush1.bf16.msra.mxu0 0
  %880 = vmatprep.subr.bf16.mxu0 0
  %881 = vmatpush1.bf16.msra.mxu0 0
  %882 = vmatprep.subr.bf16.mxu0 0
  %883 = vmatpush1.bf16.msra.mxu0 0
  %884 = vmatprep.subr.bf16.mxu0 %v350
  %885 = vmatpush1.bf16.msra.mxu0 %v347
  %886 = vmatprep.subr.bf16.mxu0 0
  %887 = vmatpush2.bf16.msra.mxu0 0
  %888 = vmatprep.subr.bf16.mxu0 0
  %889 = vmatpush2.bf16.msra.mxu0 0
  %890 = vmatprep.subr.bf16.mxu0 0
  %891 = vmatpush2.bf16.msra.mxu0 0
  %892 = vmatprep.subr.bf16.mxu0 0
  %893 = vmatpush2.bf16.msra.mxu0 0
  %894 = vmatprep.subr.bf16.mxu0 0
  %895 = vmatpush2.bf16.msra.mxu0 0
  %896 = vmatprep.subr.bf16.mxu0 0
  %897 = vmatpush2.bf16.msra.mxu0 0
  %898 = vmatprep.subr.bf16.mxu0 0
  %899 = vmatpush2.bf16.msra.mxu0 0
  %900 = vmatprep.subr.bf16.mxu0 0
  %901 = vmatpush2.bf16.msra.mxu0 0
  %902 = vmatprep.mubr.bf16.mxu0 0
  %903 = vmatmul.mubr.bf16.gmra.mxu0 %v868
  %v904 = vpop.f32.mrf.mxu0
  %v905 = vadd.f32 0.0, %v904
  %v906 = vpop.f32.mrf.mxu0
  %v907 = vadd.f32 0.0, %v906
  %v908 = vpop.f32.mrf.mxu0
  %v909 = vpop.f32.mrf.mxu0
  %910 = vdwg.mxu0
  %911 = vmatprep.subr.bf16.mxu0 0
  %912 = vmatpush1.bf16.msra.mxu0 0
  %913 = vmatprep.subr.bf16.mxu0 0
  %914 = vmatpush1.bf16.msra.mxu0 0
  %915 = vmatprep.subr.bf16.mxu0 0
  %916 = vmatpush1.bf16.msra.mxu0 0
  %917 = vmatprep.subr.bf16.mxu0 0
  %918 = vmatpush1.bf16.msra.mxu0 0
  %919 = vmatprep.subr.bf16.mxu0 0
  %920 = vmatpush1.bf16.msra.mxu0 0
  %921 = vmatprep.subr.bf16.mxu0 0
  %922 = vmatpush1.bf16.msra.mxu0 0
  %923 = vmatprep.subr.bf16.mxu0 0
  %924 = vmatpush1.bf16.msra.mxu0 0
  %925 = vmatprep.subr.bf16.mxu0 %v356
  %926 = vmatpush1.bf16.msra.mxu0 %v353
  %927 = vmatprep.subr.bf16.mxu0 0
  %928 = vmatpush2.bf16.msra.mxu0 0
  %929 = vmatprep.subr.bf16.mxu0 0
  %930 = vmatpush2.bf16.msra.mxu0 0
  %931 = vmatprep.subr.bf16.mxu0 0
  %932 = vmatpush2.bf16.msra.mxu0 0
  %933 = vmatprep.subr.bf16.mxu0 0
  %934 = vmatpush2.bf16.msra.mxu0 0
  %935 = vmatprep.subr.bf16.mxu0 0
  %936 = vmatpush2.bf16.msra.mxu0 0
  %937 = vmatprep.subr.bf16.mxu0 0
  %938 = vmatpush2.bf16.msra.mxu0 0
  %939 = vmatprep.subr.bf16.mxu0 0
  %940 = vmatpush2.bf16.msra.mxu0 0
  %941 = vmatprep.subr.bf16.mxu0 0
  %942 = vmatpush2.bf16.msra.mxu0 0
  %943 = vmatprep.mubr.bf16.mxu0 0
  %944 = vmatmul.mubr.bf16.gmra.mxu0 %v868
  %v945 = vpop.f32.mrf.mxu0
  %v946 = vadd.f32 0.0, %v945
  %v947 = vpop.f32.mrf.mxu0
  %v948 = vadd.f32 0.0, %v947
  %v949 = vpop.f32.mrf.mxu0
  %v950 = vpop.f32.mrf.mxu0
  %951 = vdwg.mxu0
  %952 = vmatprep.subr.bf16.mxu0 0
  %953 = vmatpush1.bf16.msra.mxu0 0
  %954 = vmatprep.subr.bf16.mxu0 0
  %955 = vmatpush1.bf16.msra.mxu0 0
  %956 = vmatprep.subr.bf16.mxu0 0
  %957 = vmatpush1.bf16.msra.mxu0 0
  %958 = vmatprep.subr.bf16.mxu0 0
  %959 = vmatpush1.bf16.msra.mxu0 0
  %960 = vmatprep.subr.bf16.mxu0 0
  %961 = vmatpush1.bf16.msra.mxu0 0
  %962 = vmatprep.subr.bf16.mxu0 0
  %963 = vmatpush1.bf16.msra.mxu0 0
  %964 = vmatprep.subr.bf16.mxu0 0
  %965 = vmatpush1.bf16.msra.mxu0 0
  %966 = vmatprep.subr.bf16.mxu0 %v362
  %967 = vmatpush1.bf16.msra.mxu0 %v359
  %968 = vmatprep.subr.bf16.mxu0 0
  %969 = vmatpush2.bf16.msra.mxu0 0
  %970 = vmatprep.subr.bf16.mxu0 0
  %971 = vmatpush2.bf16.msra.mxu0 0
  %972 = vmatprep.subr.bf16.mxu0 0
  %973 = vmatpush2.bf16.msra.mxu0 0
  %974 = vmatprep.subr.bf16.mxu0 0
  %975 = vmatpush2.bf16.msra.mxu0 0
  %976 = vmatprep.subr.bf16.mxu0 0
  %977 = vmatpush2.bf16.msra.mxu0 0
  %978 = vmatprep.subr.bf16.mxu0 0
  %979 = vmatpush2.bf16.msra.mxu0 0
  %980 = vmatprep.subr.bf16.mxu0 0
  %981 = vmatpush2.bf16.msra.mxu0 0
  %982 = vmatprep.subr.bf16.mxu0 0
  %983 = vmatpush2.bf16.msra.mxu0 0
  %984 = vmatprep.mubr.bf16.mxu0 0
  %985 = vmatmul.mubr.bf16.gmra.mxu0 %v868
  %v986 = vpop.f32.mrf.mxu0
  %v987 = vadd.f32 0.0, %v986
  %v988 = vpop.f32.mrf.mxu0
  %v989 = vadd.f32 0.0, %v988
  %v990 = vpop.f32.mrf.mxu0
  %v991 = vpop.f32.mrf.mxu0
  %992 = vdwg.mxu0
  %993 = vrot.lane.b32.xlu0 %v129, 108
  %v994 = vpop.permute.xlu0 %993
  %995 = vrot.lane.b32.xlu0 %v137, 108
  %v996 = vpop.permute.xlu0 %995
  %997 = vrot.lane.b32.xlu0 %v136, 108
  %v998 = vpop.permute.xlu0 %997
  %999 = vrot.lane.b32.xlu0 %v138, 108
  %v1000 = vpop.permute.xlu0 %999
  %1001 = vrot.lane.b32.xlu0 %v146, 108
  %v1002 = vpop.permute.xlu0 %1001
  %1003 = vrot.lane.b32.xlu0 %v154, 108
  %v1004 = vpop.permute.xlu0 %1003
  %1005 = vrot.lane.b32.xlu0 %v153, 108
  %v1006 = vpop.permute.xlu0 %1005
  %vm1007 = vcmask 883712
  %v1008 = vsel %vm1007, %v994, %v996
  %v1009 = vsel %vm1007, %v996, %v998
  %v1010 = vsel %vm1007, %v998, %v1000
  %v1011 = vsel %vm1007, %v1000, %v1002
  %v1012 = vsel %vm1007, %v1002, %v1004
  %v1013 = vsel %vm1007, %v1004, %v1006
  %v1015 = vsel %vm176, %v107, 0
  %v1018 = vsel %vm180, %v1008, 0
  %v1021 = vsel %vm180, %v1009, 0
  %v1024 = vsel %vm180, %v1010, 0
  %v1027 = vsel %vm180, %v1011, 0
  %v1030 = vsel %vm180, %v1012, 0
  %v1033 = vsel %vm180, %v1013, 0
  %1035 = vmatprep.subr.bf16.mxu0 0
  %1036 = vmatpush1.bf16.msra.mxu0 0
  %1037 = vmatprep.subr.bf16.mxu0 0
  %1038 = vmatpush1.bf16.msra.mxu0 0
  %1039 = vmatprep.subr.bf16.mxu0 0
  %1040 = vmatpush1.bf16.msra.mxu0 0
  %1041 = vmatprep.subr.bf16.mxu0 0
  %1042 = vmatpush1.bf16.msra.mxu0 0
  %1043 = vmatprep.subr.bf16.mxu0 0
  %1044 = vmatpush1.bf16.msra.mxu0 0
  %1045 = vmatprep.subr.bf16.mxu0 0
  %1046 = vmatpush1.bf16.msra.mxu0 0
  %1047 = vmatprep.subr.bf16.mxu0 0
  %1048 = vmatpush1.bf16.msra.mxu0 0
  %1049 = vmatprep.subr.bf16.mxu0 %v1021
  %1050 = vmatpush1.bf16.msra.mxu0 %v1018
  %1051 = vmatprep.subr.bf16.mxu0 0
  %1052 = vmatpush2.bf16.msra.mxu0 0
  %1053 = vmatprep.subr.bf16.mxu0 0
  %1054 = vmatpush2.bf16.msra.mxu0 0
  %1055 = vmatprep.subr.bf16.mxu0 0
  %1056 = vmatpush2.bf16.msra.mxu0 0
  %1057 = vmatprep.subr.bf16.mxu0 0
  %1058 = vmatpush2.bf16.msra.mxu0 0
  %1059 = vmatprep.subr.bf16.mxu0 0
  %1060 = vmatpush2.bf16.msra.mxu0 0
  %1061 = vmatprep.subr.bf16.mxu0 0
  %1062 = vmatpush2.bf16.msra.mxu0 0
  %1063 = vmatprep.subr.bf16.mxu0 0
  %1064 = vmatpush2.bf16.msra.mxu0 0
  %1065 = vmatprep.subr.bf16.mxu0 0
  %1066 = vmatpush2.bf16.msra.mxu0 0
  %1067 = vmatprep.mubr.bf16.mxu0 0
  %1068 = vmatmul.mubr.bf16.gmra.mxu0 %v1015
  %v1069 = vpop.f32.mrf.mxu0
  %v1070 = vadd.f32 %v905, %v1069
  %v1071 = vpop.f32.mrf.mxu0
  %v1072 = vadd.f32 %v907, %v1071
  %v1073 = vpop.f32.mrf.mxu0
  %v1074 = vpop.f32.mrf.mxu0
  %1075 = vdwg.mxu0
  %1076 = vmatprep.subr.bf16.mxu0 0
  %1077 = vmatpush1.bf16.msra.mxu0 0
  %1078 = vmatprep.subr.bf16.mxu0 0
  %1079 = vmatpush1.bf16.msra.mxu0 0
  %1080 = vmatprep.subr.bf16.mxu0 0
  %1081 = vmatpush1.bf16.msra.mxu0 0
  %1082 = vmatprep.subr.bf16.mxu0 0
  %1083 = vmatpush1.bf16.msra.mxu0 0
  %1084 = vmatprep.subr.bf16.mxu0 0
  %1085 = vmatpush1.bf16.msra.mxu0 0
  %1086 = vmatprep.subr.bf16.mxu0 0
  %1087 = vmatpush1.bf16.msra.mxu0 0
  %1088 = vmatprep.subr.bf16.mxu0 0
  %1089 = vmatpush1.bf16.msra.mxu0 0
  %1090 = vmatprep.subr.bf16.mxu0 %v1027
  %1091 = vmatpush1.bf16.msra.mxu0 %v1024
  %1092 = vmatprep.subr.bf16.mxu0 0
  %1093 = vmatpush2.bf16.msra.mxu0 0
  %1094 = vmatprep.subr.bf16.mxu0 0
  %1095 = vmatpush2.bf16.msra.mxu0 0
  %1096 = vmatprep.subr.bf16.mxu0 0
  %1097 = vmatpush2.bf16.msra.mxu0 0
  %1098 = vmatprep.subr.bf16.mxu0 0
  %1099 = vmatpush2.bf16.msra.mxu0 0
  %1100 = vmatprep.subr.bf16.mxu0 0
  %1101 = vmatpush2.bf16.msra.mxu0 0
  %1102 = vmatprep.subr.bf16.mxu0 0
  %1103 = vmatpush2.bf16.msra.mxu0 0
  %1104 = vmatprep.subr.bf16.mxu0 0
  %1105 = vmatpush2.bf16.msra.mxu0 0
  %1106 = vmatprep.subr.bf16.mxu0 0
  %1107 = vmatpush2.bf16.msra.mxu0 0
  %1108 = vmatprep.mubr.bf16.mxu0 0
  %1109 = vmatmul.mubr.bf16.gmra.mxu0 %v1015
  %v1110 = vpop.f32.mrf.mxu0
  %v1111 = vadd.f32 %v946, %v1110
  %v1112 = vpop.f32.mrf.mxu0
  %v1113 = vadd.f32 %v948, %v1112
  %v1114 = vpop.f32.mrf.mxu0
  %v1115 = vpop.f32.mrf.mxu0
  %1116 = vdwg.mxu0
  %1117 = vmatprep.subr.bf16.mxu0 0
  %1118 = vmatpush1.bf16.msra.mxu0 0
  %1119 = vmatprep.subr.bf16.mxu0 0
  %1120 = vmatpush1.bf16.msra.mxu0 0
  %1121 = vmatprep.subr.bf16.mxu0 0
  %1122 = vmatpush1.bf16.msra.mxu0 0
  %1123 = vmatprep.subr.bf16.mxu0 0
  %1124 = vmatpush1.bf16.msra.mxu0 0
  %1125 = vmatprep.subr.bf16.mxu0 0
  %1126 = vmatpush1.bf16.msra.mxu0 0
  %1127 = vmatprep.subr.bf16.mxu0 0
  %1128 = vmatpush1.bf16.msra.mxu0 0
  %1129 = vmatprep.subr.bf16.mxu0 0
  %1130 = vmatpush1.bf16.msra.mxu0 0
  %1131 = vmatprep.subr.bf16.mxu0 %v1033
  %1132 = vmatpush1.bf16.msra.mxu0 %v1030
  %1133 = vmatprep.subr.bf16.mxu0 0
  %1134 = vmatpush2.bf16.msra.mxu0 0
  %1135 = vmatprep.subr.bf16.mxu0 0
  %1136 = vmatpush2.bf16.msra.mxu0 0
  %1137 = vmatprep.subr.bf16.mxu0 0
  %1138 = vmatpush2.bf16.msra.mxu0 0
  %1139 = vmatprep.subr.bf16.mxu0 0
  %1140 = vmatpush2.bf16.msra.mxu0 0
  %1141 = vmatprep.subr.bf16.mxu0 0
  %1142 = vmatpush2.bf16.msra.mxu0 0
  %1143 = vmatprep.subr.bf16.mxu0 0
  %1144 = vmatpush2.bf16.msra.mxu0 0
  %1145 = vmatprep.subr.bf16.mxu0 0
  %1146 = vmatpush2.bf16.msra.mxu0 0
  %1147 = vmatprep.subr.bf16.mxu0 0
  %1148 = vmatpush2.bf16.msra.mxu0 0
  %1149 = vmatprep.mubr.bf16.mxu0 0
  %1150 = vmatmul.mubr.bf16.gmra.mxu0 %v1015
  %v1151 = vpop.f32.mrf.mxu0
  %v1152 = vadd.f32 %v987, %v1151
  %v1153 = vpop.f32.mrf.mxu0
  %v1154 = vadd.f32 %v989, %v1153
  %v1155 = vpop.f32.mrf.mxu0
  %v1156 = vpop.f32.mrf.mxu0
  %1157 = vdwg.mxu0
  %1158 = vrot.lane.b32.xlu0 %v129, 126
  %v1159 = vpop.permute.xlu0 %1158
  %1160 = vrot.lane.b32.xlu0 %v137, 126
  %v1161 = vpop.permute.xlu0 %1160
  %1162 = vrot.lane.b32.xlu0 %v136, 126
  %v1163 = vpop.permute.xlu0 %1162
  %1164 = vrot.lane.b32.xlu0 %v138, 126
  %v1165 = vpop.permute.xlu0 %1164
  %1166 = vrot.lane.b32.xlu0 %v146, 126
  %v1167 = vpop.permute.xlu0 %1166
  %1168 = vrot.lane.b32.xlu0 %v154, 126
  %v1169 = vpop.permute.xlu0 %1168
  %1170 = vrot.lane.b32.xlu0 %v153, 126
  %v1171 = vpop.permute.xlu0 %1170
  %vm1172 = vcmask 1031168
  %v1173 = vsel %vm1172, %v1159, %v1161
  %v1174 = vsel %vm1172, %v1161, %v1163
  %v1175 = vsel %vm1172, %v1163, %v1165
  %v1176 = vsel %vm1172, %v1165, %v1167
  %v1177 = vsel %vm1172, %v1167, %v1169
  %v1178 = vsel %vm1172, %v1169, %v1171
  %v1180 = vsel %vm176, %v109, 0
  %v1183 = vsel %vm180, %v1173, 0
  %v1186 = vsel %vm180, %v1174, 0
  %v1189 = vsel %vm180, %v1175, 0
  %v1192 = vsel %vm180, %v1176, 0
  %v1195 = vsel %vm180, %v1177, 0
  %v1198 = vsel %vm180, %v1178, 0
  %1200 = vmatprep.subr.bf16.mxu0 0
  %1201 = vmatpush1.bf16.msra.mxu0 0
  %1202 = vmatprep.subr.bf16.mxu0 0
  %1203 = vmatpush1.bf16.msra.mxu0 0
  %1204 = vmatprep.subr.bf16.mxu0 0
  %1205 = vmatpush1.bf16.msra.mxu0 0
  %1206 = vmatprep.subr.bf16.mxu0 0
  %1207 = vmatpush1.bf16.msra.mxu0 0
  %1208 = vmatprep.subr.bf16.mxu0 0
  %1209 = vmatpush1.bf16.msra.mxu0 0
  %1210 = vmatprep.subr.bf16.mxu0 0
  %1211 = vmatpush1.bf16.msra.mxu0 0
  %1212 = vmatprep.subr.bf16.mxu0 0
  %1213 = vmatpush1.bf16.msra.mxu0 0
  %1214 = vmatprep.subr.bf16.mxu0 %v1186
  %1215 = vmatpush1.bf16.msra.mxu0 %v1183
  %1216 = vmatprep.subr.bf16.mxu0 0
  %1217 = vmatpush2.bf16.msra.mxu0 0
  %1218 = vmatprep.subr.bf16.mxu0 0
  %1219 = vmatpush2.bf16.msra.mxu0 0
  %1220 = vmatprep.subr.bf16.mxu0 0
  %1221 = vmatpush2.bf16.msra.mxu0 0
  %1222 = vmatprep.subr.bf16.mxu0 0
  %1223 = vmatpush2.bf16.msra.mxu0 0
  %1224 = vmatprep.subr.bf16.mxu0 0
  %1225 = vmatpush2.bf16.msra.mxu0 0
  %1226 = vmatprep.subr.bf16.mxu0 0
  %1227 = vmatpush2.bf16.msra.mxu0 0
  %1228 = vmatprep.subr.bf16.mxu0 0
  %1229 = vmatpush2.bf16.msra.mxu0 0
  %1230 = vmatprep.subr.bf16.mxu0 0
  %1231 = vmatpush2.bf16.msra.mxu0 0
  %1232 = vmatprep.mubr.bf16.mxu0 0
  %1233 = vmatmul.mubr.bf16.gmra.mxu0 %v1180
  %v1234 = vpop.f32.mrf.mxu0
  %v1235 = vadd.f32 0.0, %v1234
  %v1236 = vpop.f32.mrf.mxu0
  %v1237 = vadd.f32 0.0, %v1236
  %v1238 = vpop.f32.mrf.mxu0
  %v1239 = vpop.f32.mrf.mxu0
  %1240 = vdwg.mxu0
  %1241 = vmatprep.subr.bf16.mxu0 0
  %1242 = vmatpush1.bf16.msra.mxu0 0
  %1243 = vmatprep.subr.bf16.mxu0 0
  %1244 = vmatpush1.bf16.msra.mxu0 0
  %1245 = vmatprep.subr.bf16.mxu0 0
  %1246 = vmatpush1.bf16.msra.mxu0 0
  %1247 = vmatprep.subr.bf16.mxu0 0
  %1248 = vmatpush1.bf16.msra.mxu0 0
  %1249 = vmatprep.subr.bf16.mxu0 0
  %1250 = vmatpush1.bf16.msra.mxu0 0
  %1251 = vmatprep.subr.bf16.mxu0 0
  %1252 = vmatpush1.bf16.msra.mxu0 0
  %1253 = vmatprep.subr.bf16.mxu0 0
  %1254 = vmatpush1.bf16.msra.mxu0 0
  %1255 = vmatprep.subr.bf16.mxu0 %v1192
  %1256 = vmatpush1.bf16.msra.mxu0 %v1189
  %1257 = vmatprep.subr.bf16.mxu0 0
  %1258 = vmatpush2.bf16.msra.mxu0 0
  %1259 = vmatprep.subr.bf16.mxu0 0
  %1260 = vmatpush2.bf16.msra.mxu0 0
  %1261 = vmatprep.subr.bf16.mxu0 0
  %1262 = vmatpush2.bf16.msra.mxu0 0
  %1263 = vmatprep.subr.bf16.mxu0 0
  %1264 = vmatpush2.bf16.msra.mxu0 0
  %1265 = vmatprep.subr.bf16.mxu0 0
  %1266 = vmatpush2.bf16.msra.mxu0 0
  %1267 = vmatprep.subr.bf16.mxu0 0
  %1268 = vmatpush2.bf16.msra.mxu0 0
  %1269 = vmatprep.subr.bf16.mxu0 0
  %1270 = vmatpush2.bf16.msra.mxu0 0
  %1271 = vmatprep.subr.bf16.mxu0 0
  %1272 = vmatpush2.bf16.msra.mxu0 0
  %1273 = vmatprep.mubr.bf16.mxu0 0
  %1274 = vmatmul.mubr.bf16.gmra.mxu0 %v1180
  %v1275 = vpop.f32.mrf.mxu0
  %v1276 = vadd.f32 0.0, %v1275
  %v1277 = vpop.f32.mrf.mxu0
  %v1278 = vadd.f32 0.0, %v1277
  %v1279 = vpop.f32.mrf.mxu0
  %v1280 = vpop.f32.mrf.mxu0
  %1281 = vdwg.mxu0
  %1282 = vmatprep.subr.bf16.mxu0 0
  %1283 = vmatpush1.bf16.msra.mxu0 0
  %1284 = vmatprep.subr.bf16.mxu0 0
  %1285 = vmatpush1.bf16.msra.mxu0 0
  %1286 = vmatprep.subr.bf16.mxu0 0
  %1287 = vmatpush1.bf16.msra.mxu0 0
  %1288 = vmatprep.subr.bf16.mxu0 0
  %1289 = vmatpush1.bf16.msra.mxu0 0
  %1290 = vmatprep.subr.bf16.mxu0 0
  %1291 = vmatpush1.bf16.msra.mxu0 0
  %1292 = vmatprep.subr.bf16.mxu0 0
  %1293 = vmatpush1.bf16.msra.mxu0 0
  %1294 = vmatprep.subr.bf16.mxu0 0
  %1295 = vmatpush1.bf16.msra.mxu0 0
  %1296 = vmatprep.subr.bf16.mxu0 %v1198
  %1297 = vmatpush1.bf16.msra.mxu0 %v1195
  %1298 = vmatprep.subr.bf16.mxu0 0
  %1299 = vmatpush2.bf16.msra.mxu0 0
  %1300 = vmatprep.subr.bf16.mxu0 0
  %1301 = vmatpush2.bf16.msra.mxu0 0
  %1302 = vmatprep.subr.bf16.mxu0 0
  %1303 = vmatpush2.bf16.msra.mxu0 0
  %1304 = vmatprep.subr.bf16.mxu0 0
  %1305 = vmatpush2.bf16.msra.mxu0 0
  %1306 = vmatprep.subr.bf16.mxu0 0
  %1307 = vmatpush2.bf16.msra.mxu0 0
  %1308 = vmatprep.subr.bf16.mxu0 0
  %1309 = vmatpush2.bf16.msra.mxu0 0
  %1310 = vmatprep.subr.bf16.mxu0 0
  %1311 = vmatpush2.bf16.msra.mxu0 0
  %1312 = vmatprep.subr.bf16.mxu0 0
  %1313 = vmatpush2.bf16.msra.mxu0 0
  %1314 = vmatprep.mubr.bf16.mxu0 0
  %1315 = vmatmul.mubr.bf16.gmra.mxu0 %v1180
  %v1316 = vpop.f32.mrf.mxu0
  %v1317 = vadd.f32 0.0, %v1316
  %v1318 = vpop.f32.mrf.mxu0
  %v1319 = vadd.f32 0.0, %v1318
  %v1320 = vpop.f32.mrf.mxu0
  %v1321 = vpop.f32.mrf.mxu0
  %1322 = vdwg.mxu0
  %v1323 = vadd.f32 %v1070, %v1235
  %v1324 = vadd.f32 %v1072, %v1237
  %v1325 = vadd.f32 %v1111, %v1276
  %v1326 = vadd.f32 %v1113, %v1278
  %v1327 = vadd.f32 %v1152, %v1317
  %v1328 = vadd.f32 %v1154, %v1319
  %v1330 = vsel %vm176, %v110, 0
  %1332 = vmatprep.subr.bf16.mxu0 0
  %1333 = vmatpush1.bf16.msra.mxu0 0
  %1334 = vmatprep.subr.bf16.mxu0 0
  %1335 = vmatpush1.bf16.msra.mxu0 0
  %1336 = vmatprep.subr.bf16.mxu0 0
  %1337 = vmatpush1.bf16.msra.mxu0 0
  %1338 = vmatprep.subr.bf16.mxu0 0
  %1339 = vmatpush1.bf16.msra.mxu0 0
  %1340 = vmatprep.subr.bf16.mxu0 0
  %1341 = vmatpush1.bf16.msra.mxu0 0
  %1342 = vmatprep.subr.bf16.mxu0 0
  %1343 = vmatpush1.bf16.msra.mxu0 0
  %1344 = vmatprep.subr.bf16.mxu0 0
  %1345 = vmatpush1.bf16.msra.mxu0 0
  %1346 = vmatprep.subr.bf16.mxu0 %v515
  %1347 = vmatpush1.bf16.msra.mxu0 %v512
  %1348 = vmatprep.subr.bf16.mxu0 0
  %1349 = vmatpush2.bf16.msra.mxu0 0
  %1350 = vmatprep.subr.bf16.mxu0 0
  %1351 = vmatpush2.bf16.msra.mxu0 0
  %1352 = vmatprep.subr.bf16.mxu0 0
  %1353 = vmatpush2.bf16.msra.mxu0 0
  %1354 = vmatprep.subr.bf16.mxu0 0
  %1355 = vmatpush2.bf16.msra.mxu0 0
  %1356 = vmatprep.subr.bf16.mxu0 0
  %1357 = vmatpush2.bf16.msra.mxu0 0
  %1358 = vmatprep.subr.bf16.mxu0 0
  %1359 = vmatpush2.bf16.msra.mxu0 0
  %1360 = vmatprep.subr.bf16.mxu0 0
  %1361 = vmatpush2.bf16.msra.mxu0 0
  %1362 = vmatprep.subr.bf16.mxu0 0
  %1363 = vmatpush2.bf16.msra.mxu0 0
  %1364 = vmatprep.mubr.bf16.mxu0 0
  %1365 = vmatmul.mubr.bf16.gmra.mxu0 %v1330
  %v1366 = vpop.f32.mrf.mxu0
  %v1367 = vadd.f32 0.0, %v1366
  %v1368 = vpop.f32.mrf.mxu0
  %v1369 = vadd.f32 0.0, %v1368
  %v1370 = vpop.f32.mrf.mxu0
  %v1371 = vpop.f32.mrf.mxu0
  %1372 = vdwg.mxu0
  %1373 = vmatprep.subr.bf16.mxu0 0
  %1374 = vmatpush1.bf16.msra.mxu0 0
  %1375 = vmatprep.subr.bf16.mxu0 0
  %1376 = vmatpush1.bf16.msra.mxu0 0
  %1377 = vmatprep.subr.bf16.mxu0 0
  %1378 = vmatpush1.bf16.msra.mxu0 0
  %1379 = vmatprep.subr.bf16.mxu0 0
  %1380 = vmatpush1.bf16.msra.mxu0 0
  %1381 = vmatprep.subr.bf16.mxu0 0
  %1382 = vmatpush1.bf16.msra.mxu0 0
  %1383 = vmatprep.subr.bf16.mxu0 0
  %1384 = vmatpush1.bf16.msra.mxu0 0
  %1385 = vmatprep.subr.bf16.mxu0 0
  %1386 = vmatpush1.bf16.msra.mxu0 0
  %1387 = vmatprep.subr.bf16.mxu0 %v521
  %1388 = vmatpush1.bf16.msra.mxu0 %v518
  %1389 = vmatprep.subr.bf16.mxu0 0
  %1390 = vmatpush2.bf16.msra.mxu0 0
  %1391 = vmatprep.subr.bf16.mxu0 0
  %1392 = vmatpush2.bf16.msra.mxu0 0
  %1393 = vmatprep.subr.bf16.mxu0 0
  %1394 = vmatpush2.bf16.msra.mxu0 0
  %1395 = vmatprep.subr.bf16.mxu0 0
  %1396 = vmatpush2.bf16.msra.mxu0 0
  %1397 = vmatprep.subr.bf16.mxu0 0
  %1398 = vmatpush2.bf16.msra.mxu0 0
  %1399 = vmatprep.subr.bf16.mxu0 0
  %1400 = vmatpush2.bf16.msra.mxu0 0
  %1401 = vmatprep.subr.bf16.mxu0 0
  %1402 = vmatpush2.bf16.msra.mxu0 0
  %1403 = vmatprep.subr.bf16.mxu0 0
  %1404 = vmatpush2.bf16.msra.mxu0 0
  %1405 = vmatprep.mubr.bf16.mxu0 0
  %1406 = vmatmul.mubr.bf16.gmra.mxu0 %v1330
  %v1407 = vpop.f32.mrf.mxu0
  %v1408 = vadd.f32 0.0, %v1407
  %v1409 = vpop.f32.mrf.mxu0
  %v1410 = vadd.f32 0.0, %v1409
  %v1411 = vpop.f32.mrf.mxu0
  %v1412 = vpop.f32.mrf.mxu0
  %1413 = vdwg.mxu0
  %1414 = vmatprep.subr.bf16.mxu0 0
  %1415 = vmatpush1.bf16.msra.mxu0 0
  %1416 = vmatprep.subr.bf16.mxu0 0
  %1417 = vmatpush1.bf16.msra.mxu0 0
  %1418 = vmatprep.subr.bf16.mxu0 0
  %1419 = vmatpush1.bf16.msra.mxu0 0
  %1420 = vmatprep.subr.bf16.mxu0 0
  %1421 = vmatpush1.bf16.msra.mxu0 0
  %1422 = vmatprep.subr.bf16.mxu0 0
  %1423 = vmatpush1.bf16.msra.mxu0 0
  %1424 = vmatprep.subr.bf16.mxu0 0
  %1425 = vmatpush1.bf16.msra.mxu0 0
  %1426 = vmatprep.subr.bf16.mxu0 0
  %1427 = vmatpush1.bf16.msra.mxu0 0
  %1428 = vmatprep.subr.bf16.mxu0 %v527
  %1429 = vmatpush1.bf16.msra.mxu0 %v524
  %1430 = vmatprep.subr.bf16.mxu0 0
  %1431 = vmatpush2.bf16.msra.mxu0 0
  %1432 = vmatprep.subr.bf16.mxu0 0
  %1433 = vmatpush2.bf16.msra.mxu0 0
  %1434 = vmatprep.subr.bf16.mxu0 0
  %1435 = vmatpush2.bf16.msra.mxu0 0
  %1436 = vmatprep.subr.bf16.mxu0 0
  %1437 = vmatpush2.bf16.msra.mxu0 0
  %1438 = vmatprep.subr.bf16.mxu0 0
  %1439 = vmatpush2.bf16.msra.mxu0 0
  %1440 = vmatprep.subr.bf16.mxu0 0
  %1441 = vmatpush2.bf16.msra.mxu0 0
  %1442 = vmatprep.subr.bf16.mxu0 0
  %1443 = vmatpush2.bf16.msra.mxu0 0
  %1444 = vmatprep.subr.bf16.mxu0 0
  %1445 = vmatpush2.bf16.msra.mxu0 0
  %1446 = vmatprep.mubr.bf16.mxu0 0
  %1447 = vmatmul.mubr.bf16.gmra.mxu0 %v1330
  %v1448 = vpop.f32.mrf.mxu0
  %v1449 = vadd.f32 0.0, %v1448
  %v1450 = vpop.f32.mrf.mxu0
  %v1451 = vadd.f32 0.0, %v1450
  %v1452 = vpop.f32.mrf.mxu0
  %v1453 = vpop.f32.mrf.mxu0
  %1454 = vdwg.mxu0
  %v1455 = vadd.f32 %v1323, %v1367
  %v1456 = vadd.f32 %v1324, %v1369
  %v1457 = vadd.f32 %v1325, %v1408
  %v1458 = vadd.f32 %v1326, %v1410
  %v1459 = vadd.f32 %v1327, %v1449
  %v1460 = vadd.f32 %v1328, %v1451
  %v1461 = vmul.f32 %v1455, %v812
  %v1462 = vmul.f32 %v1456, %v816
  %v1463 = vmul.f32 %v1457, %v820
  %v1464 = vmul.f32 %v1458, %v824
  %v1465 = vmul.f32 %v1459, %v828
  %v1466 = vmul.f32 %v1460, %v832
  %v1467 = vadd.f32 %v1461, %v1462
  %v1468 = vadd.f32 %v1467, %v1463
  %v1469 = vadd.f32 %v1468, %v1464
  %v1470 = vadd.f32 %v1469, %v1465
  %v1471 = vadd.f32 %v1470, %v1466
  %1472 = vadd.xlane.f32.xlu0 %v1471
  %v1473 = vpop.xlane.xlu0 %1472
  %v1474 = vadd.f32 %v852, %v1473
  %v1475 = vmul.f32 %v1461, %v1455
  %v1476 = vmul.f32 %v1462, %v1456
  %v1477 = vmul.f32 %v1463, %v1457
  %v1478 = vmul.f32 %v1464, %v1458
  %v1479 = vmul.f32 %v1465, %v1459
  %v1480 = vmul.f32 %v1466, %v1460
  %v1481 = vadd.f32 %v1475, %v1476
  %v1482 = vadd.f32 %v1481, %v1477
  %v1483 = vadd.f32 %v1482, %v1478
  %v1484 = vadd.f32 %v1483, %v1479
  %v1485 = vadd.f32 %v1484, %v1480
  %1486 = vadd.xlane.f32.xlu0 %v1485
  %v1487 = vpop.xlane.xlu0 %1486
  %v1488 = vadd.f32 %v866, %v1487
  %1489 = vrot.lane.b32.xlu0 %v129, 92
  %v1490 = vpop.permute.xlu0 %1489
  %1491 = vrot.lane.b32.xlu0 %v137, 92
  %v1492 = vpop.permute.xlu0 %1491
  %1493 = vrot.lane.b32.xlu0 %v136, 92
  %v1494 = vpop.permute.xlu0 %1493
  %1495 = vrot.lane.b32.xlu0 %v138, 92
  %v1496 = vpop.permute.xlu0 %1495
  %1497 = vrot.lane.b32.xlu0 %v146, 92
  %v1498 = vpop.permute.xlu0 %1497
  %1499 = vrot.lane.b32.xlu0 %v154, 92
  %v1500 = vpop.permute.xlu0 %1499
  %1501 = vrot.lane.b32.xlu0 %v153, 92
  %v1502 = vpop.permute.xlu0 %1501
  %vm1503 = vcmask 752640
  %v1504 = vsel %vm1503, %v1490, %v1492
  %v1505 = vsel %vm1503, %v1492, %v1494
  %v1506 = vsel %vm1503, %v1494, %v1496
  %v1507 = vsel %vm1503, %v1496, %v1498
  %v1508 = vsel %vm1503, %v1498, %v1500
  %v1509 = vsel %vm1503, %v1500, %v1502
  %v1511 = vsel %vm176, %v112, 0
  %v1514 = vsel %vm180, %v1504, 0
  %v1517 = vsel %vm180, %v1505, 0
  %v1520 = vsel %vm180, %v1506, 0
  %v1523 = vsel %vm180, %v1507, 0
  %v1526 = vsel %vm180, %v1508, 0
  %v1529 = vsel %vm180, %v1509, 0
  %1531 = vmatprep.subr.bf16.mxu0 0
  %1532 = vmatpush1.bf16.msra.mxu0 0
  %1533 = vmatprep.subr.bf16.mxu0 0
  %1534 = vmatpush1.bf16.msra.mxu0 0
  %1535 = vmatprep.subr.bf16.mxu0 0
  %1536 = vmatpush1.bf16.msra.mxu0 0
  %1537 = vmatprep.subr.bf16.mxu0 0
  %1538 = vmatpush1.bf16.msra.mxu0 0
  %1539 = vmatprep.subr.bf16.mxu0 0
  %1540 = vmatpush1.bf16.msra.mxu0 0
  %1541 = vmatprep.subr.bf16.mxu0 0
  %1542 = vmatpush1.bf16.msra.mxu0 0
  %1543 = vmatprep.subr.bf16.mxu0 0
  %1544 = vmatpush1.bf16.msra.mxu0 0
  %1545 = vmatprep.subr.bf16.mxu0 %v1517
  %1546 = vmatpush1.bf16.msra.mxu0 %v1514
  %1547 = vmatprep.subr.bf16.mxu0 0
  %1548 = vmatpush2.bf16.msra.mxu0 0
  %1549 = vmatprep.subr.bf16.mxu0 0
  %1550 = vmatpush2.bf16.msra.mxu0 0
  %1551 = vmatprep.subr.bf16.mxu0 0
  %1552 = vmatpush2.bf16.msra.mxu0 0
  %1553 = vmatprep.subr.bf16.mxu0 0
  %1554 = vmatpush2.bf16.msra.mxu0 0
  %1555 = vmatprep.subr.bf16.mxu0 0
  %1556 = vmatpush2.bf16.msra.mxu0 0
  %1557 = vmatprep.subr.bf16.mxu0 0
  %1558 = vmatpush2.bf16.msra.mxu0 0
  %1559 = vmatprep.subr.bf16.mxu0 0
  %1560 = vmatpush2.bf16.msra.mxu0 0
  %1561 = vmatprep.subr.bf16.mxu0 0
  %1562 = vmatpush2.bf16.msra.mxu0 0
  %1563 = vmatprep.mubr.bf16.mxu0 0
  %1564 = vmatmul.mubr.bf16.gmra.mxu0 %v1511
  %v1565 = vpop.f32.mrf.mxu0
  %v1566 = vadd.f32 0.0, %v1565
  %v1567 = vpop.f32.mrf.mxu0
  %v1568 = vadd.f32 0.0, %v1567
  %v1569 = vpop.f32.mrf.mxu0
  %v1570 = vpop.f32.mrf.mxu0
  %1571 = vdwg.mxu0
  %1572 = vmatprep.subr.bf16.mxu0 0
  %1573 = vmatpush1.bf16.msra.mxu0 0
  %1574 = vmatprep.subr.bf16.mxu0 0
  %1575 = vmatpush1.bf16.msra.mxu0 0
  %1576 = vmatprep.subr.bf16.mxu0 0
  %1577 = vmatpush1.bf16.msra.mxu0 0
  %1578 = vmatprep.subr.bf16.mxu0 0
  %1579 = vmatpush1.bf16.msra.mxu0 0
  %1580 = vmatprep.subr.bf16.mxu0 0
  %1581 = vmatpush1.bf16.msra.mxu0 0
  %1582 = vmatprep.subr.bf16.mxu0 0
  %1583 = vmatpush1.bf16.msra.mxu0 0
  %1584 = vmatprep.subr.bf16.mxu0 0
  %1585 = vmatpush1.bf16.msra.mxu0 0
  %1586 = vmatprep.subr.bf16.mxu0 %v1523
  %1587 = vmatpush1.bf16.msra.mxu0 %v1520
  %1588 = vmatprep.subr.bf16.mxu0 0
  %1589 = vmatpush2.bf16.msra.mxu0 0
  %1590 = vmatprep.subr.bf16.mxu0 0
  %1591 = vmatpush2.bf16.msra.mxu0 0
  %1592 = vmatprep.subr.bf16.mxu0 0
  %1593 = vmatpush2.bf16.msra.mxu0 0
  %1594 = vmatprep.subr.bf16.mxu0 0
  %1595 = vmatpush2.bf16.msra.mxu0 0
  %1596 = vmatprep.subr.bf16.mxu0 0
  %1597 = vmatpush2.bf16.msra.mxu0 0
  %1598 = vmatprep.subr.bf16.mxu0 0
  %1599 = vmatpush2.bf16.msra.mxu0 0
  %1600 = vmatprep.subr.bf16.mxu0 0
  %1601 = vmatpush2.bf16.msra.mxu0 0
  %1602 = vmatprep.subr.bf16.mxu0 0
  %1603 = vmatpush2.bf16.msra.mxu0 0
  %1604 = vmatprep.mubr.bf16.mxu0 0
  %1605 = vmatmul.mubr.bf16.gmra.mxu0 %v1511
  %v1606 = vpop.f32.mrf.mxu0
  %v1607 = vadd.f32 0.0, %v1606
  %v1608 = vpop.f32.mrf.mxu0
  %v1609 = vadd.f32 0.0, %v1608
  %v1610 = vpop.f32.mrf.mxu0
  %v1611 = vpop.f32.mrf.mxu0
  %1612 = vdwg.mxu0
  %1613 = vmatprep.subr.bf16.mxu0 0
  %1614 = vmatpush1.bf16.msra.mxu0 0
  %1615 = vmatprep.subr.bf16.mxu0 0
  %1616 = vmatpush1.bf16.msra.mxu0 0
  %1617 = vmatprep.subr.bf16.mxu0 0
  %1618 = vmatpush1.bf16.msra.mxu0 0
  %1619 = vmatprep.subr.bf16.mxu0 0
  %1620 = vmatpush1.bf16.msra.mxu0 0
  %1621 = vmatprep.subr.bf16.mxu0 0
  %1622 = vmatpush1.bf16.msra.mxu0 0
  %1623 = vmatprep.subr.bf16.mxu0 0
  %1624 = vmatpush1.bf16.msra.mxu0 0
  %1625 = vmatprep.subr.bf16.mxu0 0
  %1626 = vmatpush1.bf16.msra.mxu0 0
  %1627 = vmatprep.subr.bf16.mxu0 %v1529
  %1628 = vmatpush1.bf16.msra.mxu0 %v1526
  %1629 = vmatprep.subr.bf16.mxu0 0
  %1630 = vmatpush2.bf16.msra.mxu0 0
  %1631 = vmatprep.subr.bf16.mxu0 0
  %1632 = vmatpush2.bf16.msra.mxu0 0
  %1633 = vmatprep.subr.bf16.mxu0 0
  %1634 = vmatpush2.bf16.msra.mxu0 0
  %1635 = vmatprep.subr.bf16.mxu0 0
  %1636 = vmatpush2.bf16.msra.mxu0 0
  %1637 = vmatprep.subr.bf16.mxu0 0
  %1638 = vmatpush2.bf16.msra.mxu0 0
  %1639 = vmatprep.subr.bf16.mxu0 0
  %1640 = vmatpush2.bf16.msra.mxu0 0
  %1641 = vmatprep.subr.bf16.mxu0 0
  %1642 = vmatpush2.bf16.msra.mxu0 0
  %1643 = vmatprep.subr.bf16.mxu0 0
  %1644 = vmatpush2.bf16.msra.mxu0 0
  %1645 = vmatprep.mubr.bf16.mxu0 0
  %1646 = vmatmul.mubr.bf16.gmra.mxu0 %v1511
  %v1647 = vpop.f32.mrf.mxu0
  %v1648 = vadd.f32 0.0, %v1647
  %v1649 = vpop.f32.mrf.mxu0
  %v1650 = vadd.f32 0.0, %v1649
  %v1651 = vpop.f32.mrf.mxu0
  %v1652 = vpop.f32.mrf.mxu0
  %1653 = vdwg.mxu0
  %1654 = vrot.lane.b32.xlu0 %v129, 91
  %v1655 = vpop.permute.xlu0 %1654
  %1656 = vrot.lane.b32.xlu0 %v137, 91
  %v1657 = vpop.permute.xlu0 %1656
  %1658 = vrot.lane.b32.xlu0 %v136, 91
  %v1659 = vpop.permute.xlu0 %1658
  %1660 = vrot.lane.b32.xlu0 %v138, 91
  %v1661 = vpop.permute.xlu0 %1660
  %1662 = vrot.lane.b32.xlu0 %v146, 91
  %v1663 = vpop.permute.xlu0 %1662
  %1664 = vrot.lane.b32.xlu0 %v154, 91
  %v1665 = vpop.permute.xlu0 %1664
  %1666 = vrot.lane.b32.xlu0 %v153, 91
  %v1667 = vpop.permute.xlu0 %1666
  %vm1668 = vcmask 744448
  %v1669 = vsel %vm1668, %v1655, %v1657
  %v1670 = vsel %vm1668, %v1657, %v1659
  %v1671 = vsel %vm1668, %v1659, %v1661
  %v1672 = vsel %vm1668, %v1661, %v1663
  %v1673 = vsel %vm1668, %v1663, %v1665
  %v1674 = vsel %vm1668, %v1665, %v1667
  %v1676 = vsel %vm176, %v111, 0
  %v1679 = vsel %vm180, %v1669, 0
  %v1682 = vsel %vm180, %v1670, 0
  %v1685 = vsel %vm180, %v1671, 0
  %v1688 = vsel %vm180, %v1672, 0
  %v1691 = vsel %vm180, %v1673, 0
  %v1694 = vsel %vm180, %v1674, 0
  %1696 = vmatprep.subr.bf16.mxu0 0
  %1697 = vmatpush1.bf16.msra.mxu0 0
  %1698 = vmatprep.subr.bf16.mxu0 0
  %1699 = vmatpush1.bf16.msra.mxu0 0
  %1700 = vmatprep.subr.bf16.mxu0 0
  %1701 = vmatpush1.bf16.msra.mxu0 0
  %1702 = vmatprep.subr.bf16.mxu0 0
  %1703 = vmatpush1.bf16.msra.mxu0 0
  %1704 = vmatprep.subr.bf16.mxu0 0
  %1705 = vmatpush1.bf16.msra.mxu0 0
  %1706 = vmatprep.subr.bf16.mxu0 0
  %1707 = vmatpush1.bf16.msra.mxu0 0
  %1708 = vmatprep.subr.bf16.mxu0 0
  %1709 = vmatpush1.bf16.msra.mxu0 0
  %1710 = vmatprep.subr.bf16.mxu0 %v1682
  %1711 = vmatpush1.bf16.msra.mxu0 %v1679
  %1712 = vmatprep.subr.bf16.mxu0 0
  %1713 = vmatpush2.bf16.msra.mxu0 0
  %1714 = vmatprep.subr.bf16.mxu0 0
  %1715 = vmatpush2.bf16.msra.mxu0 0
  %1716 = vmatprep.subr.bf16.mxu0 0
  %1717 = vmatpush2.bf16.msra.mxu0 0
  %1718 = vmatprep.subr.bf16.mxu0 0
  %1719 = vmatpush2.bf16.msra.mxu0 0
  %1720 = vmatprep.subr.bf16.mxu0 0
  %1721 = vmatpush2.bf16.msra.mxu0 0
  %1722 = vmatprep.subr.bf16.mxu0 0
  %1723 = vmatpush2.bf16.msra.mxu0 0
  %1724 = vmatprep.subr.bf16.mxu0 0
  %1725 = vmatpush2.bf16.msra.mxu0 0
  %1726 = vmatprep.subr.bf16.mxu0 0
  %1727 = vmatpush2.bf16.msra.mxu0 0
  %1728 = vmatprep.mubr.bf16.mxu0 0
  %1729 = vmatmul.mubr.bf16.gmra.mxu0 %v1676
  %v1730 = vpop.f32.mrf.mxu0
  %v1731 = vadd.f32 %v1566, %v1730
  %v1732 = vpop.f32.mrf.mxu0
  %v1733 = vadd.f32 %v1568, %v1732
  %v1734 = vpop.f32.mrf.mxu0
  %v1735 = vpop.f32.mrf.mxu0
  %1736 = vdwg.mxu0
  %1737 = vmatprep.subr.bf16.mxu0 0
  %1738 = vmatpush1.bf16.msra.mxu0 0
  %1739 = vmatprep.subr.bf16.mxu0 0
  %1740 = vmatpush1.bf16.msra.mxu0 0
  %1741 = vmatprep.subr.bf16.mxu0 0
  %1742 = vmatpush1.bf16.msra.mxu0 0
  %1743 = vmatprep.subr.bf16.mxu0 0
  %1744 = vmatpush1.bf16.msra.mxu0 0
  %1745 = vmatprep.subr.bf16.mxu0 0
  %1746 = vmatpush1.bf16.msra.mxu0 0
  %1747 = vmatprep.subr.bf16.mxu0 0
  %1748 = vmatpush1.bf16.msra.mxu0 0
  %1749 = vmatprep.subr.bf16.mxu0 0
  %1750 = vmatpush1.bf16.msra.mxu0 0
  %1751 = vmatprep.subr.bf16.mxu0 %v1688
  %1752 = vmatpush1.bf16.msra.mxu0 %v1685
  %1753 = vmatprep.subr.bf16.mxu0 0
  %1754 = vmatpush2.bf16.msra.mxu0 0
  %1755 = vmatprep.subr.bf16.mxu0 0
  %1756 = vmatpush2.bf16.msra.mxu0 0
  %1757 = vmatprep.subr.bf16.mxu0 0
  %1758 = vmatpush2.bf16.msra.mxu0 0
  %1759 = vmatprep.subr.bf16.mxu0 0
  %1760 = vmatpush2.bf16.msra.mxu0 0
  %1761 = vmatprep.subr.bf16.mxu0 0
  %1762 = vmatpush2.bf16.msra.mxu0 0
  %1763 = vmatprep.subr.bf16.mxu0 0
  %1764 = vmatpush2.bf16.msra.mxu0 0
  %1765 = vmatprep.subr.bf16.mxu0 0
  %1766 = vmatpush2.bf16.msra.mxu0 0
  %1767 = vmatprep.subr.bf16.mxu0 0
  %1768 = vmatpush2.bf16.msra.mxu0 0
  %1769 = vmatprep.mubr.bf16.mxu0 0
  %1770 = vmatmul.mubr.bf16.gmra.mxu0 %v1676
  %v1771 = vpop.f32.mrf.mxu0
  %v1772 = vadd.f32 %v1607, %v1771
  %v1773 = vpop.f32.mrf.mxu0
  %v1774 = vadd.f32 %v1609, %v1773
  %v1775 = vpop.f32.mrf.mxu0
  %v1776 = vpop.f32.mrf.mxu0
  %1777 = vdwg.mxu0
  %1778 = vmatprep.subr.bf16.mxu0 0
  %1779 = vmatpush1.bf16.msra.mxu0 0
  %1780 = vmatprep.subr.bf16.mxu0 0
  %1781 = vmatpush1.bf16.msra.mxu0 0
  %1782 = vmatprep.subr.bf16.mxu0 0
  %1783 = vmatpush1.bf16.msra.mxu0 0
  %1784 = vmatprep.subr.bf16.mxu0 0
  %1785 = vmatpush1.bf16.msra.mxu0 0
  %1786 = vmatprep.subr.bf16.mxu0 0
  %1787 = vmatpush1.bf16.msra.mxu0 0
  %1788 = vmatprep.subr.bf16.mxu0 0
  %1789 = vmatpush1.bf16.msra.mxu0 0
  %1790 = vmatprep.subr.bf16.mxu0 0
  %1791 = vmatpush1.bf16.msra.mxu0 0
  %1792 = vmatprep.subr.bf16.mxu0 %v1694
  %1793 = vmatpush1.bf16.msra.mxu0 %v1691
  %1794 = vmatprep.subr.bf16.mxu0 0
  %1795 = vmatpush2.bf16.msra.mxu0 0
  %1796 = vmatprep.subr.bf16.mxu0 0
  %1797 = vmatpush2.bf16.msra.mxu0 0
  %1798 = vmatprep.subr.bf16.mxu0 0
  %1799 = vmatpush2.bf16.msra.mxu0 0
  %1800 = vmatprep.subr.bf16.mxu0 0
  %1801 = vmatpush2.bf16.msra.mxu0 0
  %1802 = vmatprep.subr.bf16.mxu0 0
  %1803 = vmatpush2.bf16.msra.mxu0 0
  %1804 = vmatprep.subr.bf16.mxu0 0
  %1805 = vmatpush2.bf16.msra.mxu0 0
  %1806 = vmatprep.subr.bf16.mxu0 0
  %1807 = vmatpush2.bf16.msra.mxu0 0
  %1808 = vmatprep.subr.bf16.mxu0 0
  %1809 = vmatpush2.bf16.msra.mxu0 0
  %1810 = vmatprep.mubr.bf16.mxu0 0
  %1811 = vmatmul.mubr.bf16.gmra.mxu0 %v1676
  %v1812 = vpop.f32.mrf.mxu0
  %v1813 = vadd.f32 %v1648, %v1812
  %v1814 = vpop.f32.mrf.mxu0
  %v1815 = vadd.f32 %v1650, %v1814
  %v1816 = vpop.f32.mrf.mxu0
  %v1817 = vpop.f32.mrf.mxu0
  %1818 = vdwg.mxu0
  %v1820 = vsel %vm176, %v113, 0
  %1822 = vmatprep.subr.bf16.mxu0 0
  %1823 = vmatpush1.bf16.msra.mxu0 0
  %1824 = vmatprep.subr.bf16.mxu0 0
  %1825 = vmatpush1.bf16.msra.mxu0 0
  %1826 = vmatprep.subr.bf16.mxu0 0
  %1827 = vmatpush1.bf16.msra.mxu0 0
  %1828 = vmatprep.subr.bf16.mxu0 0
  %1829 = vmatpush1.bf16.msra.mxu0 0
  %1830 = vmatprep.subr.bf16.mxu0 0
  %1831 = vmatpush1.bf16.msra.mxu0 0
  %1832 = vmatprep.subr.bf16.mxu0 0
  %1833 = vmatpush1.bf16.msra.mxu0 0
  %1834 = vmatprep.subr.bf16.mxu0 0
  %1835 = vmatpush1.bf16.msra.mxu0 0
  %1836 = vmatprep.subr.bf16.mxu0 %v350
  %1837 = vmatpush1.bf16.msra.mxu0 %v347
  %1838 = vmatprep.subr.bf16.mxu0 0
  %1839 = vmatpush2.bf16.msra.mxu0 0
  %1840 = vmatprep.subr.bf16.mxu0 0
  %1841 = vmatpush2.bf16.msra.mxu0 0
  %1842 = vmatprep.subr.bf16.mxu0 0
  %1843 = vmatpush2.bf16.msra.mxu0 0
  %1844 = vmatprep.subr.bf16.mxu0 0
  %1845 = vmatpush2.bf16.msra.mxu0 0
  %1846 = vmatprep.subr.bf16.mxu0 0
  %1847 = vmatpush2.bf16.msra.mxu0 0
  %1848 = vmatprep.subr.bf16.mxu0 0
  %1849 = vmatpush2.bf16.msra.mxu0 0
  %1850 = vmatprep.subr.bf16.mxu0 0
  %1851 = vmatpush2.bf16.msra.mxu0 0
  %1852 = vmatprep.subr.bf16.mxu0 0
  %1853 = vmatpush2.bf16.msra.mxu0 0
  %1854 = vmatprep.mubr.bf16.mxu0 0
  %1855 = vmatmul.mubr.bf16.gmra.mxu0 %v1820
  %v1856 = vpop.f32.mrf.mxu0
  %v1857 = vadd.f32 0.0, %v1856
  %v1858 = vpop.f32.mrf.mxu0
  %v1859 = vadd.f32 0.0, %v1858
  %v1860 = vpop.f32.mrf.mxu0
  %v1861 = vpop.f32.mrf.mxu0
  %1862 = vdwg.mxu0
  %1863 = vmatprep.subr.bf16.mxu0 0
  %1864 = vmatpush1.bf16.msra.mxu0 0
  %1865 = vmatprep.subr.bf16.mxu0 0
  %1866 = vmatpush1.bf16.msra.mxu0 0
  %1867 = vmatprep.subr.bf16.mxu0 0
  %1868 = vmatpush1.bf16.msra.mxu0 0
  %1869 = vmatprep.subr.bf16.mxu0 0
  %1870 = vmatpush1.bf16.msra.mxu0 0
  %1871 = vmatprep.subr.bf16.mxu0 0
  %1872 = vmatpush1.bf16.msra.mxu0 0
  %1873 = vmatprep.subr.bf16.mxu0 0
  %1874 = vmatpush1.bf16.msra.mxu0 0
  %1875 = vmatprep.subr.bf16.mxu0 0
  %1876 = vmatpush1.bf16.msra.mxu0 0
  %1877 = vmatprep.subr.bf16.mxu0 %v356
  %1878 = vmatpush1.bf16.msra.mxu0 %v353
  %1879 = vmatprep.subr.bf16.mxu0 0
  %1880 = vmatpush2.bf16.msra.mxu0 0
  %1881 = vmatprep.subr.bf16.mxu0 0
  %1882 = vmatpush2.bf16.msra.mxu0 0
  %1883 = vmatprep.subr.bf16.mxu0 0
  %1884 = vmatpush2.bf16.msra.mxu0 0
  %1885 = vmatprep.subr.bf16.mxu0 0
  %1886 = vmatpush2.bf16.msra.mxu0 0
  %1887 = vmatprep.subr.bf16.mxu0 0
  %1888 = vmatpush2.bf16.msra.mxu0 0
  %1889 = vmatprep.subr.bf16.mxu0 0
  %1890 = vmatpush2.bf16.msra.mxu0 0
  %1891 = vmatprep.subr.bf16.mxu0 0
  %1892 = vmatpush2.bf16.msra.mxu0 0
  %1893 = vmatprep.subr.bf16.mxu0 0
  %1894 = vmatpush2.bf16.msra.mxu0 0
  %1895 = vmatprep.mubr.bf16.mxu0 0
  %1896 = vmatmul.mubr.bf16.gmra.mxu0 %v1820
  %v1897 = vpop.f32.mrf.mxu0
  %v1898 = vadd.f32 0.0, %v1897
  %v1899 = vpop.f32.mrf.mxu0
  %v1900 = vadd.f32 0.0, %v1899
  %v1901 = vpop.f32.mrf.mxu0
  %v1902 = vpop.f32.mrf.mxu0
  %1903 = vdwg.mxu0
  %1904 = vmatprep.subr.bf16.mxu0 0
  %1905 = vmatpush1.bf16.msra.mxu0 0
  %1906 = vmatprep.subr.bf16.mxu0 0
  %1907 = vmatpush1.bf16.msra.mxu0 0
  %1908 = vmatprep.subr.bf16.mxu0 0
  %1909 = vmatpush1.bf16.msra.mxu0 0
  %1910 = vmatprep.subr.bf16.mxu0 0
  %1911 = vmatpush1.bf16.msra.mxu0 0
  %1912 = vmatprep.subr.bf16.mxu0 0
  %1913 = vmatpush1.bf16.msra.mxu0 0
  %1914 = vmatprep.subr.bf16.mxu0 0
  %1915 = vmatpush1.bf16.msra.mxu0 0
  %1916 = vmatprep.subr.bf16.mxu0 0
  %1917 = vmatpush1.bf16.msra.mxu0 0
  %1918 = vmatprep.subr.bf16.mxu0 %v362
  %1919 = vmatpush1.bf16.msra.mxu0 %v359
  %1920 = vmatprep.subr.bf16.mxu0 0
  %1921 = vmatpush2.bf16.msra.mxu0 0
  %1922 = vmatprep.subr.bf16.mxu0 0
  %1923 = vmatpush2.bf16.msra.mxu0 0
  %1924 = vmatprep.subr.bf16.mxu0 0
  %1925 = vmatpush2.bf16.msra.mxu0 0
  %1926 = vmatprep.subr.bf16.mxu0 0
  %1927 = vmatpush2.bf16.msra.mxu0 0
  %1928 = vmatprep.subr.bf16.mxu0 0
  %1929 = vmatpush2.bf16.msra.mxu0 0
  %1930 = vmatprep.subr.bf16.mxu0 0
  %1931 = vmatpush2.bf16.msra.mxu0 0
  %1932 = vmatprep.subr.bf16.mxu0 0
  %1933 = vmatpush2.bf16.msra.mxu0 0
  %1934 = vmatprep.subr.bf16.mxu0 0
  %1935 = vmatpush2.bf16.msra.mxu0 0
  %1936 = vmatprep.mubr.bf16.mxu0 0
  %1937 = vmatmul.mubr.bf16.gmra.mxu0 %v1820
  %v1938 = vpop.f32.mrf.mxu0
  %v1939 = vadd.f32 0.0, %v1938
  %v1940 = vpop.f32.mrf.mxu0
  %v1941 = vadd.f32 0.0, %v1940
  %v1942 = vpop.f32.mrf.mxu0
  %v1943 = vpop.f32.mrf.mxu0
  %1944 = vdwg.mxu0
  %v1945 = vadd.f32 %v1731, %v1857
  %v1946 = vadd.f32 %v1733, %v1859
  %v1947 = vadd.f32 %v1772, %v1898
  %v1948 = vadd.f32 %v1774, %v1900
  %v1949 = vadd.f32 %v1813, %v1939
  %v1950 = vadd.f32 %v1815, %v1941
  %v1952 = vsel %vm176, %v114, 0
  %1954 = vmatprep.subr.bf16.mxu0 0
  %1955 = vmatpush1.bf16.msra.mxu0 0
  %1956 = vmatprep.subr.bf16.mxu0 0
  %1957 = vmatpush1.bf16.msra.mxu0 0
  %1958 = vmatprep.subr.bf16.mxu0 0
  %1959 = vmatpush1.bf16.msra.mxu0 0
  %1960 = vmatprep.subr.bf16.mxu0 0
  %1961 = vmatpush1.bf16.msra.mxu0 0
  %1962 = vmatprep.subr.bf16.mxu0 0
  %1963 = vmatpush1.bf16.msra.mxu0 0
  %1964 = vmatprep.subr.bf16.mxu0 0
  %1965 = vmatpush1.bf16.msra.mxu0 0
  %1966 = vmatprep.subr.bf16.mxu0 0
  %1967 = vmatpush1.bf16.msra.mxu0 0
  %1968 = vmatprep.subr.bf16.mxu0 %v185
  %1969 = vmatpush1.bf16.msra.mxu0 %v182
  %1970 = vmatprep.subr.bf16.mxu0 0
  %1971 = vmatpush2.bf16.msra.mxu0 0
  %1972 = vmatprep.subr.bf16.mxu0 0
  %1973 = vmatpush2.bf16.msra.mxu0 0
  %1974 = vmatprep.subr.bf16.mxu0 0
  %1975 = vmatpush2.bf16.msra.mxu0 0
  %1976 = vmatprep.subr.bf16.mxu0 0
  %1977 = vmatpush2.bf16.msra.mxu0 0
  %1978 = vmatprep.subr.bf16.mxu0 0
  %1979 = vmatpush2.bf16.msra.mxu0 0
  %1980 = vmatprep.subr.bf16.mxu0 0
  %1981 = vmatpush2.bf16.msra.mxu0 0
  %1982 = vmatprep.subr.bf16.mxu0 0
  %1983 = vmatpush2.bf16.msra.mxu0 0
  %1984 = vmatprep.subr.bf16.mxu0 0
  %1985 = vmatpush2.bf16.msra.mxu0 0
  %1986 = vmatprep.mubr.bf16.mxu0 0
  %1987 = vmatmul.mubr.bf16.gmra.mxu0 %v1952
  %v1988 = vpop.f32.mrf.mxu0
  %v1989 = vadd.f32 0.0, %v1988
  %v1990 = vpop.f32.mrf.mxu0
  %v1991 = vadd.f32 0.0, %v1990
  %v1992 = vpop.f32.mrf.mxu0
  %v1993 = vpop.f32.mrf.mxu0
  %1994 = vdwg.mxu0
  %1995 = vmatprep.subr.bf16.mxu0 0
  %1996 = vmatpush1.bf16.msra.mxu0 0
  %1997 = vmatprep.subr.bf16.mxu0 0
  %1998 = vmatpush1.bf16.msra.mxu0 0
  %1999 = vmatprep.subr.bf16.mxu0 0
  %2000 = vmatpush1.bf16.msra.mxu0 0
  %2001 = vmatprep.subr.bf16.mxu0 0
  %2002 = vmatpush1.bf16.msra.mxu0 0
  %2003 = vmatprep.subr.bf16.mxu0 0
  %2004 = vmatpush1.bf16.msra.mxu0 0
  %2005 = vmatprep.subr.bf16.mxu0 0
  %2006 = vmatpush1.bf16.msra.mxu0 0
  %2007 = vmatprep.subr.bf16.mxu0 0
  %2008 = vmatpush1.bf16.msra.mxu0 0
  %2009 = vmatprep.subr.bf16.mxu0 %v191
  %2010 = vmatpush1.bf16.msra.mxu0 %v188
  %2011 = vmatprep.subr.bf16.mxu0 0
  %2012 = vmatpush2.bf16.msra.mxu0 0
  %2013 = vmatprep.subr.bf16.mxu0 0
  %2014 = vmatpush2.bf16.msra.mxu0 0
  %2015 = vmatprep.subr.bf16.mxu0 0
  %2016 = vmatpush2.bf16.msra.mxu0 0
  %2017 = vmatprep.subr.bf16.mxu0 0
  %2018 = vmatpush2.bf16.msra.mxu0 0
  %2019 = vmatprep.subr.bf16.mxu0 0
  %2020 = vmatpush2.bf16.msra.mxu0 0
  %2021 = vmatprep.subr.bf16.mxu0 0
  %2022 = vmatpush2.bf16.msra.mxu0 0
  %2023 = vmatprep.subr.bf16.mxu0 0
  %2024 = vmatpush2.bf16.msra.mxu0 0
  %2025 = vmatprep.subr.bf16.mxu0 0
  %2026 = vmatpush2.bf16.msra.mxu0 0
  %2027 = vmatprep.mubr.bf16.mxu0 0
  %2028 = vmatmul.mubr.bf16.gmra.mxu0 %v1952
  %v2029 = vpop.f32.mrf.mxu0
  %v2030 = vadd.f32 0.0, %v2029
  %v2031 = vpop.f32.mrf.mxu0
  %v2032 = vadd.f32 0.0, %v2031
  %v2033 = vpop.f32.mrf.mxu0
  %v2034 = vpop.f32.mrf.mxu0
  %2035 = vdwg.mxu0
  %2036 = vmatprep.subr.bf16.mxu0 0
  %2037 = vmatpush1.bf16.msra.mxu0 0
  %2038 = vmatprep.subr.bf16.mxu0 0
  %2039 = vmatpush1.bf16.msra.mxu0 0
  %2040 = vmatprep.subr.bf16.mxu0 0
  %2041 = vmatpush1.bf16.msra.mxu0 0
  %2042 = vmatprep.subr.bf16.mxu0 0
  %2043 = vmatpush1.bf16.msra.mxu0 0
  %2044 = vmatprep.subr.bf16.mxu0 0
  %2045 = vmatpush1.bf16.msra.mxu0 0
  %2046 = vmatprep.subr.bf16.mxu0 0
  %2047 = vmatpush1.bf16.msra.mxu0 0
  %2048 = vmatprep.subr.bf16.mxu0 0
  %2049 = vmatpush1.bf16.msra.mxu0 0
  %2050 = vmatprep.subr.bf16.mxu0 %v197
  %2051 = vmatpush1.bf16.msra.mxu0 %v194
  %2052 = vmatprep.subr.bf16.mxu0 0
  %2053 = vmatpush2.bf16.msra.mxu0 0
  %2054 = vmatprep.subr.bf16.mxu0 0
  %2055 = vmatpush2.bf16.msra.mxu0 0
  %2056 = vmatprep.subr.bf16.mxu0 0
  %2057 = vmatpush2.bf16.msra.mxu0 0
  %2058 = vmatprep.subr.bf16.mxu0 0
  %2059 = vmatpush2.bf16.msra.mxu0 0
  %2060 = vmatprep.subr.bf16.mxu0 0
  %2061 = vmatpush2.bf16.msra.mxu0 0
  %2062 = vmatprep.subr.bf16.mxu0 0
  %2063 = vmatpush2.bf16.msra.mxu0 0
  %2064 = vmatprep.subr.bf16.mxu0 0
  %2065 = vmatpush2.bf16.msra.mxu0 0
  %2066 = vmatprep.subr.bf16.mxu0 0
  %2067 = vmatpush2.bf16.msra.mxu0 0
  %2068 = vmatprep.mubr.bf16.mxu0 0
  %2069 = vmatmul.mubr.bf16.gmra.mxu0 %v1952
  %v2070 = vpop.f32.mrf.mxu0
  %v2071 = vadd.f32 0.0, %v2070
  %v2072 = vpop.f32.mrf.mxu0
  %v2073 = vadd.f32 0.0, %v2072
  %v2074 = vpop.f32.mrf.mxu0
  %v2075 = vpop.f32.mrf.mxu0
  %2076 = vdwg.mxu0
  %v2077 = vadd.f32 %v1945, %v1989
  %v2078 = vadd.f32 %v1946, %v1991
  %v2079 = vadd.f32 %v1947, %v2030
  %v2080 = vadd.f32 %v1948, %v2032
  %v2081 = vadd.f32 %v1949, %v2071
  %v2082 = vadd.f32 %v1950, %v2073
  %v2083 = vmul.f32 %v2077, %v812
  %v2084 = vmul.f32 %v2078, %v816
  %v2085 = vmul.f32 %v2079, %v820
  %v2086 = vmul.f32 %v2080, %v824
  %v2087 = vmul.f32 %v2081, %v828
  %v2088 = vmul.f32 %v2082, %v832
  %v2089 = vadd.f32 %v2083, %v2084
  %v2090 = vadd.f32 %v2089, %v2085
  %v2091 = vadd.f32 %v2090, %v2086
  %v2092 = vadd.f32 %v2091, %v2087
  %v2093 = vadd.f32 %v2092, %v2088
  %2094 = vadd.xlane.f32.xlu0 %v2093
  %v2095 = vpop.xlane.xlu0 %2094
  %v2096 = vadd.f32 %v1474, %v2095
  %v2097 = vmul.f32 %v2083, %v2077
  %v2098 = vmul.f32 %v2084, %v2078
  %v2099 = vmul.f32 %v2085, %v2079
  %v2100 = vmul.f32 %v2086, %v2080
  %v2101 = vmul.f32 %v2087, %v2081
  %v2102 = vmul.f32 %v2088, %v2082
  %v2103 = vadd.f32 %v2097, %v2098
  %v2104 = vadd.f32 %v2103, %v2099
  %v2105 = vadd.f32 %v2104, %v2100
  %v2106 = vadd.f32 %v2105, %v2101
  %v2107 = vadd.f32 %v2106, %v2102
  %2108 = vadd.xlane.f32.xlu0 %v2107
  %v2109 = vpop.xlane.xlu0 %2108
  %v2110 = vadd.f32 %v1488, %v2109
  %v2112 = vsel %vm176, %v116, 0
  %2114 = vmatprep.subr.bf16.mxu0 0
  %2115 = vmatpush1.bf16.msra.mxu0 0
  %2116 = vmatprep.subr.bf16.mxu0 0
  %2117 = vmatpush1.bf16.msra.mxu0 0
  %2118 = vmatprep.subr.bf16.mxu0 0
  %2119 = vmatpush1.bf16.msra.mxu0 0
  %2120 = vmatprep.subr.bf16.mxu0 0
  %2121 = vmatpush1.bf16.msra.mxu0 0
  %2122 = vmatprep.subr.bf16.mxu0 0
  %2123 = vmatpush1.bf16.msra.mxu0 0
  %2124 = vmatprep.subr.bf16.mxu0 0
  %2125 = vmatpush1.bf16.msra.mxu0 0
  %2126 = vmatprep.subr.bf16.mxu0 0
  %2127 = vmatpush1.bf16.msra.mxu0 0
  %2128 = vmatprep.subr.bf16.mxu0 %v1682
  %2129 = vmatpush1.bf16.msra.mxu0 %v1679
  %2130 = vmatprep.subr.bf16.mxu0 0
  %2131 = vmatpush2.bf16.msra.mxu0 0
  %2132 = vmatprep.subr.bf16.mxu0 0
  %2133 = vmatpush2.bf16.msra.mxu0 0
  %2134 = vmatprep.subr.bf16.mxu0 0
  %2135 = vmatpush2.bf16.msra.mxu0 0
  %2136 = vmatprep.subr.bf16.mxu0 0
  %2137 = vmatpush2.bf16.msra.mxu0 0
  %2138 = vmatprep.subr.bf16.mxu0 0
  %2139 = vmatpush2.bf16.msra.mxu0 0
  %2140 = vmatprep.subr.bf16.mxu0 0
  %2141 = vmatpush2.bf16.msra.mxu0 0
  %2142 = vmatprep.subr.bf16.mxu0 0
  %2143 = vmatpush2.bf16.msra.mxu0 0
  %2144 = vmatprep.subr.bf16.mxu0 0
  %2145 = vmatpush2.bf16.msra.mxu0 0
  %2146 = vmatprep.mubr.bf16.mxu0 0
  %2147 = vmatmul.mubr.bf16.gmra.mxu0 %v2112
  %v2148 = vpop.f32.mrf.mxu0
  %v2149 = vadd.f32 0.0, %v2148
  %v2150 = vpop.f32.mrf.mxu0
  %v2151 = vadd.f32 0.0, %v2150
  %v2152 = vpop.f32.mrf.mxu0
  %v2153 = vpop.f32.mrf.mxu0
  %2154 = vdwg.mxu0
  %2155 = vmatprep.subr.bf16.mxu0 0
  %2156 = vmatpush1.bf16.msra.mxu0 0
  %2157 = vmatprep.subr.bf16.mxu0 0
  %2158 = vmatpush1.bf16.msra.mxu0 0
  %2159 = vmatprep.subr.bf16.mxu0 0
  %2160 = vmatpush1.bf16.msra.mxu0 0
  %2161 = vmatprep.subr.bf16.mxu0 0
  %2162 = vmatpush1.bf16.msra.mxu0 0
  %2163 = vmatprep.subr.bf16.mxu0 0
  %2164 = vmatpush1.bf16.msra.mxu0 0
  %2165 = vmatprep.subr.bf16.mxu0 0
  %2166 = vmatpush1.bf16.msra.mxu0 0
  %2167 = vmatprep.subr.bf16.mxu0 0
  %2168 = vmatpush1.bf16.msra.mxu0 0
  %2169 = vmatprep.subr.bf16.mxu0 %v1688
  %2170 = vmatpush1.bf16.msra.mxu0 %v1685
  %2171 = vmatprep.subr.bf16.mxu0 0
  %2172 = vmatpush2.bf16.msra.mxu0 0
  %2173 = vmatprep.subr.bf16.mxu0 0
  %2174 = vmatpush2.bf16.msra.mxu0 0
  %2175 = vmatprep.subr.bf16.mxu0 0
  %2176 = vmatpush2.bf16.msra.mxu0 0
  %2177 = vmatprep.subr.bf16.mxu0 0
  %2178 = vmatpush2.bf16.msra.mxu0 0
  %2179 = vmatprep.subr.bf16.mxu0 0
  %2180 = vmatpush2.bf16.msra.mxu0 0
  %2181 = vmatprep.subr.bf16.mxu0 0
  %2182 = vmatpush2.bf16.msra.mxu0 0
  %2183 = vmatprep.subr.bf16.mxu0 0
  %2184 = vmatpush2.bf16.msra.mxu0 0
  %2185 = vmatprep.subr.bf16.mxu0 0
  %2186 = vmatpush2.bf16.msra.mxu0 0
  %2187 = vmatprep.mubr.bf16.mxu0 0
  %2188 = vmatmul.mubr.bf16.gmra.mxu0 %v2112
  %v2189 = vpop.f32.mrf.mxu0
  %v2190 = vadd.f32 0.0, %v2189
  %v2191 = vpop.f32.mrf.mxu0
  %v2192 = vadd.f32 0.0, %v2191
  %v2193 = vpop.f32.mrf.mxu0
  %v2194 = vpop.f32.mrf.mxu0
  %2195 = vdwg.mxu0
  %2196 = vmatprep.subr.bf16.mxu0 0
  %2197 = vmatpush1.bf16.msra.mxu0 0
  %2198 = vmatprep.subr.bf16.mxu0 0
  %2199 = vmatpush1.bf16.msra.mxu0 0
  %2200 = vmatprep.subr.bf16.mxu0 0
  %2201 = vmatpush1.bf16.msra.mxu0 0
  %2202 = vmatprep.subr.bf16.mxu0 0
  %2203 = vmatpush1.bf16.msra.mxu0 0
  %2204 = vmatprep.subr.bf16.mxu0 0
  %2205 = vmatpush1.bf16.msra.mxu0 0
  %2206 = vmatprep.subr.bf16.mxu0 0
  %2207 = vmatpush1.bf16.msra.mxu0 0
  %2208 = vmatprep.subr.bf16.mxu0 0
  %2209 = vmatpush1.bf16.msra.mxu0 0
  %2210 = vmatprep.subr.bf16.mxu0 %v1694
  %2211 = vmatpush1.bf16.msra.mxu0 %v1691
  %2212 = vmatprep.subr.bf16.mxu0 0
  %2213 = vmatpush2.bf16.msra.mxu0 0
  %2214 = vmatprep.subr.bf16.mxu0 0
  %2215 = vmatpush2.bf16.msra.mxu0 0
  %2216 = vmatprep.subr.bf16.mxu0 0
  %2217 = vmatpush2.bf16.msra.mxu0 0
  %2218 = vmatprep.subr.bf16.mxu0 0
  %2219 = vmatpush2.bf16.msra.mxu0 0
  %2220 = vmatprep.subr.bf16.mxu0 0
  %2221 = vmatpush2.bf16.msra.mxu0 0
  %2222 = vmatprep.subr.bf16.mxu0 0
  %2223 = vmatpush2.bf16.msra.mxu0 0
  %2224 = vmatprep.subr.bf16.mxu0 0
  %2225 = vmatpush2.bf16.msra.mxu0 0
  %2226 = vmatprep.subr.bf16.mxu0 0
  %2227 = vmatpush2.bf16.msra.mxu0 0
  %2228 = vmatprep.mubr.bf16.mxu0 0
  %2229 = vmatmul.mubr.bf16.gmra.mxu0 %v2112
  %v2230 = vpop.f32.mrf.mxu0
  %v2231 = vadd.f32 0.0, %v2230
  %v2232 = vpop.f32.mrf.mxu0
  %v2233 = vadd.f32 0.0, %v2232
  %v2234 = vpop.f32.mrf.mxu0
  %v2235 = vpop.f32.mrf.mxu0
  %2236 = vdwg.mxu0
  %2237 = vrot.lane.b32.xlu0 %v129, 90
  %v2238 = vpop.permute.xlu0 %2237
  %2239 = vrot.lane.b32.xlu0 %v137, 90
  %v2240 = vpop.permute.xlu0 %2239
  %2241 = vrot.lane.b32.xlu0 %v136, 90
  %v2242 = vpop.permute.xlu0 %2241
  %2243 = vrot.lane.b32.xlu0 %v138, 90
  %v2244 = vpop.permute.xlu0 %2243
  %2245 = vrot.lane.b32.xlu0 %v146, 90
  %v2246 = vpop.permute.xlu0 %2245
  %2247 = vrot.lane.b32.xlu0 %v154, 90
  %v2248 = vpop.permute.xlu0 %2247
  %2249 = vrot.lane.b32.xlu0 %v153, 90
  %v2250 = vpop.permute.xlu0 %2249
  %vm2251 = vcmask 736256
  %v2252 = vsel %vm2251, %v2238, %v2240
  %v2253 = vsel %vm2251, %v2240, %v2242
  %v2254 = vsel %vm2251, %v2242, %v2244
  %v2255 = vsel %vm2251, %v2244, %v2246
  %v2256 = vsel %vm2251, %v2246, %v2248
  %v2257 = vsel %vm2251, %v2248, %v2250
  %v2259 = vsel %vm176, %v115, 0
  %v2262 = vsel %vm180, %v2252, 0
  %v2265 = vsel %vm180, %v2253, 0
  %v2268 = vsel %vm180, %v2254, 0
  %v2271 = vsel %vm180, %v2255, 0
  %v2274 = vsel %vm180, %v2256, 0
  %v2277 = vsel %vm180, %v2257, 0
  %2279 = vmatprep.subr.bf16.mxu0 0
  %2280 = vmatpush1.bf16.msra.mxu0 0
  %2281 = vmatprep.subr.bf16.mxu0 0
  %2282 = vmatpush1.bf16.msra.mxu0 0
  %2283 = vmatprep.subr.bf16.mxu0 0
  %2284 = vmatpush1.bf16.msra.mxu0 0
  %2285 = vmatprep.subr.bf16.mxu0 0
  %2286 = vmatpush1.bf16.msra.mxu0 0
  %2287 = vmatprep.subr.bf16.mxu0 0
  %2288 = vmatpush1.bf16.msra.mxu0 0
  %2289 = vmatprep.subr.bf16.mxu0 0
  %2290 = vmatpush1.bf16.msra.mxu0 0
  %2291 = vmatprep.subr.bf16.mxu0 0
  %2292 = vmatpush1.bf16.msra.mxu0 0
  %2293 = vmatprep.subr.bf16.mxu0 %v2265
  %2294 = vmatpush1.bf16.msra.mxu0 %v2262
  %2295 = vmatprep.subr.bf16.mxu0 0
  %2296 = vmatpush2.bf16.msra.mxu0 0
  %2297 = vmatprep.subr.bf16.mxu0 0
  %2298 = vmatpush2.bf16.msra.mxu0 0
  %2299 = vmatprep.subr.bf16.mxu0 0
  %2300 = vmatpush2.bf16.msra.mxu0 0
  %2301 = vmatprep.subr.bf16.mxu0 0
  %2302 = vmatpush2.bf16.msra.mxu0 0
  %2303 = vmatprep.subr.bf16.mxu0 0
  %2304 = vmatpush2.bf16.msra.mxu0 0
  %2305 = vmatprep.subr.bf16.mxu0 0
  %2306 = vmatpush2.bf16.msra.mxu0 0
  %2307 = vmatprep.subr.bf16.mxu0 0
  %2308 = vmatpush2.bf16.msra.mxu0 0
  %2309 = vmatprep.subr.bf16.mxu0 0
  %2310 = vmatpush2.bf16.msra.mxu0 0
  %2311 = vmatprep.mubr.bf16.mxu0 0
  %2312 = vmatmul.mubr.bf16.gmra.mxu0 %v2259
  %v2313 = vpop.f32.mrf.mxu0
  %v2314 = vadd.f32 %v2149, %v2313
  %v2315 = vpop.f32.mrf.mxu0
  %v2316 = vadd.f32 %v2151, %v2315
  %v2317 = vpop.f32.mrf.mxu0
  %v2318 = vpop.f32.mrf.mxu0
  %2319 = vdwg.mxu0
  %2320 = vmatprep.subr.bf16.mxu0 0
  %2321 = vmatpush1.bf16.msra.mxu0 0
  %2322 = vmatprep.subr.bf16.mxu0 0
  %2323 = vmatpush1.bf16.msra.mxu0 0
  %2324 = vmatprep.subr.bf16.mxu0 0
  %2325 = vmatpush1.bf16.msra.mxu0 0
  %2326 = vmatprep.subr.bf16.mxu0 0
  %2327 = vmatpush1.bf16.msra.mxu0 0
  %2328 = vmatprep.subr.bf16.mxu0 0
  %2329 = vmatpush1.bf16.msra.mxu0 0
  %2330 = vmatprep.subr.bf16.mxu0 0
  %2331 = vmatpush1.bf16.msra.mxu0 0
  %2332 = vmatprep.subr.bf16.mxu0 0
  %2333 = vmatpush1.bf16.msra.mxu0 0
  %2334 = vmatprep.subr.bf16.mxu0 %v2271
  %2335 = vmatpush1.bf16.msra.mxu0 %v2268
  %2336 = vmatprep.subr.bf16.mxu0 0
  %2337 = vmatpush2.bf16.msra.mxu0 0
  %2338 = vmatprep.subr.bf16.mxu0 0
  %2339 = vmatpush2.bf16.msra.mxu0 0
  %2340 = vmatprep.subr.bf16.mxu0 0
  %2341 = vmatpush2.bf16.msra.mxu0 0
  %2342 = vmatprep.subr.bf16.mxu0 0
  %2343 = vmatpush2.bf16.msra.mxu0 0
  %2344 = vmatprep.subr.bf16.mxu0 0
  %2345 = vmatpush2.bf16.msra.mxu0 0
  %2346 = vmatprep.subr.bf16.mxu0 0
  %2347 = vmatpush2.bf16.msra.mxu0 0
  %2348 = vmatprep.subr.bf16.mxu0 0
  %2349 = vmatpush2.bf16.msra.mxu0 0
  %2350 = vmatprep.subr.bf16.mxu0 0
  %2351 = vmatpush2.bf16.msra.mxu0 0
  %2352 = vmatprep.mubr.bf16.mxu0 0
  %2353 = vmatmul.mubr.bf16.gmra.mxu0 %v2259
  %v2354 = vpop.f32.mrf.mxu0
  %v2355 = vadd.f32 %v2190, %v2354
  %v2356 = vpop.f32.mrf.mxu0
  %v2357 = vadd.f32 %v2192, %v2356
  %v2358 = vpop.f32.mrf.mxu0
  %v2359 = vpop.f32.mrf.mxu0
  %2360 = vdwg.mxu0
  %2361 = vmatprep.subr.bf16.mxu0 0
  %2362 = vmatpush1.bf16.msra.mxu0 0
  %2363 = vmatprep.subr.bf16.mxu0 0
  %2364 = vmatpush1.bf16.msra.mxu0 0
  %2365 = vmatprep.subr.bf16.mxu0 0
  %2366 = vmatpush1.bf16.msra.mxu0 0
  %2367 = vmatprep.subr.bf16.mxu0 0
  %2368 = vmatpush1.bf16.msra.mxu0 0
  %2369 = vmatprep.subr.bf16.mxu0 0
  %2370 = vmatpush1.bf16.msra.mxu0 0
  %2371 = vmatprep.subr.bf16.mxu0 0
  %2372 = vmatpush1.bf16.msra.mxu0 0
  %2373 = vmatprep.subr.bf16.mxu0 0
  %2374 = vmatpush1.bf16.msra.mxu0 0
  %2375 = vmatprep.subr.bf16.mxu0 %v2277
  %2376 = vmatpush1.bf16.msra.mxu0 %v2274
  %2377 = vmatprep.subr.bf16.mxu0 0
  %2378 = vmatpush2.bf16.msra.mxu0 0
  %2379 = vmatprep.subr.bf16.mxu0 0
  %2380 = vmatpush2.bf16.msra.mxu0 0
  %2381 = vmatprep.subr.bf16.mxu0 0
  %2382 = vmatpush2.bf16.msra.mxu0 0
  %2383 = vmatprep.subr.bf16.mxu0 0
  %2384 = vmatpush2.bf16.msra.mxu0 0
  %2385 = vmatprep.subr.bf16.mxu0 0
  %2386 = vmatpush2.bf16.msra.mxu0 0
  %2387 = vmatprep.subr.bf16.mxu0 0
  %2388 = vmatpush2.bf16.msra.mxu0 0
  %2389 = vmatprep.subr.bf16.mxu0 0
  %2390 = vmatpush2.bf16.msra.mxu0 0
  %2391 = vmatprep.subr.bf16.mxu0 0
  %2392 = vmatpush2.bf16.msra.mxu0 0
  %2393 = vmatprep.mubr.bf16.mxu0 0
  %2394 = vmatmul.mubr.bf16.gmra.mxu0 %v2259
  %v2395 = vpop.f32.mrf.mxu0
  %v2396 = vadd.f32 %v2231, %v2395
  %v2397 = vpop.f32.mrf.mxu0
  %v2398 = vadd.f32 %v2233, %v2397
  %v2399 = vpop.f32.mrf.mxu0
  %v2400 = vpop.f32.mrf.mxu0
  %2401 = vdwg.mxu0
  %v2403 = vsel %vm176, %v117, 0
  %2405 = vmatprep.subr.bf16.mxu0 0
  %2406 = vmatpush1.bf16.msra.mxu0 0
  %2407 = vmatprep.subr.bf16.mxu0 0
  %2408 = vmatpush1.bf16.msra.mxu0 0
  %2409 = vmatprep.subr.bf16.mxu0 0
  %2410 = vmatpush1.bf16.msra.mxu0 0
  %2411 = vmatprep.subr.bf16.mxu0 0
  %2412 = vmatpush1.bf16.msra.mxu0 0
  %2413 = vmatprep.subr.bf16.mxu0 0
  %2414 = vmatpush1.bf16.msra.mxu0 0
  %2415 = vmatprep.subr.bf16.mxu0 0
  %2416 = vmatpush1.bf16.msra.mxu0 0
  %2417 = vmatprep.subr.bf16.mxu0 0
  %2418 = vmatpush1.bf16.msra.mxu0 0
  %2419 = vmatprep.subr.bf16.mxu0 %v1021
  %2420 = vmatpush1.bf16.msra.mxu0 %v1018
  %2421 = vmatprep.subr.bf16.mxu0 0
  %2422 = vmatpush2.bf16.msra.mxu0 0
  %2423 = vmatprep.subr.bf16.mxu0 0
  %2424 = vmatpush2.bf16.msra.mxu0 0
  %2425 = vmatprep.subr.bf16.mxu0 0
  %2426 = vmatpush2.bf16.msra.mxu0 0
  %2427 = vmatprep.subr.bf16.mxu0 0
  %2428 = vmatpush2.bf16.msra.mxu0 0
  %2429 = vmatprep.subr.bf16.mxu0 0
  %2430 = vmatpush2.bf16.msra.mxu0 0
  %2431 = vmatprep.subr.bf16.mxu0 0
  %2432 = vmatpush2.bf16.msra.mxu0 0
  %2433 = vmatprep.subr.bf16.mxu0 0
  %2434 = vmatpush2.bf16.msra.mxu0 0
  %2435 = vmatprep.subr.bf16.mxu0 0
  %2436 = vmatpush2.bf16.msra.mxu0 0
  %2437 = vmatprep.mubr.bf16.mxu0 0
  %2438 = vmatmul.mubr.bf16.gmra.mxu0 %v2403
  %v2439 = vpop.f32.mrf.mxu0
  %v2440 = vadd.f32 0.0, %v2439
  %v2441 = vpop.f32.mrf.mxu0
  %v2442 = vadd.f32 0.0, %v2441
  %v2443 = vpop.f32.mrf.mxu0
  %v2444 = vpop.f32.mrf.mxu0
  %2445 = vdwg.mxu0
  %2446 = vmatprep.subr.bf16.mxu0 0
  %2447 = vmatpush1.bf16.msra.mxu0 0
  %2448 = vmatprep.subr.bf16.mxu0 0
  %2449 = vmatpush1.bf16.msra.mxu0 0
  %2450 = vmatprep.subr.bf16.mxu0 0
  %2451 = vmatpush1.bf16.msra.mxu0 0
  %2452 = vmatprep.subr.bf16.mxu0 0
  %2453 = vmatpush1.bf16.msra.mxu0 0
  %2454 = vmatprep.subr.bf16.mxu0 0
  %2455 = vmatpush1.bf16.msra.mxu0 0
  %2456 = vmatprep.subr.bf16.mxu0 0
  %2457 = vmatpush1.bf16.msra.mxu0 0
  %2458 = vmatprep.subr.bf16.mxu0 0
  %2459 = vmatpush1.bf16.msra.mxu0 0
  %2460 = vmatprep.subr.bf16.mxu0 %v1027
  %2461 = vmatpush1.bf16.msra.mxu0 %v1024
  %2462 = vmatprep.subr.bf16.mxu0 0
  %2463 = vmatpush2.bf16.msra.mxu0 0
  %2464 = vmatprep.subr.bf16.mxu0 0
  %2465 = vmatpush2.bf16.msra.mxu0 0
  %2466 = vmatprep.subr.bf16.mxu0 0
  %2467 = vmatpush2.bf16.msra.mxu0 0
  %2468 = vmatprep.subr.bf16.mxu0 0
  %2469 = vmatpush2.bf16.msra.mxu0 0
  %2470 = vmatprep.subr.bf16.mxu0 0
  %2471 = vmatpush2.bf16.msra.mxu0 0
  %2472 = vmatprep.subr.bf16.mxu0 0
  %2473 = vmatpush2.bf16.msra.mxu0 0
  %2474 = vmatprep.subr.bf16.mxu0 0
  %2475 = vmatpush2.bf16.msra.mxu0 0
  %2476 = vmatprep.subr.bf16.mxu0 0
  %2477 = vmatpush2.bf16.msra.mxu0 0
  %2478 = vmatprep.mubr.bf16.mxu0 0
  %2479 = vmatmul.mubr.bf16.gmra.mxu0 %v2403
  %v2480 = vpop.f32.mrf.mxu0
  %v2481 = vadd.f32 0.0, %v2480
  %v2482 = vpop.f32.mrf.mxu0
  %v2483 = vadd.f32 0.0, %v2482
  %v2484 = vpop.f32.mrf.mxu0
  %v2485 = vpop.f32.mrf.mxu0
  %2486 = vdwg.mxu0
  %2487 = vmatprep.subr.bf16.mxu0 0
  %2488 = vmatpush1.bf16.msra.mxu0 0
  %2489 = vmatprep.subr.bf16.mxu0 0
  %2490 = vmatpush1.bf16.msra.mxu0 0
  %2491 = vmatprep.subr.bf16.mxu0 0
  %2492 = vmatpush1.bf16.msra.mxu0 0
  %2493 = vmatprep.subr.bf16.mxu0 0
  %2494 = vmatpush1.bf16.msra.mxu0 0
  %2495 = vmatprep.subr.bf16.mxu0 0
  %2496 = vmatpush1.bf16.msra.mxu0 0
  %2497 = vmatprep.subr.bf16.mxu0 0
  %2498 = vmatpush1.bf16.msra.mxu0 0
  %2499 = vmatprep.subr.bf16.mxu0 0
  %2500 = vmatpush1.bf16.msra.mxu0 0
  %2501 = vmatprep.subr.bf16.mxu0 %v1033
  %2502 = vmatpush1.bf16.msra.mxu0 %v1030
  %2503 = vmatprep.subr.bf16.mxu0 0
  %2504 = vmatpush2.bf16.msra.mxu0 0
  %2505 = vmatprep.subr.bf16.mxu0 0
  %2506 = vmatpush2.bf16.msra.mxu0 0
  %2507 = vmatprep.subr.bf16.mxu0 0
  %2508 = vmatpush2.bf16.msra.mxu0 0
  %2509 = vmatprep.subr.bf16.mxu0 0
  %2510 = vmatpush2.bf16.msra.mxu0 0
  %2511 = vmatprep.subr.bf16.mxu0 0
  %2512 = vmatpush2.bf16.msra.mxu0 0
  %2513 = vmatprep.subr.bf16.mxu0 0
  %2514 = vmatpush2.bf16.msra.mxu0 0
  %2515 = vmatprep.subr.bf16.mxu0 0
  %2516 = vmatpush2.bf16.msra.mxu0 0
  %2517 = vmatprep.subr.bf16.mxu0 0
  %2518 = vmatpush2.bf16.msra.mxu0 0
  %2519 = vmatprep.mubr.bf16.mxu0 0
  %2520 = vmatmul.mubr.bf16.gmra.mxu0 %v2403
  %v2521 = vpop.f32.mrf.mxu0
  %v2522 = vadd.f32 0.0, %v2521
  %v2523 = vpop.f32.mrf.mxu0
  %v2524 = vadd.f32 0.0, %v2523
  %v2525 = vpop.f32.mrf.mxu0
  %v2526 = vpop.f32.mrf.mxu0
  %2527 = vdwg.mxu0
  %v2528 = vadd.f32 %v2314, %v2440
  %v2529 = vadd.f32 %v2316, %v2442
  %v2530 = vadd.f32 %v2355, %v2481
  %v2531 = vadd.f32 %v2357, %v2483
  %v2532 = vadd.f32 %v2396, %v2522
  %v2533 = vadd.f32 %v2398, %v2524
  %v2535 = vsel %vm176, %v118, 0
  %2537 = vmatprep.subr.bf16.mxu0 0
  %2538 = vmatpush1.bf16.msra.mxu0 0
  %2539 = vmatprep.subr.bf16.mxu0 0
  %2540 = vmatpush1.bf16.msra.mxu0 0
  %2541 = vmatprep.subr.bf16.mxu0 0
  %2542 = vmatpush1.bf16.msra.mxu0 0
  %2543 = vmatprep.subr.bf16.mxu0 0
  %2544 = vmatpush1.bf16.msra.mxu0 0
  %2545 = vmatprep.subr.bf16.mxu0 0
  %2546 = vmatpush1.bf16.msra.mxu0 0
  %2547 = vmatprep.subr.bf16.mxu0 0
  %2548 = vmatpush1.bf16.msra.mxu0 0
  %2549 = vmatprep.subr.bf16.mxu0 0
  %2550 = vmatpush1.bf16.msra.mxu0 0
  %2551 = vmatprep.subr.bf16.mxu0 %v350
  %2552 = vmatpush1.bf16.msra.mxu0 %v347
  %2553 = vmatprep.subr.bf16.mxu0 0
  %2554 = vmatpush2.bf16.msra.mxu0 0
  %2555 = vmatprep.subr.bf16.mxu0 0
  %2556 = vmatpush2.bf16.msra.mxu0 0
  %2557 = vmatprep.subr.bf16.mxu0 0
  %2558 = vmatpush2.bf16.msra.mxu0 0
  %2559 = vmatprep.subr.bf16.mxu0 0
  %2560 = vmatpush2.bf16.msra.mxu0 0
  %2561 = vmatprep.subr.bf16.mxu0 0
  %2562 = vmatpush2.bf16.msra.mxu0 0
  %2563 = vmatprep.subr.bf16.mxu0 0
  %2564 = vmatpush2.bf16.msra.mxu0 0
  %2565 = vmatprep.subr.bf16.mxu0 0
  %2566 = vmatpush2.bf16.msra.mxu0 0
  %2567 = vmatprep.subr.bf16.mxu0 0
  %2568 = vmatpush2.bf16.msra.mxu0 0
  %2569 = vmatprep.mubr.bf16.mxu0 0
  %2570 = vmatmul.mubr.bf16.gmra.mxu0 %v2535
  %v2571 = vpop.f32.mrf.mxu0
  %v2572 = vadd.f32 0.0, %v2571
  %v2573 = vpop.f32.mrf.mxu0
  %v2574 = vadd.f32 0.0, %v2573
  %v2575 = vpop.f32.mrf.mxu0
  %v2576 = vpop.f32.mrf.mxu0
  %2577 = vdwg.mxu0
  %2578 = vmatprep.subr.bf16.mxu0 0
  %2579 = vmatpush1.bf16.msra.mxu0 0
  %2580 = vmatprep.subr.bf16.mxu0 0
  %2581 = vmatpush1.bf16.msra.mxu0 0
  %2582 = vmatprep.subr.bf16.mxu0 0
  %2583 = vmatpush1.bf16.msra.mxu0 0
  %2584 = vmatprep.subr.bf16.mxu0 0
  %2585 = vmatpush1.bf16.msra.mxu0 0
  %2586 = vmatprep.subr.bf16.mxu0 0
  %2587 = vmatpush1.bf16.msra.mxu0 0
  %2588 = vmatprep.subr.bf16.mxu0 0
  %2589 = vmatpush1.bf16.msra.mxu0 0
  %2590 = vmatprep.subr.bf16.mxu0 0
  %2591 = vmatpush1.bf16.msra.mxu0 0
  %2592 = vmatprep.subr.bf16.mxu0 %v356
  %2593 = vmatpush1.bf16.msra.mxu0 %v353
  %2594 = vmatprep.subr.bf16.mxu0 0
  %2595 = vmatpush2.bf16.msra.mxu0 0
  %2596 = vmatprep.subr.bf16.mxu0 0
  %2597 = vmatpush2.bf16.msra.mxu0 0
  %2598 = vmatprep.subr.bf16.mxu0 0
  %2599 = vmatpush2.bf16.msra.mxu0 0
  %2600 = vmatprep.subr.bf16.mxu0 0
  %2601 = vmatpush2.bf16.msra.mxu0 0
  %2602 = vmatprep.subr.bf16.mxu0 0
  %2603 = vmatpush2.bf16.msra.mxu0 0
  %2604 = vmatprep.subr.bf16.mxu0 0
  %2605 = vmatpush2.bf16.msra.mxu0 0
  %2606 = vmatprep.subr.bf16.mxu0 0
  %2607 = vmatpush2.bf16.msra.mxu0 0
  %2608 = vmatprep.subr.bf16.mxu0 0
  %2609 = vmatpush2.bf16.msra.mxu0 0
  %2610 = vmatprep.mubr.bf16.mxu0 0
  %2611 = vmatmul.mubr.bf16.gmra.mxu0 %v2535
  %v2612 = vpop.f32.mrf.mxu0
  %v2613 = vadd.f32 0.0, %v2612
  %v2614 = vpop.f32.mrf.mxu0
  %v2615 = vadd.f32 0.0, %v2614
  %v2616 = vpop.f32.mrf.mxu0
  %v2617 = vpop.f32.mrf.mxu0
  %2618 = vdwg.mxu0
  %2619 = vmatprep.subr.bf16.mxu0 0
  %2620 = vmatpush1.bf16.msra.mxu0 0
  %2621 = vmatprep.subr.bf16.mxu0 0
  %2622 = vmatpush1.bf16.msra.mxu0 0
  %2623 = vmatprep.subr.bf16.mxu0 0
  %2624 = vmatpush1.bf16.msra.mxu0 0
  %2625 = vmatprep.subr.bf16.mxu0 0
  %2626 = vmatpush1.bf16.msra.mxu0 0
  %2627 = vmatprep.subr.bf16.mxu0 0
  %2628 = vmatpush1.bf16.msra.mxu0 0
  %2629 = vmatprep.subr.bf16.mxu0 0
  %2630 = vmatpush1.bf16.msra.mxu0 0
  %2631 = vmatprep.subr.bf16.mxu0 0
  %2632 = vmatpush1.bf16.msra.mxu0 0
  %2633 = vmatprep.subr.bf16.mxu0 %v362
  %2634 = vmatpush1.bf16.msra.mxu0 %v359
  %2635 = vmatprep.subr.bf16.mxu0 0
  %2636 = vmatpush2.bf16.msra.mxu0 0
  %2637 = vmatprep.subr.bf16.mxu0 0
  %2638 = vmatpush2.bf16.msra.mxu0 0
  %2639 = vmatprep.subr.bf16.mxu0 0
  %2640 = vmatpush2.bf16.msra.mxu0 0
  %2641 = vmatprep.subr.bf16.mxu0 0
  %2642 = vmatpush2.bf16.msra.mxu0 0
  %2643 = vmatprep.subr.bf16.mxu0 0
  %2644 = vmatpush2.bf16.msra.mxu0 0
  %2645 = vmatprep.subr.bf16.mxu0 0
  %2646 = vmatpush2.bf16.msra.mxu0 0
  %2647 = vmatprep.subr.bf16.mxu0 0
  %2648 = vmatpush2.bf16.msra.mxu0 0
  %2649 = vmatprep.subr.bf16.mxu0 0
  %2650 = vmatpush2.bf16.msra.mxu0 0
  %2651 = vmatprep.mubr.bf16.mxu0 0
  %2652 = vmatmul.mubr.bf16.gmra.mxu0 %v2535
  %v2653 = vpop.f32.mrf.mxu0
  %v2654 = vadd.f32 0.0, %v2653
  %v2655 = vpop.f32.mrf.mxu0
  %v2656 = vadd.f32 0.0, %v2655
  %v2657 = vpop.f32.mrf.mxu0
  %v2658 = vpop.f32.mrf.mxu0
  %2659 = vdwg.mxu0
  %v2660 = vadd.f32 %v2528, %v2572
  %v2661 = vadd.f32 %v2529, %v2574
  %v2662 = vadd.f32 %v2530, %v2613
  %v2663 = vadd.f32 %v2531, %v2615
  %v2664 = vadd.f32 %v2532, %v2654
  %v2665 = vadd.f32 %v2533, %v2656
  %v2666 = vmul.f32 %v2660, %v812
  %v2667 = vmul.f32 %v2661, %v816
  %v2668 = vmul.f32 %v2662, %v820
  %v2669 = vmul.f32 %v2663, %v824
  %v2670 = vmul.f32 %v2664, %v828
  %v2671 = vmul.f32 %v2665, %v832
  %v2672 = vadd.f32 %v2666, %v2667
  %v2673 = vadd.f32 %v2672, %v2668
  %v2674 = vadd.f32 %v2673, %v2669
  %v2675 = vadd.f32 %v2674, %v2670
  %v2676 = vadd.f32 %v2675, %v2671
  %2677 = vadd.xlane.f32.xlu0 %v2676
  %v2678 = vpop.xlane.xlu0 %2677
  %v2679 = vadd.f32 %v2096, %v2678
  %v2680 = vmul.f32 %v2666, %v2660
  %v2681 = vmul.f32 %v2667, %v2661
  %v2682 = vmul.f32 %v2668, %v2662
  %v2683 = vmul.f32 %v2669, %v2663
  %v2684 = vmul.f32 %v2670, %v2664
  %v2685 = vmul.f32 %v2671, %v2665
  %v2686 = vadd.f32 %v2680, %v2681
  %v2687 = vadd.f32 %v2686, %v2682
  %v2688 = vadd.f32 %v2687, %v2683
  %v2689 = vadd.f32 %v2688, %v2684
  %v2690 = vadd.f32 %v2689, %v2685
  %2691 = vadd.xlane.f32.xlu0 %v2690
  %v2692 = vpop.xlane.xlu0 %2691
  %v2693 = vadd.f32 %v2110, %v2692
  %v2694 = vld [vmem:[%s4] sm:$0xff]
  %v2695 = vadd.f32 %v2694, %v2679
  %vm2696 = vcmask 7168
  %2697 = vst.msk [vmem:[%s4] sm:$0xff] %vm2696, %v2695
  %v2698 = vld [vmem:[%s5] sm:$0xff]
  %v2699 = vadd.f32 %v2698, %v2693
  %2700 = vst.msk [vmem:[%s5] sm:$0xff] %vm2696, %v2699
  // Predicated region
  $region22: #{trans_conv_block.2} parent=0 // pred_check
    _
  $region23: #{trans_conv_block.2} parent=0 // pred_check_branch
    %2702 = sbr.rel (0) target = $region25
  $region24: #{trans_conv_block.2} parent=0 // pred_region
    _
  $region25: #{trans_conv_block.2} parent=0 // pred_fallthru
    _
  // Predicated region
  $region26: #{trans_conv_block.2} parent=0 // pred_check
    _
  $region27: #{trans_conv_block.2} parent=0 // pred_check_branch
    %2704 = sbr.rel (0) target = $region29
  $region28: #{trans_conv_block.2} parent=0 // pred_region
    _
  $region29: #{trans_conv_block.2} parent=0 // pred_fallthru
    _
  // Predicated region
  $region30: #{trans_conv_block.2} parent=0 // pred_check
    _
  $region31: #{trans_conv_block.2} parent=0 // pred_check_branch
    %2706 = sbr.rel (0) target = $region33
  $region32: #{trans_conv_block.2} parent=0 // pred_region
    _
  $region33: #{trans_conv_block.2} parent=0 // pred_fallthru
    _
  // Predicated region
  $region34: #{trans_conv_block.2} parent=0 // pred_check
    _
  $region35: #{trans_conv_block.2} parent=0 // pred_check_branch
    %2708 = sbr.rel (0) target = $region37
  $region36: #{trans_conv_block.2} parent=0 // pred_region
    _
  $region37: #{trans_conv_block.2} parent=0 // pred_fallthru
    _

</llo_original>
